<compile_context>
chip_gen: v5e
topology: v5e:2x2
jax: 0.10.0
libtpu: 0.0.40
codegen_flags: <defaults>
</compile_context>

<pallas_src>
import math

import jax
import jax.numpy as jnp
import numpy as np
from jax import lax
from jax.experimental import pallas as pl
from jax.experimental.pallas import tpu as pltpu

jax.config.update("jax_default_matmul_precision", "highest")

EPS = 1e-6  # Norm eps (matches the PyTorch module)


def _make_fused_kernel(B, S, D, row_idx):
    r = D // S                        # column-group width of the reference's view trick
    sqrt_d = math.sqrt(D)
    inv_sqrt_dk = 1.0 / math.sqrt(D)  # heads == 1  ->  d_k == d_model
    inv_dm1 = 1.0 / (D - 1.0)         # torch.std is unbiased (ddof = 1)

    def kernel(x_ref, pe_ref, a1_ref, b1_ref,
               wqkv_ref, bqkv_ref, wo_ref, bo_ref, esel_ref, rsel_ref,
               a2_ref, b2_ref, w1_ref, bfc1_ref, w2_ref, bfc2_ref,
               wr_ref, br_ref,
               out_ref, sc_ref, att_sc):
        # ---------------- batch-independent prologue on the (B*S, D) slab ----
        x = x_ref[...]                                     # (B*S, D)
        # PositionalEncoder: x * sqrt(d_model) + pe
        xpe = x * sqrt_d + pe_ref[...]
        # Norm1
        mean1 = jnp.mean(xpe, axis=-1, keepdims=True)
        xc1 = xpe - mean1
        std1 = jnp.sqrt(jnp.sum(xc1 * xc1, axis=-1, keepdims=True) * inv_dm1)
        x2 = a1_ref[...] * xc1 * pl.reciprocal(std1 + EPS, approx=True) + b1_ref[...]
        # Fused Q|K|V projection: one (B*S, D) @ (D, 3D) MXU pass, lane slices.
        qkv = jnp.dot(x2, wqkv_ref[...], preferred_element_type=jnp.float32) + bqkv_ref[...]
        q = qkv[:, 0:D]
        k = qkv[:, D:2 * D]
        v = qkv[:, 2 * D:3 * D]

        # ---------------- per-batch attention (B == 2, unrolled) -------------
        for b in range(B):
            lo = b * S
            q_b = q[lo:lo + S, :]
            k_b = k[lo:lo + S, :]
            v_b = v[lo:lo + S, :]
            # scaled dot-product attention; pre-softmax scores are a module output
            att_w = lax.dot_general(q_b, k_b, (((1,), (1,)), ((), ())),
                                    preferred_element_type=jnp.float32) * inv_sqrt_dk
            sc_ref[b] = att_w
            m = jnp.max(att_w, axis=-1, keepdims=True)
            p = jnp.exp(att_w - m)
            p = p * pl.reciprocal(jnp.sum(p, axis=-1, keepdims=True), approx=True)
            o_b = jnp.dot(p, v_b, preferred_element_type=jnp.float32)      # (S, D)

            # Out-projection on the reference's rearranged tensor:
            #   cat[i, g*S + s] = o_b[s, i*r + g]   (r = D // S)
            # so cat @ Wo = sum_g (Esel_g . o_b^T) @ Wo[g*S:(g+1)*S, :] where
            # Esel_g[i, d] = 1 iff d == i*r + g (constant, from the wrapper).
            att_acc = None
            for g in range(r):
                cg = lax.dot_general(esel_ref[g * S:(g + 1) * S, :], o_b,
                                     (((1,), (1,)), ((), ())),
                                     preferred_element_type=jnp.float32)   # (S, S)
                term = jnp.dot(cg, wo_ref[g * S:(g + 1) * S, :],
                               preferred_element_type=jnp.float32)         # (S, D)
                att_acc = term if att_acc is None else att_acc + term
            att_sc[lo:lo + S, :] = att_acc     # stage (bias added on the slab)

        # ---------------- batch-independent epilogue on the (B*S, D) slab ----
        # TODO(synk): F.dropout (training=True in the reference) is stochastic;
        # treated as identity here.
        xa = xpe + att_sc[...] + bo_ref[...]               # residual + out bias
        mean2 = jnp.mean(xa, axis=-1, keepdims=True)
        xc2 = xa - mean2
        std2 = jnp.sqrt(jnp.sum(xc2 * xc2, axis=-1, keepdims=True) * inv_dm1)
        x2b = a2_ref[...] * xc2 * pl.reciprocal(std2 + EPS, approx=True) + b2_ref[...]
        h = jnp.maximum(
            jnp.dot(x2b, w1_ref[...], preferred_element_type=jnp.float32) + bfc1_ref[...],
            0.0)
        ff = jnp.dot(h, w2_ref[...], preferred_element_type=jnp.float32) + bfc2_ref[...]

        # reference: x = (xa + ff(x2))[:, L-1, :] + ff(x2[:, L-1, :])
        #          = xa[:, L-1, :] + 2 * ff(x2)[:, L-1, :]
        # Row extraction via a constant one-hot (B, B*S) matmul (no gathers).
        rsel = rsel_ref[...]
        row = (jnp.dot(rsel, xa, preferred_element_type=jnp.float32)
               + 2.0 * jnp.dot(rsel, ff, preferred_element_type=jnp.float32))  # (B, D)
        # regression + log_softmax (dim=1 == class dim)
        logits = jnp.dot(row, wr_ref[...], preferred_element_type=jnp.float32) + br_ref[...]
        mx = jnp.max(logits, axis=-1, keepdims=True)
        z = logits - mx
        out_ref[...] = z - jnp.log(jnp.sum(jnp.exp(z), axis=-1, keepdims=True))

    return kernel


def encoder_layer_forward(x, params, num_layers):
    B, S, D = x.shape
    O = params["wr"].shape[1]
    Dff = params["w1"].shape[1]
    assert S == num_layers, "sequence length must equal num_layers (as in the reference)"
    assert D % S == 0, "kernel specializes the reference's transpose+view to D % S == 0"
    row_idx = num_layers - 1
    r = D // S

    # Fused Q|K|V weight / bias (one MXU pass instead of three).
    wqkv = jnp.concatenate([params["wq"], params["wk"], params["wv"]], axis=1)   # (D, 3D)
    bqkv = jnp.concatenate([params["bq"], params["bk"], params["bv"]], axis=1)   # (1, 3D)
    # Constant selection matrix implementing the reference's transpose(1,2).view(...).
    esel_np = np.zeros((D, D), np.float32)
    for g in range(r):
        for i in range(S):
            esel_np[g * S + i, i * r + g] = 1.0
    esel = jnp.asarray(esel_np)
    # Constant one-hot row selector for the head rows (row L-1 of each batch).
    rsel_np = np.zeros((B, B * S), np.float32)
    for b in range(B):
        rsel_np[b, b * S + row_idx] = 1.0
    rsel = jnp.asarray(rsel_np)

    # Free reshape / tiny tile in the wrapper: the kernel sees one (B*S, D) slab.
    x2d = x.reshape(B * S, D)
    pe_tiled = jnp.tile(params["pe"], (B, 1))

    full2 = lambda i: (0, 0)
    full3 = lambda i: (0, 0, 0)

    out, scores = pl.pallas_call(
        _make_fused_kernel(B, S, D, row_idx),
        grid=(1,),                                  # whole problem in one step (fits VMEM easily)
        out_shape=(
            jax.ShapeDtypeStruct((B, O), jnp.float32),       # log_softmax(regression(row))
            jax.ShapeDtypeStruct((B, S, S), jnp.float32),    # pre-softmax attention scores
        ),
        in_specs=[
            pl.BlockSpec((B * S, D), full2),   # x (flattened)
            pl.BlockSpec((B * S, D), full2),   # positional encoding (tiled over batch)
            pl.BlockSpec((1, D), full2),       # norm1 alpha
            pl.BlockSpec((1, D), full2),       # norm1 bias
            pl.BlockSpec((D, 3 * D), full2),   # Wq|Wk|Wv
            pl.BlockSpec((1, 3 * D), full2),   # bq|bk|bv
            pl.BlockSpec((D, D), full2),       # Wo
            pl.BlockSpec((1, D), full2),       # bo
            pl.BlockSpec((D, D), full2),       # selection matrix for the reference's view
            pl.BlockSpec((B, B * S), full2),   # head-row selector
            pl.BlockSpec((1, D), full2),       # norm2 alpha
            pl.BlockSpec((1, D), full2),       # norm2 bias
            pl.BlockSpec((D, Dff), full2),     # ff W1
            pl.BlockSpec((1, Dff), full2),     # ff b1
            pl.BlockSpec((Dff, D), full2),     # ff W2
            pl.BlockSpec((1, D), full2),       # ff b2
            pl.BlockSpec((D, O), full2),       # regression W
            pl.BlockSpec((1, O), full2),       # regression b
        ],
        out_specs=(
            pl.BlockSpec((B, O), full2),
            pl.BlockSpec((B, S, S), full3),
        ),
        scratch_shapes=[pltpu.VMEM((B * S, D), jnp.float32)],   # staged attention output
        compiler_params=pltpu.CompilerParams(dimension_semantics=("arbitrary",)),
    )(x2d, pe_tiled, params["alpha1"], params["beta1"],
      wqkv, bqkv, params["wo"], params["bo"], esel, rsel,
      params["alpha2"], params["beta2"],
      params["w1"], params["bfc1"], params["w2"], params["bfc2"],
      params["wr"], params["br"])
    return out, scores


def _reference_forward(x, params, num_layers):
    """Pure-JAX mirror of the PyTorch EncoderLayer.forward (dropout == identity)."""
    B, S, D = x.shape

    def norm(h, alpha, beta):
        mean = jnp.mean(h, axis=-1, keepdims=True)
        std = jnp.sqrt(jnp.sum((h - mean) ** 2, axis=-1, keepdims=True) / (D - 1.0))
        return alpha * (h - mean) / (std + EPS) + beta

    def ff(h):
        return jnp.maximum(h @ params["w1"] + params["bfc1"], 0.0) @ params["w2"] + params["bfc2"]

    xpe = x * math.sqrt(D) + params["pe"][None]
    x2 = norm(xpe, params["alpha1"], params["beta1"])
    q = x2 @ params["wq"] + params["bq"]
    k = x2 @ params["wk"] + params["bk"]
    v = x2 @ params["wv"] + params["bv"]
    att_w = jnp.einsum("bqd,bkd->bqk", q, k) / math.sqrt(D)
    o = jnp.einsum("bqk,bkd->bqd", jax.nn.softmax(att_w, axis=-1), v)
    concat = jnp.transpose(o, (0, 2, 1)).reshape(B, -1, D)   # the reference's (non-identity) view
    att = concat @ params["wo"] + params["bo"]
    xa = xpe + att
    x2b = norm(xa, params["alpha2"], params["beta2"])
    xb = xa + ff(x2b)
    row = xb[:, num_layers - 1, :] + ff(x2b[:, num_layers - 1, :])
    logits = row @ params["wr"] + params["br"]
    return jax.nn.log_softmax(logits, axis=1), att_w


def init_params(key, d_model, num_layers, d_ff=4, num_outputs=6):
    D, Dff, O = d_model, d_model * d_ff, num_outputs
    ks = jax.random.split(key, 6)

    def lin(k, fan_in, fan_out):
        bound = 1.0 / math.sqrt(fan_in)
        kw, kb = jax.random.split(k)
        w = jax.random.uniform(kw, (fan_in, fan_out), jnp.float32, -bound, bound)
        b = jax.random.uniform(kb, (1, fan_out), jnp.float32, -bound, bound)
        return w, b

    wq, bq = lin(ks[0], D, D)
    wk, bk = lin(ks[1], D, D)
    wv, bv = lin(ks[2], D, D)
    wo, bo = lin(ks[3], D, D)
    w1, bfc1 = lin(ks[4], D, Dff)
    w2, bfc2 = lin(ks[5], Dff, D)
    kr = jax.random.fold_in(key, 123)
    wr, br = lin(kr, D, O)

    # positional encoding exactly as the PyTorch module builds it
    pe = np.zeros((num_layers, D), dtype=np.float32)
    for pos in range(num_layers):
        for i in range(0, D, 2):
            pe[pos, i] = math.sin(pos / 10000 ** (2 * i / D))
            pe[pos, i + 1] = math.cos(pos / 10000 ** (2 * (i + 1) / D))

    return dict(
        pe=jnp.asarray(pe),
        alpha1=jnp.ones((1, D), jnp.float32), beta1=jnp.zeros((1, D), jnp.float32),
        alpha2=jnp.ones((1, D), jnp.float32), beta2=jnp.zeros((1, D), jnp.float32),
        wq=wq, bq=bq, wk=wk, bk=bk, wv=wv, bv=bv, wo=wo, bo=bo,
        w1=w1, bfc1=bfc1, w2=w2, bfc2=bfc2, wr=wr, br=br,
    )


if __name__ == "__main__":
    B, d_model, num_layers, num_outputs = 2, 32, 8, 6
    key = jax.random.PRNGKey(0)
    kx, kp = jax.random.split(key)

    x = jax.random.normal(kx, (B, num_layers, d_model), dtype=jnp.float32)
    params = init_params(kp, d_model, num_layers, d_ff=4, num_outputs=num_outputs)

    fwd = jax.jit(lambda xx: encoder_layer_forward(xx, params, num_layers))
    out, scores = fwd(x)
    jax.block_until_ready((out, scores))

    assert out.shape == (B, num_outputs)
    assert scores.shape == (B, num_layers, num_layers)
    assert bool(jnp.all(jnp.isfinite(out))) and bool(jnp.all(jnp.isfinite(scores)))

    # cross-check against a pure-JAX mirror of the PyTorch forward (dropout = identity)
    ref_out, ref_scores = _reference_forward(x, params, num_layers)
    np.testing.assert_allclose(np.asarray(out), np.asarray(ref_out), rtol=5e-2, atol=5e-2)
    np.testing.assert_allclose(np.asarray(scores), np.asarray(ref_scores), rtol=5e-2, atol=5e-2)

    print("KERNEL_OK")
</pallas_src>

<mosaic_0001>
module attributes {stable_mosaic.version = 11 : i64} {
  func.func @kernel(%arg0: i32, %arg1: memref<16x32xf32, #tpu.memory_space<vmem>>, %arg2: memref<16x32xf32, #tpu.memory_space<vmem>>, %arg3: memref<1x32xf32, #tpu.memory_space<vmem>>, %arg4: memref<1x32xf32, #tpu.memory_space<vmem>>, %arg5: memref<32x96xf32, #tpu.memory_space<vmem>>, %arg6: memref<1x96xf32, #tpu.memory_space<vmem>>, %arg7: memref<32x32xf32, #tpu.memory_space<vmem>>, %arg8: memref<1x32xf32, #tpu.memory_space<vmem>>, %arg9: memref<32x32xf32, #tpu.memory_space<vmem>>, %arg10: memref<2x16xf32, #tpu.memory_space<vmem>>, %arg11: memref<1x32xf32, #tpu.memory_space<vmem>>, %arg12: memref<1x32xf32, #tpu.memory_space<vmem>>, %arg13: memref<32x128xf32, #tpu.memory_space<vmem>>, %arg14: memref<1x128xf32, #tpu.memory_space<vmem>>, %arg15: memref<128x32xf32, #tpu.memory_space<vmem>>, %arg16: memref<1x32xf32, #tpu.memory_space<vmem>>, %arg17: memref<32x6xf32, #tpu.memory_space<vmem>>, %arg18: memref<1x6xf32, #tpu.memory_space<vmem>>, %arg19: memref<2x6xf32, #tpu.memory_space<vmem>>, %arg20: memref<2x8x8xf32, #tpu.memory_space<vmem>>, %arg21: memref<16x32xf32, #tpu.memory_space<vmem>>) attributes {dimension_semantics = [#tpu.dimension_semantics<arbitrary>], iteration_bounds = array<i64: 1>, scalar_prefetch = 0 : i64, scratch_operands = 1 : i64, tpu.core_type = #tpu.core_type<tc>, window_params = [{pipeline_mode = #tpu.pipeline_mode<synchronous>, transform_indices = @transform_0, window_bounds = array<i64: 16, 32>}, {pipeline_mode = #tpu.pipeline_mode<synchronous>, transform_indices = @transform_1, window_bounds = array<i64: 16, 32>}, {pipeline_mode = #tpu.pipeline_mode<synchronous>, transform_indices = @transform_2, window_bounds = array<i64: 1, 32>}, {pipeline_mode = #tpu.pipeline_mode<synchronous>, transform_indices = @transform_3, window_bounds = array<i64: 1, 32>}, {pipeline_mode = #tpu.pipeline_mode<synchronous>, transform_indices = @transform_4, window_bounds = array<i64: 32, 96>}, {pipeline_mode = #tpu.pipeline_mode<synchronous>, transform_indices = @transform_5, window_bounds = array<i64: 1, 96>}, {pipeline_mode = #tpu.pipeline_mode<synchronous>, transform_indices = @transform_6, window_bounds = array<i64: 32, 32>}, {pipeline_mode = #tpu.pipeline_mode<synchronous>, transform_indices = @transform_7, window_bounds = array<i64: 1, 32>}, {pipeline_mode = #tpu.pipeline_mode<synchronous>, transform_indices = @transform_8, window_bounds = array<i64: 32, 32>}, {pipeline_mode = #tpu.pipeline_mode<synchronous>, transform_indices = @transform_9, window_bounds = array<i64: 2, 16>}, {pipeline_mode = #tpu.pipeline_mode<synchronous>, transform_indices = @transform_10, window_bounds = array<i64: 1, 32>}, {pipeline_mode = #tpu.pipeline_mode<synchronous>, transform_indices = @transform_11, window_bounds = array<i64: 1, 32>}, {pipeline_mode = #tpu.pipeline_mode<synchronous>, transform_indices = @transform_12, window_bounds = array<i64: 32, 128>}, {pipeline_mode = #tpu.pipeline_mode<synchronous>, transform_indices = @transform_13, window_bounds = array<i64: 1, 128>}, {pipeline_mode = #tpu.pipeline_mode<synchronous>, transform_indices = @transform_14, window_bounds = array<i64: 128, 32>}, {pipeline_mode = #tpu.pipeline_mode<synchronous>, transform_indices = @transform_15, window_bounds = array<i64: 1, 32>}, {pipeline_mode = #tpu.pipeline_mode<synchronous>, transform_indices = @transform_16, window_bounds = array<i64: 32, 6>}, {pipeline_mode = #tpu.pipeline_mode<synchronous>, transform_indices = @transform_17, window_bounds = array<i64: 1, 6>}, {pipeline_mode = #tpu.pipeline_mode<synchronous>, transform_indices = @transform_18, window_bounds = array<i64: 2, 6>}, {pipeline_mode = #tpu.pipeline_mode<synchronous>, transform_indices = @transform_19, window_bounds = array<i64: 2, 8, 8>}]} {
    %c0 = arith.constant 0 : index
    %c0_0 = arith.constant 0 : index
    %0 = vector.load %arg1[%c0, %c0_0] : memref<16x32xf32, #tpu.memory_space<vmem>>, vector<16x32xf32>
    %cst = arith.constant 5.65685415 : f32
    %1 = vector.broadcast %cst : f32 to vector<16x32xf32>
    %2 = arith.mulf %0, %1 : vector<16x32xf32>
    %c0_1 = arith.constant 0 : index
    %c0_2 = arith.constant 0 : index
    %3 = vector.load %arg2[%c0_1, %c0_2] : memref<16x32xf32, #tpu.memory_space<vmem>>, vector<16x32xf32>
    %4 = arith.addf %2, %3 : vector<16x32xf32>
    %cst_3 = arith.constant dense<0.000000e+00> : vector<16xf32>
    %5 = vector.multi_reduction <add>, %4, %cst_3 [1] : vector<16x32xf32> to vector<16xf32>
    %6 = vector.shape_cast %5 : vector<16xf32> to vector<16x1xf32>
    %cst_4 = arith.constant 3.200000e+01 : f32
    %7 = vector.broadcast %cst_4 : f32 to vector<16x1xf32>
    %8 = arith.divf %6, %7 : vector<16x1xf32>
    %9 = vector.broadcast %8 : vector<16x1xf32> to vector<16x32xf32>
    %10 = arith.subf %4, %9 : vector<16x32xf32>
    %11 = arith.mulf %10, %10 : vector<16x32xf32>
    %cst_5 = arith.constant dense<0.000000e+00> : vector<16xf32>
    %12 = vector.multi_reduction <add>, %11, %cst_5 [1] : vector<16x32xf32> to vector<16xf32>
    %13 = vector.shape_cast %12 : vector<16xf32> to vector<16x1xf32>
    %cst_6 = arith.constant 0.0322580636 : f32
    %14 = vector.broadcast %cst_6 : f32 to vector<16x1xf32>
    %15 = arith.mulf %13, %14 : vector<16x1xf32>
    %16 = math.sqrt %15 : vector<16x1xf32>
    %c0_7 = arith.constant 0 : index
    %c0_8 = arith.constant 0 : index
    %17 = vector.load %arg3[%c0_7, %c0_8] : memref<1x32xf32, #tpu.memory_space<vmem>>, vector<1x32xf32>
    %18 = vector.broadcast %17 : vector<1x32xf32> to vector<16x32xf32>
    %19 = arith.mulf %18, %10 : vector<16x32xf32>
    %cst_9 = arith.constant 9.99999997E-7 : f32
    %20 = vector.broadcast %cst_9 : f32 to vector<16x1xf32>
    %21 = arith.addf %16, %20 : vector<16x1xf32>
    %22 = tpu.reciprocal %21 {approx = true} : vector<16x1xf32> -> vector<16x1xf32>
    %23 = vector.broadcast %22 : vector<16x1xf32> to vector<16x32xf32>
    %24 = arith.mulf %19, %23 : vector<16x32xf32>
    %c0_10 = arith.constant 0 : index
    %c0_11 = arith.constant 0 : index
    %25 = vector.load %arg4[%c0_10, %c0_11] : memref<1x32xf32, #tpu.memory_space<vmem>>, vector<1x32xf32>
    %26 = vector.broadcast %25 : vector<1x32xf32> to vector<16x32xf32>
    %27 = arith.addf %24, %26 : vector<16x32xf32>
    %c0_12 = arith.constant 0 : index
    %c0_13 = arith.constant 0 : index
    %28 = vector.load %arg5[%c0_12, %c0_13] : memref<32x96xf32, #tpu.memory_space<vmem>>, vector<32x96xf32>
    %cst_14 = arith.constant dense<0.000000e+00> : vector<16x96xf32>
    %29 = tpu.matmul %27, %28, %cst_14 {dimension_numbers = #tpu.dot_dimension_numbers<[1], [0], [0], [1], [0, 0, 1, 1], [], []>, precision = #tpu.contract_precision<fp32>} : vector<16x32xf32>, vector<32x96xf32>, vector<16x96xf32> -> vector<16x96xf32>
    %c0_15 = arith.constant 0 : index
    %c0_16 = arith.constant 0 : index
    %30 = vector.load %arg6[%c0_15, %c0_16] : memref<1x96xf32, #tpu.memory_space<vmem>>, vector<1x96xf32>
    %31 = vector.broadcast %30 : vector<1x96xf32> to vector<16x96xf32>
    %32 = arith.addf %29, %31 : vector<16x96xf32>
    %33 = vector.extract_strided_slice %32 {offsets = [0, 0], sizes = [16, 32], strides = [1, 1]} : vector<16x96xf32> to vector<16x32xf32>
    %34 = vector.extract_strided_slice %32 {offsets = [0, 32], sizes = [16, 32], strides = [1, 1]} : vector<16x96xf32> to vector<16x32xf32>
    %35 = vector.extract_strided_slice %32 {offsets = [0, 64], sizes = [16, 32], strides = [1, 1]} : vector<16x96xf32> to vector<16x32xf32>
    %36 = vector.extract_strided_slice %33 {offsets = [0, 0], sizes = [8, 32], strides = [1, 1]} : vector<16x32xf32> to vector<8x32xf32>
    %37 = vector.extract_strided_slice %34 {offsets = [0, 0], sizes = [8, 32], strides = [1, 1]} : vector<16x32xf32> to vector<8x32xf32>
    %38 = vector.extract_strided_slice %35 {offsets = [0, 0], sizes = [8, 32], strides = [1, 1]} : vector<16x32xf32> to vector<8x32xf32>
    %cst_17 = arith.constant dense<0.000000e+00> : vector<8x8xf32>
    %39 = tpu.matmul %36, %37, %cst_17 {dimension_numbers = #tpu.dot_dimension_numbers<[1], [1], [0], [0], [0, 0, 1, 0], [], []>, precision = #tpu.contract_precision<fp32>} : vector<8x32xf32>, vector<8x32xf32>, vector<8x8xf32> -> vector<8x8xf32>
    %cst_18 = arith.constant 0.176776692 : f32
    %40 = vector.broadcast %cst_18 : f32 to vector<8x8xf32>
    %41 = arith.mulf %39, %40 : vector<8x8xf32>
    %c0_19 = arith.constant 0 : index
    %c0_20 = arith.constant 0 : index
    %c0_21 = arith.constant 0 : index
    %42 = vector.load %arg20[%c0_19, %c0_20, %c0_21] : memref<2x8x8xf32, #tpu.memory_space<vmem>>, vector<1x8x8xf32>
    %43 = vector.shape_cast %42 : vector<1x8x8xf32> to vector<8x8xf32>
    %44 = vector.shape_cast %41 : vector<8x8xf32> to vector<1x8x8xf32>
    tpu.vector_store %arg20[%c0_19, %c0_20, %c0_21], %44 {strides = array<i32>} : memref<2x8x8xf32, #tpu.memory_space<vmem>>, vector<1x8x8xf32>,
    %cst_22 = arith.constant dense<0xFF800000> : vector<8xf32>
    %45 = vector.multi_reduction <maximumf>, %41, %cst_22 [1] : vector<8x8xf32> to vector<8xf32>
    %46 = vector.shape_cast %45 : vector<8xf32> to vector<8x1xf32>
    %47 = vector.broadcast %46 : vector<8x1xf32> to vector<8x8xf32>
    %48 = arith.subf %41, %47 : vector<8x8xf32>
    %49 = math.exp %48 : vector<8x8xf32>
    %cst_23 = arith.constant dense<0.000000e+00> : vector<8xf32>
    %50 = vector.multi_reduction <add>, %49, %cst_23 [1] : vector<8x8xf32> to vector<8xf32>
    %51 = vector.shape_cast %50 : vector<8xf32> to vector<8x1xf32>
    %52 = tpu.reciprocal %51 {approx = true} : vector<8x1xf32> -> vector<8x1xf32>
    %53 = vector.broadcast %52 : vector<8x1xf32> to vector<8x8xf32>
    %54 = arith.mulf %49, %53 : vector<8x8xf32>
    %cst_24 = arith.constant dense<0.000000e+00> : vector<8x32xf32>
    %55 = tpu.matmul %54, %38, %cst_24 {dimension_numbers = #tpu.dot_dimension_numbers<[1], [0], [0], [1], [0, 0, 1, 1], [], []>, precision = #tpu.contract_precision<fp32>} : vector<8x8xf32>, vector<8x32xf32>, vector<8x32xf32> -> vector<8x32xf32>
    %c0_25 = arith.constant 0 : index
    %c0_26 = arith.constant 0 : index
    %56 = vector.load %arg9[%c0_25, %c0_26] : memref<32x32xf32, #tpu.memory_space<vmem>>, vector<8x32xf32>
    %cst_27 = arith.constant dense<0.000000e+00> : vector<8x8xf32>
    %57 = tpu.matmul %56, %55, %cst_27 {dimension_numbers = #tpu.dot_dimension_numbers<[1], [1], [0], [0], [0, 0, 1, 0], [], []>, precision = #tpu.contract_precision<fp32>} : vector<8x32xf32>, vector<8x32xf32>, vector<8x8xf32> -> vector<8x8xf32>
    %c0_28 = arith.constant 0 : index
    %c0_29 = arith.constant 0 : index
    %58 = vector.load %arg7[%c0_28, %c0_29] : memref<32x32xf32, #tpu.memory_space<vmem>>, vector<8x32xf32>
    %cst_30 = arith.constant dense<0.000000e+00> : vector<8x32xf32>
    %59 = tpu.matmul %57, %58, %cst_30 {dimension_numbers = #tpu.dot_dimension_numbers<[1], [0], [0], [1], [0, 0, 1, 1], [], []>, precision = #tpu.contract_precision<fp32>} : vector<8x8xf32>, vector<8x32xf32>, vector<8x32xf32> -> vector<8x32xf32>
    %c8 = arith.constant 8 : index
    %c0_31 = arith.constant 0 : index
    %60 = vector.load %arg9[%c8, %c0_31] : memref<32x32xf32, #tpu.memory_space<vmem>>, vector<8x32xf32>
    %cst_32 = arith.constant dense<0.000000e+00> : vector<8x8xf32>
    %61 = tpu.matmul %60, %55, %cst_32 {dimension_numbers = #tpu.dot_dimension_numbers<[1], [1], [0], [0], [0, 0, 1, 0], [], []>, precision = #tpu.contract_precision<fp32>} : vector<8x32xf32>, vector<8x32xf32>, vector<8x8xf32> -> vector<8x8xf32>
    %c8_33 = arith.constant 8 : index
    %c0_34 = arith.constant 0 : index
    %62 = vector.load %arg7[%c8_33, %c0_34] : memref<32x32xf32, #tpu.memory_space<vmem>>, vector<8x32xf32>
    %cst_35 = arith.constant dense<0.000000e+00> : vector<8x32xf32>
    %63 = tpu.matmul %61, %62, %cst_35 {dimension_numbers = #tpu.dot_dimension_numbers<[1], [0], [0], [1], [0, 0, 1, 1], [], []>, precision = #tpu.contract_precision<fp32>} : vector<8x8xf32>, vector<8x32xf32>, vector<8x32xf32> -> vector<8x32xf32>
    %64 = arith.addf %59, %63 : vector<8x32xf32>
    %c16 = arith.constant 16 : index
    %c0_36 = arith.constant 0 : index
    %65 = vector.load %arg9[%c16, %c0_36] : memref<32x32xf32, #tpu.memory_space<vmem>>, vector<8x32xf32>
    %cst_37 = arith.constant dense<0.000000e+00> : vector<8x8xf32>
    %66 = tpu.matmul %65, %55, %cst_37 {dimension_numbers = #tpu.dot_dimension_numbers<[1], [1], [0], [0], [0, 0, 1, 0], [], []>, precision = #tpu.contract_precision<fp32>} : vector<8x32xf32>, vector<8x32xf32>, vector<8x8xf32> -> vector<8x8xf32>
    %c16_38 = arith.constant 16 : index
    %c0_39 = arith.constant 0 : index
    %67 = vector.load %arg7[%c16_38, %c0_39] : memref<32x32xf32, #tpu.memory_space<vmem>>, vector<8x32xf32>
    %cst_40 = arith.constant dense<0.000000e+00> : vector<8x32xf32>
    %68 = tpu.matmul %66, %67, %cst_40 {dimension_numbers = #tpu.dot_dimension_numbers<[1], [0], [0], [1], [0, 0, 1, 1], [], []>, precision = #tpu.contract_precision<fp32>} : vector<8x8xf32>, vector<8x32xf32>, vector<8x32xf32> -> vector<8x32xf32>
    %69 = arith.addf %64, %68 : vector<8x32xf32>
    %c24 = arith.constant 24 : index
    %c0_41 = arith.constant 0 : index
    %70 = vector.load %arg9[%c24, %c0_41] : memref<32x32xf32, #tpu.memory_space<vmem>>, vector<8x32xf32>
    %cst_42 = arith.constant dense<0.000000e+00> : vector<8x8xf32>
    %71 = tpu.matmul %70, %55, %cst_42 {dimension_numbers = #tpu.dot_dimension_numbers<[1], [1], [0], [0], [0, 0, 1, 0], [], []>, precision = #tpu.contract_precision<fp32>} : vector<8x32xf32>, vector<8x32xf32>, vector<8x8xf32> -> vector<8x8xf32>
    %c24_43 = arith.constant 24 : index
    %c0_44 = arith.constant 0 : index
    %72 = vector.load %arg7[%c24_43, %c0_44] : memref<32x32xf32, #tpu.memory_space<vmem>>, vector<8x32xf32>
    %cst_45 = arith.constant dense<0.000000e+00> : vector<8x32xf32>
    %73 = tpu.matmul %71, %72, %cst_45 {dimension_numbers = #tpu.dot_dimension_numbers<[1], [0], [0], [1], [0, 0, 1, 1], [], []>, precision = #tpu.contract_precision<fp32>} : vector<8x8xf32>, vector<8x32xf32>, vector<8x32xf32> -> vector<8x32xf32>
    %74 = arith.addf %69, %73 : vector<8x32xf32>
    %c0_46 = arith.constant 0 : index
    %c0_47 = arith.constant 0 : index
    %75 = vector.load %arg21[%c0_46, %c0_47] : memref<16x32xf32, #tpu.memory_space<vmem>>, vector<8x32xf32>
    tpu.vector_store %arg21[%c0_46, %c0_47], %74 {strides = array<i32>} : memref<16x32xf32, #tpu.memory_space<vmem>>, vector<8x32xf32>,
    %76 = vector.extract_strided_slice %33 {offsets = [8, 0], sizes = [8, 32], strides = [1, 1]} : vector<16x32xf32> to vector<8x32xf32>
    %77 = vector.extract_strided_slice %34 {offsets = [8, 0], sizes = [8, 32], strides = [1, 1]} : vector<16x32xf32> to vector<8x32xf32>
    %78 = vector.extract_strided_slice %35 {offsets = [8, 0], sizes = [8, 32], strides = [1, 1]} : vector<16x32xf32> to vector<8x32xf32>
    %cst_48 = arith.constant dense<0.000000e+00> : vector<8x8xf32>
    %79 = tpu.matmul %76, %77, %cst_48 {dimension_numbers = #tpu.dot_dimension_numbers<[1], [1], [0], [0], [0, 0, 1, 0], [], []>, precision = #tpu.contract_precision<fp32>} : vector<8x32xf32>, vector<8x32xf32>, vector<8x8xf32> -> vector<8x8xf32>
    %cst_49 = arith.constant 0.176776692 : f32
    %80 = vector.broadcast %cst_49 : f32 to vector<8x8xf32>
    %81 = arith.mulf %79, %80 : vector<8x8xf32>
    %c1 = arith.constant 1 : index
    %c0_50 = arith.constant 0 : index
    %c0_51 = arith.constant 0 : index
    %82 = vector.load %arg20[%c1, %c0_50, %c0_51] : memref<2x8x8xf32, #tpu.memory_space<vmem>>, vector<1x8x8xf32>
    %83 = vector.shape_cast %82 : vector<1x8x8xf32> to vector<8x8xf32>
    %84 = vector.shape_cast %81 : vector<8x8xf32> to vector<1x8x8xf32>
    tpu.vector_store %arg20[%c1, %c0_50, %c0_51], %84 {strides = array<i32>} : memref<2x8x8xf32, #tpu.memory_space<vmem>>, vector<1x8x8xf32>,
    %cst_52 = arith.constant dense<0xFF800000> : vector<8xf32>
    %85 = vector.multi_reduction <maximumf>, %81, %cst_52 [1] : vector<8x8xf32> to vector<8xf32>
    %86 = vector.shape_cast %85 : vector<8xf32> to vector<8x1xf32>
    %87 = vector.broadcast %86 : vector<8x1xf32> to vector<8x8xf32>
    %88 = arith.subf %81, %87 : vector<8x8xf32>
    %89 = math.exp %88 : vector<8x8xf32>
    %cst_53 = arith.constant dense<0.000000e+00> : vector<8xf32>
    %90 = vector.multi_reduction <add>, %89, %cst_53 [1] : vector<8x8xf32> to vector<8xf32>
    %91 = vector.shape_cast %90 : vector<8xf32> to vector<8x1xf32>
    %92 = tpu.reciprocal %91 {approx = true} : vector<8x1xf32> -> vector<8x1xf32>
    %93 = vector.broadcast %92 : vector<8x1xf32> to vector<8x8xf32>
    %94 = arith.mulf %89, %93 : vector<8x8xf32>
    %cst_54 = arith.constant dense<0.000000e+00> : vector<8x32xf32>
    %95 = tpu.matmul %94, %78, %cst_54 {dimension_numbers = #tpu.dot_dimension_numbers<[1], [0], [0], [1], [0, 0, 1, 1], [], []>, precision = #tpu.contract_precision<fp32>} : vector<8x8xf32>, vector<8x32xf32>, vector<8x32xf32> -> vector<8x32xf32>
    %c0_55 = arith.constant 0 : index
    %c0_56 = arith.constant 0 : index
    %96 = vector.load %arg9[%c0_55, %c0_56] : memref<32x32xf32, #tpu.memory_space<vmem>>, vector<8x32xf32>
    %cst_57 = arith.constant dense<0.000000e+00> : vector<8x8xf32>
    %97 = tpu.matmul %96, %95, %cst_57 {dimension_numbers = #tpu.dot_dimension_numbers<[1], [1], [0], [0], [0, 0, 1, 0], [], []>, precision = #tpu.contract_precision<fp32>} : vector<8x32xf32>, vector<8x32xf32>, vector<8x8xf32> -> vector<8x8xf32>
    %c0_58 = arith.constant 0 : index
    %c0_59 = arith.constant 0 : index
    %98 = vector.load %arg7[%c0_58, %c0_59] : memref<32x32xf32, #tpu.memory_space<vmem>>, vector<8x32xf32>
    %cst_60 = arith.constant dense<0.000000e+00> : vector<8x32xf32>
    %99 = tpu.matmul %97, %98, %cst_60 {dimension_numbers = #tpu.dot_dimension_numbers<[1], [0], [0], [1], [0, 0, 1, 1], [], []>, precision = #tpu.contract_precision<fp32>} : vector<8x8xf32>, vector<8x32xf32>, vector<8x32xf32> -> vector<8x32xf32>
    %c8_61 = arith.constant 8 : index
    %c0_62 = arith.constant 0 : index
    %100 = vector.load %arg9[%c8_61, %c0_62] : memref<32x32xf32, #tpu.memory_space<vmem>>, vector<8x32xf32>
    %cst_63 = arith.constant dense<0.000000e+00> : vector<8x8xf32>
    %101 = tpu.matmul %100, %95, %cst_63 {dimension_numbers = #tpu.dot_dimension_numbers<[1], [1], [0], [0], [0, 0, 1, 0], [], []>, precision = #tpu.contract_precision<fp32>} : vector<8x32xf32>, vector<8x32xf32>, vector<8x8xf32> -> vector<8x8xf32>
    %c8_64 = arith.constant 8 : index
    %c0_65 = arith.constant 0 : index
    %102 = vector.load %arg7[%c8_64, %c0_65] : memref<32x32xf32, #tpu.memory_space<vmem>>, vector<8x32xf32>
    %cst_66 = arith.constant dense<0.000000e+00> : vector<8x32xf32>
    %103 = tpu.matmul %101, %102, %cst_66 {dimension_numbers = #tpu.dot_dimension_numbers<[1], [0], [0], [1], [0, 0, 1, 1], [], []>, precision = #tpu.contract_precision<fp32>} : vector<8x8xf32>, vector<8x32xf32>, vector<8x32xf32> -> vector<8x32xf32>
    %104 = arith.addf %99, %103 : vector<8x32xf32>
    %c16_67 = arith.constant 16 : index
    %c0_68 = arith.constant 0 : index
    %105 = vector.load %arg9[%c16_67, %c0_68] : memref<32x32xf32, #tpu.memory_space<vmem>>, vector<8x32xf32>
    %cst_69 = arith.constant dense<0.000000e+00> : vector<8x8xf32>
    %106 = tpu.matmul %105, %95, %cst_69 {dimension_numbers = #tpu.dot_dimension_numbers<[1], [1], [0], [0], [0, 0, 1, 0], [], []>, precision = #tpu.contract_precision<fp32>} : vector<8x32xf32>, vector<8x32xf32>, vector<8x8xf32> -> vector<8x8xf32>
    %c16_70 = arith.constant 16 : index
    %c0_71 = arith.constant 0 : index
    %107 = vector.load %arg7[%c16_70, %c0_71] : memref<32x32xf32, #tpu.memory_space<vmem>>, vector<8x32xf32>
    %cst_72 = arith.constant dense<0.000000e+00> : vector<8x32xf32>
    %108 = tpu.matmul %106, %107, %cst_72 {dimension_numbers = #tpu.dot_dimension_numbers<[1], [0], [0], [1], [0, 0, 1, 1], [], []>, precision = #tpu.contract_precision<fp32>} : vector<8x8xf32>, vector<8x32xf32>, vector<8x32xf32> -> vector<8x32xf32>
    %109 = arith.addf %104, %108 : vector<8x32xf32>
    %c24_73 = arith.constant 24 : index
    %c0_74 = arith.constant 0 : index
    %110 = vector.load %arg9[%c24_73, %c0_74] : memref<32x32xf32, #tpu.memory_space<vmem>>, vector<8x32xf32>
    %cst_75 = arith.constant dense<0.000000e+00> : vector<8x8xf32>
    %111 = tpu.matmul %110, %95, %cst_75 {dimension_numbers = #tpu.dot_dimension_numbers<[1], [1], [0], [0], [0, 0, 1, 0], [], []>, precision = #tpu.contract_precision<fp32>} : vector<8x32xf32>, vector<8x32xf32>, vector<8x8xf32> -> vector<8x8xf32>
    %c24_76 = arith.constant 24 : index
    %c0_77 = arith.constant 0 : index
    %112 = vector.load %arg7[%c24_76, %c0_77] : memref<32x32xf32, #tpu.memory_space<vmem>>, vector<8x32xf32>
    %cst_78 = arith.constant dense<0.000000e+00> : vector<8x32xf32>
    %113 = tpu.matmul %111, %112, %cst_78 {dimension_numbers = #tpu.dot_dimension_numbers<[1], [0], [0], [1], [0, 0, 1, 1], [], []>, precision = #tpu.contract_precision<fp32>} : vector<8x8xf32>, vector<8x32xf32>, vector<8x32xf32> -> vector<8x32xf32>
    %114 = arith.addf %109, %113 : vector<8x32xf32>
    %c8_79 = arith.constant 8 : index
    %c0_80 = arith.constant 0 : index
    %115 = vector.load %arg21[%c8_79, %c0_80] : memref<16x32xf32, #tpu.memory_space<vmem>>, vector<8x32xf32>
    tpu.vector_store %arg21[%c8_79, %c0_80], %114 {strides = array<i32>} : memref<16x32xf32, #tpu.memory_space<vmem>>, vector<8x32xf32>,
    %c0_81 = arith.constant 0 : index
    %c0_82 = arith.constant 0 : index
    %116 = vector.load %arg21[%c0_81, %c0_82] : memref<16x32xf32, #tpu.memory_space<vmem>>, vector<16x32xf32>
    %117 = arith.addf %4, %116 : vector<16x32xf32>
    %c0_83 = arith.constant 0 : index
    %c0_84 = arith.constant 0 : index
    %118 = vector.load %arg8[%c0_83, %c0_84] : memref<1x32xf32, #tpu.memory_space<vmem>>, vector<1x32xf32>
    %119 = vector.broadcast %118 : vector<1x32xf32> to vector<16x32xf32>
    %120 = arith.addf %117, %119 : vector<16x32xf32>
    %cst_85 = arith.constant dense<0.000000e+00> : vector<16xf32>
    %121 = vector.multi_reduction <add>, %120, %cst_85 [1] : vector<16x32xf32> to vector<16xf32>
    %122 = vector.shape_cast %121 : vector<16xf32> to vector<16x1xf32>
    %cst_86 = arith.constant 3.200000e+01 : f32
    %123 = vector.broadcast %cst_86 : f32 to vector<16x1xf32>
    %124 = arith.divf %122, %123 : vector<16x1xf32>
    %125 = vector.broadcast %124 : vector<16x1xf32> to vector<16x32xf32>
    %126 = arith.subf %120, %125 : vector<16x32xf32>
    %127 = arith.mulf %126, %126 : vector<16x32xf32>
    %cst_87 = arith.constant dense<0.000000e+00> : vector<16xf32>
    %128 = vector.multi_reduction <add>, %127, %cst_87 [1] : vector<16x32xf32> to vector<16xf32>
    %129 = vector.shape_cast %128 : vector<16xf32> to vector<16x1xf32>
    %cst_88 = arith.constant 0.0322580636 : f32
    %130 = vector.broadcast %cst_88 : f32 to vector<16x1xf32>
    %131 = arith.mulf %129, %130 : vector<16x1xf32>
    %132 = math.sqrt %131 : vector<16x1xf32>
    %c0_89 = arith.constant 0 : index
    %c0_90 = arith.constant 0 : index
    %133 = vector.load %arg11[%c0_89, %c0_90] : memref<1x32xf32, #tpu.memory_space<vmem>>, vector<1x32xf32>
    %134 = vector.broadcast %133 : vector<1x32xf32> to vector<16x32xf32>
    %135 = arith.mulf %134, %126 : vector<16x32xf32>
    %cst_91 = arith.constant 9.99999997E-7 : f32
    %136 = vector.broadcast %cst_91 : f32 to vector<16x1xf32>
    %137 = arith.addf %132, %136 : vector<16x1xf32>
    %138 = tpu.reciprocal %137 {approx = true} : vector<16x1xf32> -> vector<16x1xf32>
    %139 = vector.broadcast %138 : vector<16x1xf32> to vector<16x32xf32>
    %140 = arith.mulf %135, %139 : vector<16x32xf32>
    %c0_92 = arith.constant 0 : index
    %c0_93 = arith.constant 0 : index
    %141 = vector.load %arg12[%c0_92, %c0_93] : memref<1x32xf32, #tpu.memory_space<vmem>>, vector<1x32xf32>
    %142 = vector.broadcast %141 : vector<1x32xf32> to vector<16x32xf32>
    %143 = arith.addf %140, %142 : vector<16x32xf32>
    %c0_94 = arith.constant 0 : index
    %c0_95 = arith.constant 0 : index
    %144 = vector.load %arg13[%c0_94, %c0_95] : memref<32x128xf32, #tpu.memory_space<vmem>>, vector<32x128xf32>
    %cst_96 = arith.constant dense<0.000000e+00> : vector<16x128xf32>
    %145 = tpu.matmul %143, %144, %cst_96 {dimension_numbers = #tpu.dot_dimension_numbers<[1], [0], [0], [1], [0, 0, 1, 1], [], []>, precision = #tpu.contract_precision<fp32>} : vector<16x32xf32>, vector<32x128xf32>, vector<16x128xf32> -> vector<16x128xf32>
    %c0_97 = arith.constant 0 : index
    %c0_98 = arith.constant 0 : index
    %146 = vector.load %arg14[%c0_97, %c0_98] : memref<1x128xf32, #tpu.memory_space<vmem>>, vector<1x128xf32>
    %147 = vector.broadcast %146 : vector<1x128xf32> to vector<16x128xf32>
    %148 = arith.addf %145, %147 : vector<16x128xf32>
    %cst_99 = arith.constant 0.000000e+00 : f32
    %149 = vector.broadcast %cst_99 : f32 to vector<16x128xf32>
    %150 = arith.maximumf %148, %149 : vector<16x128xf32>
    %c0_100 = arith.constant 0 : index
    %c0_101 = arith.constant 0 : index
    %151 = vector.load %arg15[%c0_100, %c0_101] : memref<128x32xf32, #tpu.memory_space<vmem>>, vector<128x32xf32>
    %cst_102 = arith.constant dense<0.000000e+00> : vector<16x32xf32>
    %152 = tpu.matmul %150, %151, %cst_102 {dimension_numbers = #tpu.dot_dimension_numbers<[1], [0], [0], [1], [0, 0, 1, 1], [], []>, precision = #tpu.contract_precision<fp32>} : vector<16x128xf32>, vector<128x32xf32>, vector<16x32xf32> -> vector<16x32xf32>
    %c0_103 = arith.constant 0 : index
    %c0_104 = arith.constant 0 : index
    %153 = vector.load %arg16[%c0_103, %c0_104] : memref<1x32xf32, #tpu.memory_space<vmem>>, vector<1x32xf32>
    %154 = vector.broadcast %153 : vector<1x32xf32> to vector<16x32xf32>
    %155 = arith.addf %152, %154 : vector<16x32xf32>
    %c0_105 = arith.constant 0 : index
    %c0_106 = arith.constant 0 : index
    %156 = vector.load %arg10[%c0_105, %c0_106] : memref<2x16xf32, #tpu.memory_space<vmem>>, vector<2x16xf32>
    %cst_107 = arith.constant dense<0.000000e+00> : vector<2x32xf32>
    %157 = tpu.matmul %156, %120, %cst_107 {dimension_numbers = #tpu.dot_dimension_numbers<[1], [0], [0], [1], [0, 0, 1, 1], [], []>, precision = #tpu.contract_precision<fp32>} : vector<2x16xf32>, vector<16x32xf32>, vector<2x32xf32> -> vector<2x32xf32>
    %cst_108 = arith.constant dense<0.000000e+00> : vector<2x32xf32>
    %158 = tpu.matmul %156, %155, %cst_108 {dimension_numbers = #tpu.dot_dimension_numbers<[1], [0], [0], [1], [0, 0, 1, 1], [], []>, precision = #tpu.contract_precision<fp32>} : vector<2x16xf32>, vector<16x32xf32>, vector<2x32xf32> -> vector<2x32xf32>
    %cst_109 = arith.constant 2.000000e+00 : f32
    %159 = vector.broadcast %cst_109 : f32 to vector<2x32xf32>
    %160 = arith.mulf %159, %158 : vector<2x32xf32>
    %161 = arith.addf %157, %160 : vector<2x32xf32>
    %c0_110 = arith.constant 0 : index
    %c0_111 = arith.constant 0 : index
    %162 = vector.load %arg17[%c0_110, %c0_111] : memref<32x6xf32, #tpu.memory_space<vmem>>, vector<32x6xf32>
    %cst_112 = arith.constant dense<0.000000e+00> : vector<2x6xf32>
    %163 = tpu.matmul %161, %162, %cst_112 {dimension_numbers = #tpu.dot_dimension_numbers<[1], [0], [0], [1], [0, 0, 1, 1], [], []>, precision = #tpu.contract_precision<fp32>} : vector<2x32xf32>, vector<32x6xf32>, vector<2x6xf32> -> vector<2x6xf32>
    %c0_113 = arith.constant 0 : index
    %c0_114 = arith.constant 0 : index
    %164 = vector.load %arg18[%c0_113, %c0_114] : memref<1x6xf32, #tpu.memory_space<vmem>>, vector<1x6xf32>
    %165 = vector.broadcast %164 : vector<1x6xf32> to vector<2x6xf32>
    %166 = arith.addf %163, %165 : vector<2x6xf32>
    %cst_115 = arith.constant dense<0xFF800000> : vector<2xf32>
    %167 = vector.multi_reduction <maximumf>, %166, %cst_115 [1] : vector<2x6xf32> to vector<2xf32>
    %168 = vector.shape_cast %167 : vector<2xf32> to vector<2x1xf32>
    %169 = vector.broadcast %168 : vector<2x1xf32> to vector<2x6xf32>
    %170 = arith.subf %166, %169 : vector<2x6xf32>
    %171 = math.exp %170 : vector<2x6xf32>
    %cst_116 = arith.constant dense<0.000000e+00> : vector<2xf32>
    %172 = vector.multi_reduction <add>, %171, %cst_116 [1] : vector<2x6xf32> to vector<2xf32>
    %173 = vector.shape_cast %172 : vector<2xf32> to vector<2x1xf32>
    %174 = math.log %173 : vector<2x1xf32>
    %175 = vector.broadcast %174 : vector<2x1xf32> to vector<2x6xf32>
    %176 = arith.subf %170, %175 : vector<2x6xf32>
    %c0_117 = arith.constant 0 : index
    %c0_118 = arith.constant 0 : index
    %177 = vector.load %arg19[%c0_117, %c0_118] : memref<2x6xf32, #tpu.memory_space<vmem>>, vector<2x6xf32>
    tpu.vector_store %arg19[%c0_117, %c0_118], %176 {strides = array<i32>} : memref<2x6xf32, #tpu.memory_space<vmem>>, vector<2x6xf32>,
    return
  }
  func.func @transform_0(%arg0: i32) -> (i32, i32) {
    %c0_i32 = arith.constant 0 : i32
    %c0_i32_0 = arith.constant 0 : i32
    %c0_i32_1 = arith.constant 0 : i32
    return %c0_i32, %c0_i32_0 : i32, i32
  }
  func.func @transform_1(%arg0: i32) -> (i32, i32) {
    %c0_i32 = arith.constant 0 : i32
    %c0_i32_0 = arith.constant 0 : i32
    %c0_i32_1 = arith.constant 0 : i32
    return %c0_i32, %c0_i32_0 : i32, i32
  }
  func.func @transform_2(%arg0: i32) -> (i32, i32) {
    %c0_i32 = arith.constant 0 : i32
    %c0_i32_0 = arith.constant 0 : i32
    %c0_i32_1 = arith.constant 0 : i32
    return %c0_i32, %c0_i32_0 : i32, i32
  }
  func.func @transform_3(%arg0: i32) -> (i32, i32) {
    %c0_i32 = arith.constant 0 : i32
    %c0_i32_0 = arith.constant 0 : i32
    %c0_i32_1 = arith.constant 0 : i32
    return %c0_i32, %c0_i32_0 : i32, i32
  }
  func.func @transform_4(%arg0: i32) -> (i32, i32) {
    %c0_i32 = arith.constant 0 : i32
    %c0_i32_0 = arith.constant 0 : i32
    %c0_i32_1 = arith.constant 0 : i32
    return %c0_i32, %c0_i32_0 : i32, i32
  }
  func.func @transform_5(%arg0: i32) -> (i32, i32) {
    %c0_i32 = arith.constant 0 : i32
    %c0_i32_0 = arith.constant 0 : i32
    %c0_i32_1 = arith.constant 0 : i32
    return %c0_i32, %c0_i32_0 : i32, i32
  }
  func.func @transform_6(%arg0: i32) -> (i32, i32) {
    %c0_i32 = arith.constant 0 : i32
    %c0_i32_0 = arith.constant 0 : i32
    %c0_i32_1 = arith.constant 0 : i32
    return %c0_i32, %c0_i32_0 : i32, i32
  }
  func.func @transform_7(%arg0: i32) -> (i32, i32) {
    %c0_i32 = arith.constant 0 : i32
    %c0_i32_0 = arith.constant 0 : i32
    %c0_i32_1 = arith.constant 0 : i32
    return %c0_i32, %c0_i32_0 : i32, i32
  }
  func.func @transform_8(%arg0: i32) -> (i32, i32) {
    %c0_i32 = arith.constant 0 : i32
    %c0_i32_0 = arith.constant 0 : i32
    %c0_i32_1 = arith.constant 0 : i32
    return %c0_i32, %c0_i32_0 : i32, i32
  }
  func.func @transform_9(%arg0: i32) -> (i32, i32) {
    %c0_i32 = arith.constant 0 : i32
    %c0_i32_0 = arith.constant 0 : i32
    %c0_i32_1 = arith.constant 0 : i32
    return %c0_i32, %c0_i32_0 : i32, i32
  }
  func.func @transform_10(%arg0: i32) -> (i32, i32) {
    %c0_i32 = arith.constant 0 : i32
    %c0_i32_0 = arith.constant 0 : i32
    %c0_i32_1 = arith.constant 0 : i32
    return %c0_i32, %c0_i32_0 : i32, i32
  }
  func.func @transform_11(%arg0: i32) -> (i32, i32) {
    %c0_i32 = arith.constant 0 : i32
    %c0_i32_0 = arith.constant 0 : i32
    %c0_i32_1 = arith.constant 0 : i32
    return %c0_i32, %c0_i32_0 : i32, i32
  }
  func.func @transform_12(%arg0: i32) -> (i32, i32) {
    %c0_i32 = arith.constant 0 : i32
    %c0_i32_0 = arith.constant 0 : i32
    %c0_i32_1 = arith.constant 0 : i32
    return %c0_i32, %c0_i32_0 : i32, i32
  }
  func.func @transform_13(%arg0: i32) -> (i32, i32) {
    %c0_i32 = arith.constant 0 : i32
    %c0_i32_0 = arith.constant 0 : i32
    %c0_i32_1 = arith.constant 0 : i32
    return %c0_i32, %c0_i32_0 : i32, i32
  }
  func.func @transform_14(%arg0: i32) -> (i32, i32) {
    %c0_i32 = arith.constant 0 : i32
    %c0_i32_0 = arith.constant 0 : i32
    %c0_i32_1 = arith.constant 0 : i32
    return %c0_i32, %c0_i32_0 : i32, i32
  }
  func.func @transform_15(%arg0: i32) -> (i32, i32) {
    %c0_i32 = arith.constant 0 : i32
    %c0_i32_0 = arith.constant 0 : i32
    %c0_i32_1 = arith.constant 0 : i32
    return %c0_i32, %c0_i32_0 : i32, i32
  }
  func.func @transform_16(%arg0: i32) -> (i32, i32) {
    %c0_i32 = arith.constant 0 : i32
    %c0_i32_0 = arith.constant 0 : i32
    %c0_i32_1 = arith.constant 0 : i32
    return %c0_i32, %c0_i32_0 : i32, i32
  }
  func.func @transform_17(%arg0: i32) -> (i32, i32) {
    %c0_i32 = arith.constant 0 : i32
    %c0_i32_0 = arith.constant 0 : i32
    %c0_i32_1 = arith.constant 0 : i32
    return %c0_i32, %c0_i32_0 : i32, i32
  }
  func.func @transform_18(%arg0: i32) -> (i32, i32) {
    %c0_i32 = arith.constant 0 : i32
    %c0_i32_0 = arith.constant 0 : i32
    %c0_i32_1 = arith.constant 0 : i32
    return %c0_i32, %c0_i32_0 : i32, i32
  }
  func.func @transform_19(%arg0: i32) -> (i32, i32, i32) {
    %c0_i32 = arith.constant 0 : i32
    %c0_i32_0 = arith.constant 0 : i32
    %c0_i32_1 = arith.constant 0 : i32
    %c0_i32_2 = arith.constant 0 : i32
    return %c0_i32, %c0_i32_0, %c0_i32_1 : i32, i32, i32
  }
}

</mosaic_0001>

<llo_original>
// kernel: _lambda_.1
$region0: #{_lambda_.1}
  #allocation0 [shape = 'u32[]', space=smem, size = 0x4, offset = 0x4, fixed_abs, tag = 'smem constant byte address 0x4 - core index']
  #allocation1 [shape = 'u32[72,128]{1,0:T(1,128)}', space=vmem, size = 0x9000, scoped, tag = 'internal scratch']
  #allocation2 [shape = 'f32[16,32]{1,0:T(8,128)}', space=vmem, size = 0x2000, scoped, tag = 'scratch operand']
  %s0 = inlined_call_operand.hbm [shape: f32[16,32], index: 0, kind: input, shape index: {}]
  %s1 = inlined_call_operand.vmem [shape: f32[16,32], index: 1, kind: input, shape index: {}]
  %s2 = inlined_call_operand.vmem [shape: f32[1,32], index: 2, kind: input, shape index: {}, may-alias: {2,10}]
  %s3 = inlined_call_operand.vmem [shape: f32[1,32], index: 3, kind: input, shape index: {}, may-alias: {3,11}]
  %s4 = inlined_call_operand.vmem [shape: f32[32,96], index: 4, kind: input, shape index: {}]
  %s5 = inlined_call_operand.vmem [shape: f32[1,96], index: 5, kind: input, shape index: {}]
  %s6 = inlined_call_operand.hbm [shape: f32[32,32], index: 6, kind: input, shape index: {}]
  %s7 = inlined_call_operand.hbm [shape: f32[1,32], index: 7, kind: input, shape index: {}]
  %s8 = inlined_call_operand.hbm [shape: f32[32,32], index: 8, kind: input, shape index: {}]
  %s9 = inlined_call_operand.vmem [shape: f32[2,16], index: 9, kind: input, shape index: {}]
  %s10 = inlined_call_operand.vmem [shape: f32[1,32], index: 10, kind: input, shape index: {}, may-alias: {2,10}]
  %s11 = inlined_call_operand.vmem [shape: f32[1,32], index: 11, kind: input, shape index: {}, may-alias: {3,11}]
  %s12 = inlined_call_operand.hbm [shape: f32[32,128], index: 12, kind: input, shape index: {}]
  %s13 = inlined_call_operand.hbm [shape: f32[1,128], index: 13, kind: input, shape index: {}]
  %s14 = inlined_call_operand.hbm [shape: f32[128,32], index: 14, kind: input, shape index: {}]
  %s15 = inlined_call_operand.hbm [shape: f32[1,32], index: 15, kind: input, shape index: {}]
  %s16 = inlined_call_operand.hbm [shape: f32[32,6], index: 16, kind: input, shape index: {}]
  %s17 = inlined_call_operand.hbm [shape: f32[1,6], index: 17, kind: input, shape index: {}]
  %s18 = inlined_call_operand.hbm [shape: f32[2,6], index: 18, kind: output, shape index: {0}]
  %s19 = inlined_call_operand.hbm [shape: f32[2,8,8], index: 19, kind: output, shape index: {1}]
  %20 = xla_tuple %s18, %s19
  %s21 = sld [smem:[#allocation0]]
  $region130: #{_lambda_.1} parent=0
    _
  %s23 = ssub.s32 1, %s21
  %s24 = scalar_select 0, %s23, %s21
  $region1: #{_lambda_.1} parent=0
    #allocation3 [shape = 'u8[8192]{0}', space=vmem, size = 0x2000, scoped, tag = 'input window, operand 0, single buffered']
    #allocation4 [shape = 's32[1]{0}', space=sflag, size = 0x4, scoped, tag = 'scoped memory for _lambda_.1']
    #allocation5 [shape = 's32[1]{0}', space=sflag, size = 0x4, scoped, tag = 'scoped memory for _lambda_.1']
    #allocation6 [shape = 'u8[16384]{0}', space=vmem, size = 0x4000, scoped, tag = 'input window, operand 6, single buffered']
    #allocation7 [shape = 's32[1]{0}', space=sflag, size = 0x4, scoped, tag = 'scoped memory for _lambda_.1']
    #allocation8 [shape = 'u8[512]{0}', space=vmem, size = 0x400, scoped, tag = 'input window, operand 7, single buffered']
    #allocation9 [shape = 'u8[16384]{0}', space=vmem, size = 0x4000, scoped, tag = 'input window, operand 8, single buffered']
    #allocation10 [shape = 's32[1]{0}', space=sflag, size = 0x4, scoped, tag = 'scoped memory for _lambda_.1']
    #allocation11 [shape = 'u8[16384]{0}', space=vmem, size = 0x4000, scoped, tag = 'input window, operand 12, single buffered']
    #allocation12 [shape = 'u8[512]{0}', space=vmem, size = 0x400, scoped, tag = 'input window, operand 13, single buffered']
    #allocation13 [shape = 's32[1]{0}', space=sflag, size = 0x4, scoped, tag = 'scoped memory for _lambda_.1']
    #allocation14 [shape = 'u8[65536]{0}', space=vmem, size = 0x10000, scoped, tag = 'input window, operand 14, single buffered']
    #allocation15 [shape = 'u8[512]{0}', space=vmem, size = 0x400, scoped, tag = 'input window, operand 15, single buffered']
    #allocation16 [shape = 's32[1]{0}', space=sflag, size = 0x4, scoped, tag = 'scoped memory for _lambda_.1']
    #allocation17 [shape = 'u8[16384]{0}', space=vmem, size = 0x4000, scoped, tag = 'input window, operand 16, single buffered']
    #allocation18 [shape = 'u8[512]{0}', space=vmem, size = 0x400, scoped, tag = 'input window, operand 17, single buffered']
    #allocation19 [shape = 's32[1]{0}', space=sflag, size = 0x4, scoped, tag = 'scoped memory for _lambda_.1']
    #allocation20 [shape = 'u8[1024]{0}', space=vmem, size = 0x400, scoped, tag = 'output window, operand 0, single buffered']
    #allocation21 [shape = 'u8[8192]{0}', space=vmem, size = 0x2000, scoped, tag = 'output window, operand 1, single buffered']
    #allocation22 [shape = 's32[1]{0}', space=sflag, size = 0x4, scoped, tag = 'scoped memory for _lambda_.1']
    %25 = vsyncpa [#allocation4], 0
    %26 = vsyncpa [#allocation7], 0
    %27 = vsyncpa [#allocation10], 0
    %28 = vsyncpa [#allocation13], 0
    %29 = vsyncpa [#allocation16], 0
    %30 = vsyncpa [#allocation19], 0
    %31 = vsyncpa [#allocation5], 0
    %32 = vsyncpa [#allocation22], 0
    // Predicated region
    $region2: #{_lambda_.1} parent=1 // pred_check
      _
    $region3: #{_lambda_.1} parent=1 // pred_check_branch
      %34 = sbr.rel (0) target = $region5
    $region4: #{_lambda_.1} parent=1 // pred_region
      %36 = vsyncadd [#allocation4], 0
      %s37 = sshll.u32 %s0, 4
      %s38 = int_to_ptr.hbm [resolvable:$true] %s37
      %s39 = sshll.u32 [#allocation3], 4
      %s40 = int_to_ptr.vmem [resolvable:$true] %s39
      %45 = dma.hbm_to_vmem [thread:$0]  %s38, 256, %s40, [#allocation4], 128, 128, 8
    $region5: #{_lambda_.1} parent=1 // pred_fallthru
      _
    // Predicated region
    $region6: #{_lambda_.1} parent=1 // pred_check
      _
    $region7: #{_lambda_.1} parent=1 // pred_check_branch
      %47 = sbr.rel (0) target = $region9
    $region8: #{_lambda_.1} parent=1 // pred_region
      _
    $region9: #{_lambda_.1} parent=1 // pred_fallthru
      _
    // Predicated region
    $region10: #{_lambda_.1} parent=1 // pred_check
      _
    $region11: #{_lambda_.1} parent=1 // pred_check_branch
      %49 = sbr.rel (0) target = $region13
    $region12: #{_lambda_.1} parent=1 // pred_region
      _
    $region13: #{_lambda_.1} parent=1 // pred_fallthru
      _
    // Predicated region
    $region14: #{_lambda_.1} parent=1 // pred_check
      _
    $region15: #{_lambda_.1} parent=1 // pred_check_branch
      %51 = sbr.rel (0) target = $region17
    $region16: #{_lambda_.1} parent=1 // pred_region
      _
    $region17: #{_lambda_.1} parent=1 // pred_fallthru
      _
    // Predicated region
    $region18: #{_lambda_.1} parent=1 // pred_check
      _
    $region19: #{_lambda_.1} parent=1 // pred_check_branch
      %53 = sbr.rel (0) target = $region21
    $region20: #{_lambda_.1} parent=1 // pred_region
      _
    $region21: #{_lambda_.1} parent=1 // pred_fallthru
      _
    // Predicated region
    $region22: #{_lambda_.1} parent=1 // pred_check
      _
    $region23: #{_lambda_.1} parent=1 // pred_check_branch
      %55 = sbr.rel (0) target = $region25
    $region24: #{_lambda_.1} parent=1 // pred_region
      _
    $region25: #{_lambda_.1} parent=1 // pred_fallthru
      _
    // Predicated region
    $region26: #{_lambda_.1} parent=1 // pred_check
      _
    $region27: #{_lambda_.1} parent=1 // pred_check_branch
      %57 = sbr.rel (0) target = $region29
    $region28: #{_lambda_.1} parent=1 // pred_region
      %59 = vsyncadd [#allocation7], 0
      %s60 = sshll.u32 %s6, 4
      %s61 = int_to_ptr.hbm [resolvable:$true] %s60
      %s62 = sshll.u32 [#allocation6], 4
      %s63 = int_to_ptr.vmem [resolvable:$true] %s62
      %68 = dma.hbm_to_vmem [thread:$0]  %s61, 512, %s63, [#allocation7], 128, 128, 8
    $region29: #{_lambda_.1} parent=1 // pred_fallthru
      _
    // Predicated region
    $region30: #{_lambda_.1} parent=1 // pred_check
      _
    $region31: #{_lambda_.1} parent=1 // pred_check_branch
      %70 = sbr.rel (0) target = $region33
    $region32: #{_lambda_.1} parent=1 // pred_region
      %72 = vsyncadd [#allocation7], 0
      %s74 = sshll.u32 %s7, 4
      %s75 = int_to_ptr.hbm [resolvable:$true] %s74
      %s76 = sshll.u32 [#allocation8], 4
      %s77 = int_to_ptr.vmem [resolvable:$true] %s76
      %79 = dma.hbm_to_vmem [thread:$0]  %s75, 16, %s77, [#allocation7]
    $region33: #{_lambda_.1} parent=1 // pred_fallthru
      _
    // Predicated region
    $region34: #{_lambda_.1} parent=1 // pred_check
      _
    $region35: #{_lambda_.1} parent=1 // pred_check_branch
      %81 = sbr.rel (0) target = $region37
    $region36: #{_lambda_.1} parent=1 // pred_region
      %83 = vsyncadd [#allocation10], 0
      %s84 = sshll.u32 %s8, 4
      %s85 = int_to_ptr.hbm [resolvable:$true] %s84
      %s86 = sshll.u32 [#allocation9], 4
      %s87 = int_to_ptr.vmem [resolvable:$true] %s86
      %92 = dma.hbm_to_vmem [thread:$0]  %s85, 512, %s87, [#allocation10], 128, 128, 8
    $region37: #{_lambda_.1} parent=1 // pred_fallthru
      _
    // Predicated region
    $region38: #{_lambda_.1} parent=1 // pred_check
      _
    $region39: #{_lambda_.1} parent=1 // pred_check_branch
      %94 = sbr.rel (0) target = $region41
    $region40: #{_lambda_.1} parent=1 // pred_region
      _
    $region41: #{_lambda_.1} parent=1 // pred_fallthru
      _
    // Predicated region
    $region42: #{_lambda_.1} parent=1 // pred_check
      _
    $region43: #{_lambda_.1} parent=1 // pred_check_branch
      %96 = sbr.rel (0) target = $region45
    $region44: #{_lambda_.1} parent=1 // pred_region
      _
    $region45: #{_lambda_.1} parent=1 // pred_fallthru
      _
    // Predicated region
    $region46: #{_lambda_.1} parent=1 // pred_check
      _
    $region47: #{_lambda_.1} parent=1 // pred_check_branch
      %98 = sbr.rel (0) target = $region49
    $region48: #{_lambda_.1} parent=1 // pred_region
      _
    $region49: #{_lambda_.1} parent=1 // pred_fallthru
      _
    // Predicated region
    $region50: #{_lambda_.1} parent=1 // pred_check
      _
    $region51: #{_lambda_.1} parent=1 // pred_check_branch
      %100 = sbr.rel (0) target = $region53
    $region52: #{_lambda_.1} parent=1 // pred_region
      %102 = vsyncadd [#allocation10], 0
      %s103 = sshll.u32 %s12, 4
      %s104 = int_to_ptr.hbm [resolvable:$true] %s103
      %s105 = sshll.u32 [#allocation11], 4
      %s106 = int_to_ptr.vmem [resolvable:$true] %s105
      %111 = dma.hbm_to_vmem [thread:$0]  %s104, 512, %s106, [#allocation10], 128, 128, 8
    $region53: #{_lambda_.1} parent=1 // pred_fallthru
      _
    // Predicated region
    $region54: #{_lambda_.1} parent=1 // pred_check
      _
    $region55: #{_lambda_.1} parent=1 // pred_check_branch
      %113 = sbr.rel (0) target = $region57
    $region56: #{_lambda_.1} parent=1 // pred_region
      %115 = vsyncadd [#allocation13], 0
      %s117 = sshll.u32 %s13, 4
      %s118 = int_to_ptr.hbm [resolvable:$true] %s117
      %s119 = sshll.u32 [#allocation12], 4
      %s120 = int_to_ptr.vmem [resolvable:$true] %s119
      %122 = dma.hbm_to_vmem [thread:$0]  %s118, 16, %s120, [#allocation13]
    $region57: #{_lambda_.1} parent=1 // pred_fallthru
      _
    // Predicated region
    $region58: #{_lambda_.1} parent=1 // pred_check
      _
    $region59: #{_lambda_.1} parent=1 // pred_check_branch
      %124 = sbr.rel (0) target = $region61
    $region60: #{_lambda_.1} parent=1 // pred_region
      %126 = vsyncadd [#allocation13], 0
      %s127 = sshll.u32 %s14, 4
      %s128 = int_to_ptr.hbm [resolvable:$true] %s127
      %s129 = sshll.u32 [#allocation14], 4
      %s130 = int_to_ptr.vmem [resolvable:$true] %s129
      %135 = dma.hbm_to_vmem [thread:$0]  %s128, 2048, %s130, [#allocation13], 128, 128, 8
    $region61: #{_lambda_.1} parent=1 // pred_fallthru
      _
    // Predicated region
    $region62: #{_lambda_.1} parent=1 // pred_check
      _
    $region63: #{_lambda_.1} parent=1 // pred_check_branch
      %137 = sbr.rel (0) target = $region65
    $region64: #{_lambda_.1} parent=1 // pred_region
      %139 = vsyncadd [#allocation16], 0
      %s141 = sshll.u32 %s15, 4
      %s142 = int_to_ptr.hbm [resolvable:$true] %s141
      %s143 = sshll.u32 [#allocation15], 4
      %s144 = int_to_ptr.vmem [resolvable:$true] %s143
      %146 = dma.hbm_to_vmem [thread:$0]  %s142, 16, %s144, [#allocation16]
    $region65: #{_lambda_.1} parent=1 // pred_fallthru
      _
    // Predicated region
    $region66: #{_lambda_.1} parent=1 // pred_check
      _
    $region67: #{_lambda_.1} parent=1 // pred_check_branch
      %148 = sbr.rel (0) target = $region69
    $region68: #{_lambda_.1} parent=1 // pred_region
      %150 = vsyncadd [#allocation16], 0
      %s151 = sshll.u32 %s16, 4
      %s152 = int_to_ptr.hbm [resolvable:$true] %s151
      %s153 = sshll.u32 [#allocation17], 4
      %s154 = int_to_ptr.vmem [resolvable:$true] %s153
      %159 = dma.hbm_to_vmem [thread:$0]  %s152, 512, %s154, [#allocation16], 128, 128, 8
    $region69: #{_lambda_.1} parent=1 // pred_fallthru
      _
    // Predicated region
    $region70: #{_lambda_.1} parent=1 // pred_check
      _
    $region71: #{_lambda_.1} parent=1 // pred_check_branch
      %161 = sbr.rel (0) target = $region73
    $region72: #{_lambda_.1} parent=1 // pred_region
      %163 = vsyncadd [#allocation19], 0
      %s165 = sshll.u32 %s17, 4
      %s166 = int_to_ptr.hbm [resolvable:$true] %s165
      %s167 = sshll.u32 [#allocation18], 4
      %s168 = int_to_ptr.vmem [resolvable:$true] %s167
      %170 = dma.hbm_to_vmem [thread:$0]  %s166, 16, %s168, [#allocation19]
    $region73: #{_lambda_.1} parent=1 // pred_fallthru
      _
    // Predicated region
    $region74: #{_lambda_.1} parent=1 // pred_check
      _
    $region75: #{_lambda_.1} parent=1 // pred_check_branch
      %172 = sbr.rel (0) target = $region77
    $region76: #{_lambda_.1} parent=1 // pred_region
      %174 = dma.done [#allocation4], 256
    $region77: #{_lambda_.1} parent=1 // pred_fallthru
      _
    // Predicated region
    $region78: #{_lambda_.1} parent=1 // pred_check
      _
    $region79: #{_lambda_.1} parent=1 // pred_check_branch
      %176 = sbr.rel (0) target = $region81
    $region80: #{_lambda_.1} parent=1 // pred_region
      %178 = dma.done [#allocation7], 512
    $region81: #{_lambda_.1} parent=1 // pred_fallthru
      _
    // Predicated region
    $region82: #{_lambda_.1} parent=1 // pred_check
      _
    $region83: #{_lambda_.1} parent=1 // pred_check_branch
      %180 = sbr.rel (0) target = $region85
    $region84: #{_lambda_.1} parent=1 // pred_region
      %182 = dma.done [#allocation7], 16
    $region85: #{_lambda_.1} parent=1 // pred_fallthru
      _
    // Predicated region
    $region86: #{_lambda_.1} parent=1 // pred_check
      _
    $region87: #{_lambda_.1} parent=1 // pred_check_branch
      %184 = sbr.rel (0) target = $region89
    $region88: #{_lambda_.1} parent=1 // pred_region
      %186 = dma.done [#allocation10], 512
    $region89: #{_lambda_.1} parent=1 // pred_fallthru
      _
    // Predicated region
    $region90: #{_lambda_.1} parent=1 // pred_check
      _
    $region91: #{_lambda_.1} parent=1 // pred_check_branch
      %188 = sbr.rel (0) target = $region93
    $region92: #{_lambda_.1} parent=1 // pred_region
      %190 = dma.done [#allocation10], 512
    $region93: #{_lambda_.1} parent=1 // pred_fallthru
      _
    // Predicated region
    $region94: #{_lambda_.1} parent=1 // pred_check
      _
    $region95: #{_lambda_.1} parent=1 // pred_check_branch
      %192 = sbr.rel (0) target = $region97
    $region96: #{_lambda_.1} parent=1 // pred_region
      %194 = dma.done [#allocation13], 16
    $region97: #{_lambda_.1} parent=1 // pred_fallthru
      _
    // Predicated region
    $region98: #{_lambda_.1} parent=1 // pred_check
      _
    $region99: #{_lambda_.1} parent=1 // pred_check_branch
      %196 = sbr.rel (0) target = $region101
    $region100: #{_lambda_.1} parent=1 // pred_region
      %198 = dma.done [#allocation13], 2048
    $region101: #{_lambda_.1} parent=1 // pred_fallthru
      _
    // Predicated region
    $region102: #{_lambda_.1} parent=1 // pred_check
      _
    $region103: #{_lambda_.1} parent=1 // pred_check_branch
      %200 = sbr.rel (0) target = $region105
    $region104: #{_lambda_.1} parent=1 // pred_region
      %202 = dma.done [#allocation16], 16
    $region105: #{_lambda_.1} parent=1 // pred_fallthru
      _
    // Predicated region
    $region106: #{_lambda_.1} parent=1 // pred_check
      _
    $region107: #{_lambda_.1} parent=1 // pred_check_branch
      %204 = sbr.rel (0) target = $region109
    $region108: #{_lambda_.1} parent=1 // pred_region
      %206 = dma.done [#allocation16], 512
    $region109: #{_lambda_.1} parent=1 // pred_fallthru
      _
    // Predicated region
    $region110: #{_lambda_.1} parent=1 // pred_check
      _
    $region111: #{_lambda_.1} parent=1 // pred_check_branch
      %208 = sbr.rel (0) target = $region113
    $region112: #{_lambda_.1} parent=1 // pred_region
      %210 = dma.done [#allocation19], 16
    $region113: #{_lambda_.1} parent=1 // pred_fallthru
      _
    %v211 = vld [vmem:[#allocation3] sm:$0xff]
    %v212 = vld [vmem:[#allocation3 + $0x8] sm:$0xff]
    %v213 = vmul.f32 %v211, 5.656854
    %v214 = vmul.f32 %v212, 5.656854
    %v215 = vld [vmem:[%s1] sm:$0xff]
    %v216 = vld [vmem:[%s1 + $0x8] sm:$0xff]
    %v217 = vadd.f32 %v213, %v215
    %v218 = vadd.f32 %v214, %v216
    %vm219 = vcmask 261120
    %v220 = vsel %vm219, %v217, 0.0
    %221 = vadd.xlane.f32.xlu0 %v220
    %v222 = vpop.xlane.xlu0 %221
    %v223 = vsel %vm219, %v218, 0.0
    %224 = vadd.xlane.f32.xlu0 %v223
    %v225 = vpop.xlane.xlu0 %224
    %v226 = vrcp.pop 32.0
    %v227 = vmul.f32 32.0, %v226
    %v228 = vsub.f32 1.0, %v227
    %v229 = vmul.f32 %v226, %v228
    %v230 = vadd.f32 %v226, %v229
    %vm231 = vweird.f32 %v226
    %v232 = vsel %vm231, %v226, %v230
    %v233 = vmul.f32 %v222, %v232
    %v234 = vmul.f32 %v225, %v232
    %v235 = vsub.f32 %v217, %v233
    %v236 = vsub.f32 %v218, %v234
    %v237 = vmul.f32 %v235, %v235
    %v238 = vmul.f32 %v236, %v236
    %v239 = vsel %vm219, %v237, 0.0
    %240 = vadd.xlane.f32.xlu0 %v239
    %v241 = vpop.xlane.xlu0 %240
    %v242 = vsel %vm219, %v238, 0.0
    %243 = vadd.xlane.f32.xlu0 %v242
    %v244 = vpop.xlane.xlu0 %243
    %v245 = vmul.f32 %v241, 0.032258064
    %v246 = vmul.f32 %v244, 0.032258064
    %v247 = vrsqrt.pop %v245
    %v248 = vmul.f32 %v247, %v245
    %v249 = vmul.f32 %v248, %v247
    %v250 = vmul.f32 0.5, %v249
    %v251 = vsub.f32 1.5, %v250
    %v252 = vmul.f32 %v247, %v251
    %v253 = vmul.f32 %v245, %v252
    %vm254 = vcmp.eq.f32.partialorder %v245, inf
    %v255 = vsel %vm254, %v245, %v253
    %vm256 = vcmp.eq.f32.partialorder %v245, 0.0
    %v257 = vand.u32 %v245, 2147483648
    %v258 = vsel %vm256, %v257, %v255
    %v259 = vrsqrt.pop %v246
    %v260 = vmul.f32 %v259, %v246
    %v261 = vmul.f32 %v260, %v259
    %v262 = vmul.f32 0.5, %v261
    %v263 = vsub.f32 1.5, %v262
    %v264 = vmul.f32 %v259, %v263
    %v265 = vmul.f32 %v246, %v264
    %vm266 = vcmp.eq.f32.partialorder %v246, inf
    %v267 = vsel %vm266, %v246, %v265
    %vm268 = vcmp.eq.f32.partialorder %v246, 0.0
    %v269 = vand.u32 %v246, 2147483648
    %v270 = vsel %vm268, %v269, %v267
    %v271 = vld [vmem:[%s2] sm:$0x1]
    %v273 = vperm.slane %v271, 0
    %v275 = vmul.f32 %v273, %v235
    %v276 = vmul.f32 %v273, %v236
    %v277 = vadd.f32 %v258, 1e-06
    %v278 = vadd.f32 %v270, 1e-06
    %v279 = vrcp.pop %v277
    %v280 = vrcp.pop %v278
    %v281 = vmul.f32 %v275, %v279
    %v282 = vmul.f32 %v276, %v280
    %v283 = vld [vmem:[%s3] sm:$0x1]
    %v285 = vperm.slane %v283, 0
    %v287 = vadd.f32 %v281, %v285
    %v288 = vadd.f32 %v282, %v285
    %v289 = vld [vmem:[%s4] sm:$0xff]
    %v290 = vld [vmem:[%s4 + $0x8] sm:$0xff]
    %v291 = vld [vmem:[%s4 + $0x10] sm:$0xff]
    %v292 = vld [vmem:[%s4 + $0x18] sm:$0xff]
    %v293 = vld [vmem:[%s5] sm:$0x1]
    %v295 = vperm.slane %v293, 0
    %v298 = vsel %vm219, %v287, 0
    %v301 = vsel %vm219, %v288, 0
    %303 = vmatpush.msra.mxu0 0.0
    %304 = vmatpush.msra.mxu0 0.0
    %305 = vmatpush.msra.mxu0 0.0
    %306 = vmatpush.msra.mxu0 0.0
    %307 = vmatpush.msra.mxu0 0.0
    %308 = vmatpush.msra.mxu0 0.0
    %309 = vmatpush.msra.mxu0 0.0
    %310 = vmatpush.msra.mxu0 0.0
    %311 = vmatpush.msra.mxu0 0.0
    %312 = vmatpush.msra.mxu0 0.0
    %313 = vmatpush.msra.mxu0 0.0
    %314 = vmatpush.msra.mxu0 0.0
    %v315 = vand.u32 %v292, 4294901760
    %316 = vmatpush.msra.mxu0 %v315
    %v317 = vand.u32 %v291, 4294901760
    %318 = vmatpush.msra.mxu0 %v317
    %v319 = vand.u32 %v290, 4294901760
    %320 = vmatpush.msra.mxu0 %v319
    %v321 = vand.u32 %v289, 4294901760
    %322 = vmatpush.msra.mxu0 %v321
    %v323 = vand.u32 %v298, 4294901760
    %v324 = vsub.f32 %v298, %v323
    %v325 = vand.u32 %v324, 4294901760
    %v326 = vsub.f32 %v324, %v325
    %v327 = vand.u32 %v326, 4294901760
    %328 = vmatmul.f32.gmra.mxu0 %v327
    %v329 = vpop.f32.mrf.mxu0
    %v330 = vadd.f32 %v295, %v329
    %v331 = vand.u32 %v301, 4294901760
    %v332 = vsub.f32 %v301, %v331
    %v333 = vand.u32 %v332, 4294901760
    %v334 = vsub.f32 %v332, %v333
    %v335 = vand.u32 %v334, 4294901760
    %336 = vmatmul.f32.gmra.mxu0 %v335
    %v337 = vpop.f32.mrf.mxu0
    %v338 = vadd.f32 %v295, %v337
    %339 = vdwg.mxu0
    %340 = vmatpush.msra.mxu0 0.0
    %341 = vmatpush.msra.mxu0 0.0
    %342 = vmatpush.msra.mxu0 0.0
    %343 = vmatpush.msra.mxu0 0.0
    %344 = vmatpush.msra.mxu0 0.0
    %345 = vmatpush.msra.mxu0 0.0
    %346 = vmatpush.msra.mxu0 0.0
    %347 = vmatpush.msra.mxu0 0.0
    %348 = vmatpush.msra.mxu0 0.0
    %349 = vmatpush.msra.mxu0 0.0
    %350 = vmatpush.msra.mxu0 0.0
    %351 = vmatpush.msra.mxu0 0.0
    %v352 = vand.u32 %v292, 4294901760
    %v353 = vsub.f32 %v292, %v352
    %v354 = vand.u32 %v353, 4294901760
    %v355 = vsub.f32 %v353, %v354
    %v356 = vand.u32 %v355, 4294901760
    %357 = vmatpush.msra.mxu0 %v356
    %v358 = vand.u32 %v291, 4294901760
    %v359 = vsub.f32 %v291, %v358
    %v360 = vand.u32 %v359, 4294901760
    %v361 = vsub.f32 %v359, %v360
    %v362 = vand.u32 %v361, 4294901760
    %363 = vmatpush.msra.mxu0 %v362
    %v364 = vand.u32 %v290, 4294901760
    %v365 = vsub.f32 %v290, %v364
    %v366 = vand.u32 %v365, 4294901760
    %v367 = vsub.f32 %v365, %v366
    %v368 = vand.u32 %v367, 4294901760
    %369 = vmatpush.msra.mxu0 %v368
    %v370 = vand.u32 %v289, 4294901760
    %v371 = vsub.f32 %v289, %v370
    %v372 = vand.u32 %v371, 4294901760
    %v373 = vsub.f32 %v371, %v372
    %v374 = vand.u32 %v373, 4294901760
    %375 = vmatpush.msra.mxu0 %v374
    %v376 = vand.u32 %v298, 4294901760
    %377 = vmatmul.f32.gmra.mxu0 %v376
    %v378 = vpop.f32.mrf.mxu0
    %v379 = vadd.f32 %v330, %v378
    %v380 = vand.u32 %v301, 4294901760
    %381 = vmatmul.f32.gmra.mxu0 %v380
    %v382 = vpop.f32.mrf.mxu0
    %v383 = vadd.f32 %v338, %v382
    %384 = vdwg.mxu0
    %385 = vmatpush.msra.mxu0 0.0
    %386 = vmatpush.msra.mxu0 0.0
    %387 = vmatpush.msra.mxu0 0.0
    %388 = vmatpush.msra.mxu0 0.0
    %389 = vmatpush.msra.mxu0 0.0
    %390 = vmatpush.msra.mxu0 0.0
    %391 = vmatpush.msra.mxu0 0.0
    %392 = vmatpush.msra.mxu0 0.0
    %393 = vmatpush.msra.mxu0 0.0
    %394 = vmatpush.msra.mxu0 0.0
    %395 = vmatpush.msra.mxu0 0.0
    %396 = vmatpush.msra.mxu0 0.0
    %v397 = vand.u32 %v292, 4294901760
    %v398 = vsub.f32 %v292, %v397
    %399 = vmatpush.msra.mxu0 %v398
    %v400 = vand.u32 %v291, 4294901760
    %v401 = vsub.f32 %v291, %v400
    %402 = vmatpush.msra.mxu0 %v401
    %v403 = vand.u32 %v290, 4294901760
    %v404 = vsub.f32 %v290, %v403
    %405 = vmatpush.msra.mxu0 %v404
    %v406 = vand.u32 %v289, 4294901760
    %v407 = vsub.f32 %v289, %v406
    %408 = vmatpush.msra.mxu0 %v407
    %v409 = vand.u32 %v298, 4294901760
    %v410 = vsub.f32 %v298, %v409
    %411 = vmatmul.f32.gmra.mxu0 %v410
    %v412 = vpop.f32.mrf.mxu0
    %v413 = vadd.f32 %v379, %v412
    %v414 = vand.u32 %v301, 4294901760
    %v415 = vsub.f32 %v301, %v414
    %416 = vmatmul.f32.gmra.mxu0 %v415
    %v417 = vpop.f32.mrf.mxu0
    %v418 = vadd.f32 %v383, %v417
    %419 = vdwg.mxu0
    %420 = vmatpush.msra.mxu0 0.0
    %421 = vmatpush.msra.mxu0 0.0
    %422 = vmatpush.msra.mxu0 0.0
    %423 = vmatpush.msra.mxu0 0.0
    %424 = vmatpush.msra.mxu0 0.0
    %425 = vmatpush.msra.mxu0 0.0
    %426 = vmatpush.msra.mxu0 0.0
    %427 = vmatpush.msra.mxu0 0.0
    %428 = vmatpush.msra.mxu0 0.0
    %429 = vmatpush.msra.mxu0 0.0
    %430 = vmatpush.msra.mxu0 0.0
    %431 = vmatpush.msra.mxu0 0.0
    %v432 = vand.u32 %v292, 4294901760
    %433 = vmatpush.msra.mxu0 %v432
    %v434 = vand.u32 %v291, 4294901760
    %435 = vmatpush.msra.mxu0 %v434
    %v436 = vand.u32 %v290, 4294901760
    %437 = vmatpush.msra.mxu0 %v436
    %v438 = vand.u32 %v289, 4294901760
    %439 = vmatpush.msra.mxu0 %v438
    %v440 = vand.u32 %v298, 4294901760
    %v441 = vsub.f32 %v298, %v440
    %v442 = vand.u32 %v441, 4294901760
    %443 = vmatmul.f32.gmra.mxu0 %v442
    %v444 = vpop.f32.mrf.mxu0
    %v445 = vadd.f32 %v413, %v444
    %v446 = vand.u32 %v301, 4294901760
    %v447 = vsub.f32 %v301, %v446
    %v448 = vand.u32 %v447, 4294901760
    %449 = vmatmul.f32.gmra.mxu0 %v448
    %v450 = vpop.f32.mrf.mxu0
    %v451 = vadd.f32 %v418, %v450
    %452 = vdwg.mxu0
    %453 = vmatpush.msra.mxu0 0.0
    %454 = vmatpush.msra.mxu0 0.0
    %455 = vmatpush.msra.mxu0 0.0
    %456 = vmatpush.msra.mxu0 0.0
    %457 = vmatpush.msra.mxu0 0.0
    %458 = vmatpush.msra.mxu0 0.0
    %459 = vmatpush.msra.mxu0 0.0
    %460 = vmatpush.msra.mxu0 0.0
    %461 = vmatpush.msra.mxu0 0.0
    %462 = vmatpush.msra.mxu0 0.0
    %463 = vmatpush.msra.mxu0 0.0
    %464 = vmatpush.msra.mxu0 0.0
    %v465 = vand.u32 %v292, 4294901760
    %v466 = vsub.f32 %v292, %v465
    %v467 = vand.u32 %v466, 4294901760
    %468 = vmatpush.msra.mxu0 %v467
    %v469 = vand.u32 %v291, 4294901760
    %v470 = vsub.f32 %v291, %v469
    %v471 = vand.u32 %v470, 4294901760
    %472 = vmatpush.msra.mxu0 %v471
    %v473 = vand.u32 %v290, 4294901760
    %v474 = vsub.f32 %v290, %v473
    %v475 = vand.u32 %v474, 4294901760
    %476 = vmatpush.msra.mxu0 %v475
    %v477 = vand.u32 %v289, 4294901760
    %v478 = vsub.f32 %v289, %v477
    %v479 = vand.u32 %v478, 4294901760
    %480 = vmatpush.msra.mxu0 %v479
    %v481 = vand.u32 %v298, 4294901760
    %482 = vmatmul.f32.gmra.mxu0 %v481
    %v483 = vpop.f32.mrf.mxu0
    %v484 = vadd.f32 %v445, %v483
    %v485 = vand.u32 %v301, 4294901760
    %486 = vmatmul.f32.gmra.mxu0 %v485
    %v487 = vpop.f32.mrf.mxu0
    %v488 = vadd.f32 %v451, %v487
    %489 = vdwg.mxu0
    %490 = vmatpush.msra.mxu0 0.0
    %491 = vmatpush.msra.mxu0 0.0
    %492 = vmatpush.msra.mxu0 0.0
    %493 = vmatpush.msra.mxu0 0.0
    %494 = vmatpush.msra.mxu0 0.0
    %495 = vmatpush.msra.mxu0 0.0
    %496 = vmatpush.msra.mxu0 0.0
    %497 = vmatpush.msra.mxu0 0.0
    %498 = vmatpush.msra.mxu0 0.0
    %499 = vmatpush.msra.mxu0 0.0
    %500 = vmatpush.msra.mxu0 0.0
    %501 = vmatpush.msra.mxu0 0.0
    %v502 = vand.u32 %v292, 4294901760
    %503 = vmatpush.msra.mxu0 %v502
    %v504 = vand.u32 %v291, 4294901760
    %505 = vmatpush.msra.mxu0 %v504
    %v506 = vand.u32 %v290, 4294901760
    %507 = vmatpush.msra.mxu0 %v506
    %v508 = vand.u32 %v289, 4294901760
    %509 = vmatpush.msra.mxu0 %v508
    %v510 = vand.u32 %v298, 4294901760
    %511 = vmatmul.f32.gmra.mxu0 %v510
    %v512 = vpop.f32.mrf.mxu0
    %v513 = vadd.f32 %v484, %v512
    %v514 = vand.u32 %v301, 4294901760
    %515 = vmatmul.f32.gmra.mxu0 %v514
    %v516 = vpop.f32.mrf.mxu0
    %v517 = vadd.f32 %v488, %v516
    %518 = vdwg.mxu0
    %520 = vrot.lane.b32.xlu0 %v513, 96
    %v521 = vpop.permute.xlu0 %520
    %v522 = vsel %vm219, %v513, 0
    %v524 = vsel %vm219, %v521, 0
    %526 = vmatpush.xpose.msra.mxu0 0.0
    %527 = vmatpush.xpose.msra.mxu0 0.0
    %528 = vmatpush.xpose.msra.mxu0 0.0
    %529 = vmatpush.xpose.msra.mxu0 0.0
    %530 = vmatpush.xpose.msra.mxu0 0.0
    %531 = vmatpush.xpose.msra.mxu0 0.0
    %532 = vmatpush.xpose.msra.mxu0 0.0
    %533 = vmatpush.xpose.msra.mxu0 0.0
    %534 = vmatpush.xpose.msra.mxu0 0.0
    %535 = vmatpush.xpose.msra.mxu0 0.0
    %536 = vmatpush.xpose.msra.mxu0 0.0
    %537 = vmatpush.xpose.msra.mxu0 0.0
    %538 = vmatpush.xpose.msra.mxu0 0.0
    %539 = vmatpush.xpose.msra.mxu0 0.0
    %540 = vmatpush.xpose.msra.mxu0 0.0
    %v541 = vand.u32 %v524, 4294901760
    %542 = vmatpush.xpose.msra.mxu0 %v541
    %v543 = vand.u32 %v522, 4294901760
    %v544 = vsub.f32 %v522, %v543
    %v545 = vand.u32 %v544, 4294901760
    %v546 = vsub.f32 %v544, %v545
    %v547 = vand.u32 %v546, 4294901760
    %548 = vmatmul.f32.gmra.mxu0 %v547
    %v549 = vpop.f32.mrf.mxu0
    %v550 = vadd.f32 0.0, %v549
    %551 = vdwg.mxu0
    %552 = vmatpush.xpose.msra.mxu0 0.0
    %553 = vmatpush.xpose.msra.mxu0 0.0
    %554 = vmatpush.xpose.msra.mxu0 0.0
    %555 = vmatpush.xpose.msra.mxu0 0.0
    %556 = vmatpush.xpose.msra.mxu0 0.0
    %557 = vmatpush.xpose.msra.mxu0 0.0
    %558 = vmatpush.xpose.msra.mxu0 0.0
    %559 = vmatpush.xpose.msra.mxu0 0.0
    %560 = vmatpush.xpose.msra.mxu0 0.0
    %561 = vmatpush.xpose.msra.mxu0 0.0
    %562 = vmatpush.xpose.msra.mxu0 0.0
    %563 = vmatpush.xpose.msra.mxu0 0.0
    %564 = vmatpush.xpose.msra.mxu0 0.0
    %565 = vmatpush.xpose.msra.mxu0 0.0
    %566 = vmatpush.xpose.msra.mxu0 0.0
    %v567 = vand.u32 %v524, 4294901760
    %v568 = vsub.f32 %v524, %v567
    %v569 = vand.u32 %v568, 4294901760
    %v570 = vsub.f32 %v568, %v569
    %v571 = vand.u32 %v570, 4294901760
    %572 = vmatpush.xpose.msra.mxu0 %v571
    %v573 = vand.u32 %v522, 4294901760
    %574 = vmatmul.f32.gmra.mxu0 %v573
    %v575 = vpop.f32.mrf.mxu0
    %v576 = vadd.f32 %v550, %v575
    %577 = vdwg.mxu0
    %578 = vmatpush.xpose.msra.mxu0 0.0
    %579 = vmatpush.xpose.msra.mxu0 0.0
    %580 = vmatpush.xpose.msra.mxu0 0.0
    %581 = vmatpush.xpose.msra.mxu0 0.0
    %582 = vmatpush.xpose.msra.mxu0 0.0
    %583 = vmatpush.xpose.msra.mxu0 0.0
    %584 = vmatpush.xpose.msra.mxu0 0.0
    %585 = vmatpush.xpose.msra.mxu0 0.0
    %586 = vmatpush.xpose.msra.mxu0 0.0
    %587 = vmatpush.xpose.msra.mxu0 0.0
    %588 = vmatpush.xpose.msra.mxu0 0.0
    %589 = vmatpush.xpose.msra.mxu0 0.0
    %590 = vmatpush.xpose.msra.mxu0 0.0
    %591 = vmatpush.xpose.msra.mxu0 0.0
    %592 = vmatpush.xpose.msra.mxu0 0.0
    %v593 = vand.u32 %v524, 4294901760
    %v594 = vsub.f32 %v524, %v593
    %595 = vmatpush.xpose.msra.mxu0 %v594
    %v596 = vand.u32 %v522, 4294901760
    %v597 = vsub.f32 %v522, %v596
    %598 = vmatmul.f32.gmra.mxu0 %v597
    %v599 = vpop.f32.mrf.mxu0
    %v600 = vadd.f32 %v576, %v599
    %601 = vdwg.mxu0
    %602 = vmatpush.xpose.msra.mxu0 0.0
    %603 = vmatpush.xpose.msra.mxu0 0.0
    %604 = vmatpush.xpose.msra.mxu0 0.0
    %605 = vmatpush.xpose.msra.mxu0 0.0
    %606 = vmatpush.xpose.msra.mxu0 0.0
    %607 = vmatpush.xpose.msra.mxu0 0.0
    %608 = vmatpush.xpose.msra.mxu0 0.0
    %609 = vmatpush.xpose.msra.mxu0 0.0
    %610 = vmatpush.xpose.msra.mxu0 0.0
    %611 = vmatpush.xpose.msra.mxu0 0.0
    %612 = vmatpush.xpose.msra.mxu0 0.0
    %613 = vmatpush.xpose.msra.mxu0 0.0
    %614 = vmatpush.xpose.msra.mxu0 0.0
    %615 = vmatpush.xpose.msra.mxu0 0.0
    %616 = vmatpush.xpose.msra.mxu0 0.0
    %v617 = vand.u32 %v524, 4294901760
    %618 = vmatpush.xpose.msra.mxu0 %v617
    %v619 = vand.u32 %v522, 4294901760
    %v620 = vsub.f32 %v522, %v619
    %v621 = vand.u32 %v620, 4294901760
    %622 = vmatmul.f32.gmra.mxu0 %v621
    %v623 = vpop.f32.mrf.mxu0
    %v624 = vadd.f32 %v600, %v623
    %625 = vdwg.mxu0
    %626 = vmatpush.xpose.msra.mxu0 0.0
    %627 = vmatpush.xpose.msra.mxu0 0.0
    %628 = vmatpush.xpose.msra.mxu0 0.0
    %629 = vmatpush.xpose.msra.mxu0 0.0
    %630 = vmatpush.xpose.msra.mxu0 0.0
    %631 = vmatpush.xpose.msra.mxu0 0.0
    %632 = vmatpush.xpose.msra.mxu0 0.0
    %633 = vmatpush.xpose.msra.mxu0 0.0
    %634 = vmatpush.xpose.msra.mxu0 0.0
    %635 = vmatpush.xpose.msra.mxu0 0.0
    %636 = vmatpush.xpose.msra.mxu0 0.0
    %637 = vmatpush.xpose.msra.mxu0 0.0
    %638 = vmatpush.xpose.msra.mxu0 0.0
    %639 = vmatpush.xpose.msra.mxu0 0.0
    %640 = vmatpush.xpose.msra.mxu0 0.0
    %v641 = vand.u32 %v524, 4294901760
    %v642 = vsub.f32 %v524, %v641
    %v643 = vand.u32 %v642, 4294901760
    %644 = vmatpush.xpose.msra.mxu0 %v643
    %v645 = vand.u32 %v522, 4294901760
    %646 = vmatmul.f32.gmra.mxu0 %v645
    %v647 = vpop.f32.mrf.mxu0
    %v648 = vadd.f32 %v624, %v647
    %649 = vdwg.mxu0
    %650 = vmatpush.xpose.msra.mxu0 0.0
    %651 = vmatpush.xpose.msra.mxu0 0.0
    %652 = vmatpush.xpose.msra.mxu0 0.0
    %653 = vmatpush.xpose.msra.mxu0 0.0
    %654 = vmatpush.xpose.msra.mxu0 0.0
    %655 = vmatpush.xpose.msra.mxu0 0.0
    %656 = vmatpush.xpose.msra.mxu0 0.0
    %657 = vmatpush.xpose.msra.mxu0 0.0
    %658 = vmatpush.xpose.msra.mxu0 0.0
    %659 = vmatpush.xpose.msra.mxu0 0.0
    %660 = vmatpush.xpose.msra.mxu0 0.0
    %661 = vmatpush.xpose.msra.mxu0 0.0
    %662 = vmatpush.xpose.msra.mxu0 0.0
    %663 = vmatpush.xpose.msra.mxu0 0.0
    %664 = vmatpush.xpose.msra.mxu0 0.0
    %v665 = vand.u32 %v524, 4294901760
    %666 = vmatpush.xpose.msra.mxu0 %v665
    %v667 = vand.u32 %v522, 4294901760
    %668 = vmatmul.f32.gmra.mxu0 %v667
    %v669 = vpop.f32.mrf.mxu0
    %v670 = vadd.f32 %v648, %v669
    %671 = vdwg.mxu0
    %v672 = vmul.f32 %v670, 0.17677669
    %vm673 = vcmask 64512
    %674 = vst.msk [vmem:[#allocation21] sm:$0xff] %vm673, %v672
    %v675 = vsel %vm673, %v672, -inf
    %676 = vmax.xlane.f32.xlu0 %v675
    %v677 = vpop.xlane.xlu0 %676
    %v678 = vsub.f32 %v672, %v677
    %v679 = vmul.f32 %v678, 1.442695
    %v680 = vpow.pop %v679
    %v681 = vsel %vm673, %v680, 0.0
    %682 = vadd.xlane.f32.xlu0 %v681
    %v683 = vpop.xlane.xlu0 %682
    %v684 = vrcp.pop %v683
    %v685 = vmul.f32 %v680, %v684
    %686 = vrot.lane.b32.xlu0 %v513, 64
    %v687 = vpop.permute.xlu0 %686
    %v690 = vsel %vm673, %v685, 0
    %692 = vmatpush.msra.mxu0 0.0
    %693 = vmatpush.msra.mxu0 0.0
    %694 = vmatpush.msra.mxu0 0.0
    %695 = vmatpush.msra.mxu0 0.0
    %696 = vmatpush.msra.mxu0 0.0
    %697 = vmatpush.msra.mxu0 0.0
    %698 = vmatpush.msra.mxu0 0.0
    %699 = vmatpush.msra.mxu0 0.0
    %700 = vmatpush.msra.mxu0 0.0
    %701 = vmatpush.msra.mxu0 0.0
    %702 = vmatpush.msra.mxu0 0.0
    %703 = vmatpush.msra.mxu0 0.0
    %704 = vmatpush.msra.mxu0 0.0
    %705 = vmatpush.msra.mxu0 0.0
    %706 = vmatpush.msra.mxu0 0.0
    %v707 = vand.u32 %v687, 4294901760
    %708 = vmatpush.msra.mxu0 %v707
    %v709 = vand.u32 %v690, 4294901760
    %v710 = vsub.f32 %v690, %v709
    %v711 = vand.u32 %v710, 4294901760
    %v712 = vsub.f32 %v710, %v711
    %v713 = vand.u32 %v712, 4294901760
    %714 = vmatmul.f32.gmra.mxu0 %v713
    %v715 = vpop.f32.mrf.mxu0
    %v716 = vadd.f32 0.0, %v715
    %717 = vdwg.mxu0
    %718 = vmatpush.msra.mxu0 0.0
    %719 = vmatpush.msra.mxu0 0.0
    %720 = vmatpush.msra.mxu0 0.0
    %721 = vmatpush.msra.mxu0 0.0
    %722 = vmatpush.msra.mxu0 0.0
    %723 = vmatpush.msra.mxu0 0.0
    %724 = vmatpush.msra.mxu0 0.0
    %725 = vmatpush.msra.mxu0 0.0
    %726 = vmatpush.msra.mxu0 0.0
    %727 = vmatpush.msra.mxu0 0.0
    %728 = vmatpush.msra.mxu0 0.0
    %729 = vmatpush.msra.mxu0 0.0
    %730 = vmatpush.msra.mxu0 0.0
    %731 = vmatpush.msra.mxu0 0.0
    %732 = vmatpush.msra.mxu0 0.0
    %v733 = vand.u32 %v687, 4294901760
    %v734 = vsub.f32 %v687, %v733
    %v735 = vand.u32 %v734, 4294901760
    %v736 = vsub.f32 %v734, %v735
    %v737 = vand.u32 %v736, 4294901760
    %738 = vmatpush.msra.mxu0 %v737
    %v739 = vand.u32 %v690, 4294901760
    %740 = vmatmul.f32.gmra.mxu0 %v739
    %v741 = vpop.f32.mrf.mxu0
    %v742 = vadd.f32 %v716, %v741
    %743 = vdwg.mxu0
    %744 = vmatpush.msra.mxu0 0.0
    %745 = vmatpush.msra.mxu0 0.0
    %746 = vmatpush.msra.mxu0 0.0
    %747 = vmatpush.msra.mxu0 0.0
    %748 = vmatpush.msra.mxu0 0.0
    %749 = vmatpush.msra.mxu0 0.0
    %750 = vmatpush.msra.mxu0 0.0
    %751 = vmatpush.msra.mxu0 0.0
    %752 = vmatpush.msra.mxu0 0.0
    %753 = vmatpush.msra.mxu0 0.0
    %754 = vmatpush.msra.mxu0 0.0
    %755 = vmatpush.msra.mxu0 0.0
    %756 = vmatpush.msra.mxu0 0.0
    %757 = vmatpush.msra.mxu0 0.0
    %758 = vmatpush.msra.mxu0 0.0
    %v759 = vand.u32 %v687, 4294901760
    %v760 = vsub.f32 %v687, %v759
    %761 = vmatpush.msra.mxu0 %v760
    %v762 = vand.u32 %v690, 4294901760
    %v763 = vsub.f32 %v690, %v762
    %764 = vmatmul.f32.gmra.mxu0 %v763
    %v765 = vpop.f32.mrf.mxu0
    %v766 = vadd.f32 %v742, %v765
    %767 = vdwg.mxu0
    %768 = vmatpush.msra.mxu0 0.0
    %769 = vmatpush.msra.mxu0 0.0
    %770 = vmatpush.msra.mxu0 0.0
    %771 = vmatpush.msra.mxu0 0.0
    %772 = vmatpush.msra.mxu0 0.0
    %773 = vmatpush.msra.mxu0 0.0
    %774 = vmatpush.msra.mxu0 0.0
    %775 = vmatpush.msra.mxu0 0.0
    %776 = vmatpush.msra.mxu0 0.0
    %777 = vmatpush.msra.mxu0 0.0
    %778 = vmatpush.msra.mxu0 0.0
    %779 = vmatpush.msra.mxu0 0.0
    %780 = vmatpush.msra.mxu0 0.0
    %781 = vmatpush.msra.mxu0 0.0
    %782 = vmatpush.msra.mxu0 0.0
    %v783 = vand.u32 %v687, 4294901760
    %784 = vmatpush.msra.mxu0 %v783
    %v785 = vand.u32 %v690, 4294901760
    %v786 = vsub.f32 %v690, %v785
    %v787 = vand.u32 %v786, 4294901760
    %788 = vmatmul.f32.gmra.mxu0 %v787
    %v789 = vpop.f32.mrf.mxu0
    %v790 = vadd.f32 %v766, %v789
    %791 = vdwg.mxu0
    %792 = vmatpush.msra.mxu0 0.0
    %793 = vmatpush.msra.mxu0 0.0
    %794 = vmatpush.msra.mxu0 0.0
    %795 = vmatpush.msra.mxu0 0.0
    %796 = vmatpush.msra.mxu0 0.0
    %797 = vmatpush.msra.mxu0 0.0
    %798 = vmatpush.msra.mxu0 0.0
    %799 = vmatpush.msra.mxu0 0.0
    %800 = vmatpush.msra.mxu0 0.0
    %801 = vmatpush.msra.mxu0 0.0
    %802 = vmatpush.msra.mxu0 0.0
    %803 = vmatpush.msra.mxu0 0.0
    %804 = vmatpush.msra.mxu0 0.0
    %805 = vmatpush.msra.mxu0 0.0
    %806 = vmatpush.msra.mxu0 0.0
    %v807 = vand.u32 %v687, 4294901760
    %v808 = vsub.f32 %v687, %v807
    %v809 = vand.u32 %v808, 4294901760
    %810 = vmatpush.msra.mxu0 %v809
    %v811 = vand.u32 %v690, 4294901760
    %812 = vmatmul.f32.gmra.mxu0 %v811
    %v813 = vpop.f32.mrf.mxu0
    %v814 = vadd.f32 %v790, %v813
    %815 = vdwg.mxu0
    %816 = vmatpush.msra.mxu0 0.0
    %817 = vmatpush.msra.mxu0 0.0
    %818 = vmatpush.msra.mxu0 0.0
    %819 = vmatpush.msra.mxu0 0.0
    %820 = vmatpush.msra.mxu0 0.0
    %821 = vmatpush.msra.mxu0 0.0
    %822 = vmatpush.msra.mxu0 0.0
    %823 = vmatpush.msra.mxu0 0.0
    %824 = vmatpush.msra.mxu0 0.0
    %825 = vmatpush.msra.mxu0 0.0
    %826 = vmatpush.msra.mxu0 0.0
    %827 = vmatpush.msra.mxu0 0.0
    %828 = vmatpush.msra.mxu0 0.0
    %829 = vmatpush.msra.mxu0 0.0
    %830 = vmatpush.msra.mxu0 0.0
    %v831 = vand.u32 %v687, 4294901760
    %832 = vmatpush.msra.mxu0 %v831
    %v833 = vand.u32 %v690, 4294901760
    %834 = vmatmul.f32.gmra.mxu0 %v833
    %v835 = vpop.f32.mrf.mxu0
    %v836 = vadd.f32 %v814, %v835
    %837 = vdwg.mxu0
    %v838 = vld [vmem:[#allocation9] sm:$0xff]
    %v840 = vsel %vm219, %v838, 0
    %v843 = vsel %vm219, %v836, 0
    %845 = vmatpush.xpose.msra.mxu0 0.0
    %846 = vmatpush.xpose.msra.mxu0 0.0
    %847 = vmatpush.xpose.msra.mxu0 0.0
    %848 = vmatpush.xpose.msra.mxu0 0.0
    %849 = vmatpush.xpose.msra.mxu0 0.0
    %850 = vmatpush.xpose.msra.mxu0 0.0
    %851 = vmatpush.xpose.msra.mxu0 0.0
    %852 = vmatpush.xpose.msra.mxu0 0.0
    %853 = vmatpush.xpose.msra.mxu0 0.0
    %854 = vmatpush.xpose.msra.mxu0 0.0
    %855 = vmatpush.xpose.msra.mxu0 0.0
    %856 = vmatpush.xpose.msra.mxu0 0.0
    %857 = vmatpush.xpose.msra.mxu0 0.0
    %858 = vmatpush.xpose.msra.mxu0 0.0
    %859 = vmatpush.xpose.msra.mxu0 0.0
    %v860 = vand.u32 %v843, 4294901760
    %861 = vmatpush.xpose.msra.mxu0 %v860
    %v862 = vand.u32 %v840, 4294901760
    %v863 = vsub.f32 %v840, %v862
    %v864 = vand.u32 %v863, 4294901760
    %v865 = vsub.f32 %v863, %v864
    %v866 = vand.u32 %v865, 4294901760
    %867 = vmatmul.f32.gmra.mxu0 %v866
    %v868 = vpop.f32.mrf.mxu0
    %v869 = vadd.f32 0.0, %v868
    %870 = vdwg.mxu0
    %871 = vmatpush.xpose.msra.mxu0 0.0
    %872 = vmatpush.xpose.msra.mxu0 0.0
    %873 = vmatpush.xpose.msra.mxu0 0.0
    %874 = vmatpush.xpose.msra.mxu0 0.0
    %875 = vmatpush.xpose.msra.mxu0 0.0
    %876 = vmatpush.xpose.msra.mxu0 0.0
    %877 = vmatpush.xpose.msra.mxu0 0.0
    %878 = vmatpush.xpose.msra.mxu0 0.0
    %879 = vmatpush.xpose.msra.mxu0 0.0
    %880 = vmatpush.xpose.msra.mxu0 0.0
    %881 = vmatpush.xpose.msra.mxu0 0.0
    %882 = vmatpush.xpose.msra.mxu0 0.0
    %883 = vmatpush.xpose.msra.mxu0 0.0
    %884 = vmatpush.xpose.msra.mxu0 0.0
    %885 = vmatpush.xpose.msra.mxu0 0.0
    %v886 = vand.u32 %v843, 4294901760
    %v887 = vsub.f32 %v843, %v886
    %v888 = vand.u32 %v887, 4294901760
    %v889 = vsub.f32 %v887, %v888
    %v890 = vand.u32 %v889, 4294901760
    %891 = vmatpush.xpose.msra.mxu0 %v890
    %v892 = vand.u32 %v840, 4294901760
    %893 = vmatmul.f32.gmra.mxu0 %v892
    %v894 = vpop.f32.mrf.mxu0
    %v895 = vadd.f32 %v869, %v894
    %896 = vdwg.mxu0
    %897 = vmatpush.xpose.msra.mxu0 0.0
    %898 = vmatpush.xpose.msra.mxu0 0.0
    %899 = vmatpush.xpose.msra.mxu0 0.0
    %900 = vmatpush.xpose.msra.mxu0 0.0
    %901 = vmatpush.xpose.msra.mxu0 0.0
    %902 = vmatpush.xpose.msra.mxu0 0.0
    %903 = vmatpush.xpose.msra.mxu0 0.0
    %904 = vmatpush.xpose.msra.mxu0 0.0
    %905 = vmatpush.xpose.msra.mxu0 0.0
    %906 = vmatpush.xpose.msra.mxu0 0.0
    %907 = vmatpush.xpose.msra.mxu0 0.0
    %908 = vmatpush.xpose.msra.mxu0 0.0
    %909 = vmatpush.xpose.msra.mxu0 0.0
    %910 = vmatpush.xpose.msra.mxu0 0.0
    %911 = vmatpush.xpose.msra.mxu0 0.0
    %v912 = vand.u32 %v843, 4294901760
    %v913 = vsub.f32 %v843, %v912
    %914 = vmatpush.xpose.msra.mxu0 %v913
    %v915 = vand.u32 %v840, 4294901760
    %v916 = vsub.f32 %v840, %v915
    %917 = vmatmul.f32.gmra.mxu0 %v916
    %v918 = vpop.f32.mrf.mxu0
    %v919 = vadd.f32 %v895, %v918
    %920 = vdwg.mxu0
    %921 = vmatpush.xpose.msra.mxu0 0.0
    %922 = vmatpush.xpose.msra.mxu0 0.0
    %923 = vmatpush.xpose.msra.mxu0 0.0
    %924 = vmatpush.xpose.msra.mxu0 0.0
    %925 = vmatpush.xpose.msra.mxu0 0.0
    %926 = vmatpush.xpose.msra.mxu0 0.0
    %927 = vmatpush.xpose.msra.mxu0 0.0
    %928 = vmatpush.xpose.msra.mxu0 0.0
    %929 = vmatpush.xpose.msra.mxu0 0.0
    %930 = vmatpush.xpose.msra.mxu0 0.0
    %931 = vmatpush.xpose.msra.mxu0 0.0
    %932 = vmatpush.xpose.msra.mxu0 0.0
    %933 = vmatpush.xpose.msra.mxu0 0.0
    %934 = vmatpush.xpose.msra.mxu0 0.0
    %935 = vmatpush.xpose.msra.mxu0 0.0
    %v936 = vand.u32 %v843, 4294901760
    %937 = vmatpush.xpose.msra.mxu0 %v936
    %v938 = vand.u32 %v840, 4294901760
    %v939 = vsub.f32 %v840, %v938
    %v940 = vand.u32 %v939, 4294901760
    %941 = vmatmul.f32.gmra.mxu0 %v940
    %v942 = vpop.f32.mrf.mxu0
    %v943 = vadd.f32 %v919, %v942
    %944 = vdwg.mxu0
    %945 = vmatpush.xpose.msra.mxu0 0.0
    %946 = vmatpush.xpose.msra.mxu0 0.0
    %947 = vmatpush.xpose.msra.mxu0 0.0
    %948 = vmatpush.xpose.msra.mxu0 0.0
    %949 = vmatpush.xpose.msra.mxu0 0.0
    %950 = vmatpush.xpose.msra.mxu0 0.0
    %951 = vmatpush.xpose.msra.mxu0 0.0
    %952 = vmatpush.xpose.msra.mxu0 0.0
    %953 = vmatpush.xpose.msra.mxu0 0.0
    %954 = vmatpush.xpose.msra.mxu0 0.0
    %955 = vmatpush.xpose.msra.mxu0 0.0
    %956 = vmatpush.xpose.msra.mxu0 0.0
    %957 = vmatpush.xpose.msra.mxu0 0.0
    %958 = vmatpush.xpose.msra.mxu0 0.0
    %959 = vmatpush.xpose.msra.mxu0 0.0
    %v960 = vand.u32 %v843, 4294901760
    %v961 = vsub.f32 %v843, %v960
    %v962 = vand.u32 %v961, 4294901760
    %963 = vmatpush.xpose.msra.mxu0 %v962
    %v964 = vand.u32 %v840, 4294901760
    %965 = vmatmul.f32.gmra.mxu0 %v964
    %v966 = vpop.f32.mrf.mxu0
    %v967 = vadd.f32 %v943, %v966
    %968 = vdwg.mxu0
    %969 = vmatpush.xpose.msra.mxu0 0.0
    %970 = vmatpush.xpose.msra.mxu0 0.0
    %971 = vmatpush.xpose.msra.mxu0 0.0
    %972 = vmatpush.xpose.msra.mxu0 0.0
    %973 = vmatpush.xpose.msra.mxu0 0.0
    %974 = vmatpush.xpose.msra.mxu0 0.0
    %975 = vmatpush.xpose.msra.mxu0 0.0
    %976 = vmatpush.xpose.msra.mxu0 0.0
    %977 = vmatpush.xpose.msra.mxu0 0.0
    %978 = vmatpush.xpose.msra.mxu0 0.0
    %979 = vmatpush.xpose.msra.mxu0 0.0
    %980 = vmatpush.xpose.msra.mxu0 0.0
    %981 = vmatpush.xpose.msra.mxu0 0.0
    %982 = vmatpush.xpose.msra.mxu0 0.0
    %983 = vmatpush.xpose.msra.mxu0 0.0
    %v984 = vand.u32 %v843, 4294901760
    %985 = vmatpush.xpose.msra.mxu0 %v984
    %v986 = vand.u32 %v840, 4294901760
    %987 = vmatmul.f32.gmra.mxu0 %v986
    %v988 = vpop.f32.mrf.mxu0
    %v989 = vadd.f32 %v967, %v988
    %990 = vdwg.mxu0
    %v991 = vld [vmem:[#allocation6] sm:$0xff]
    %v992 = vld [vmem:[#allocation9 + $0x8] sm:$0xff]
    %v994 = vsel %vm219, %v992, 0
    %996 = vmatpush.xpose.msra.mxu0 0.0
    %997 = vmatpush.xpose.msra.mxu0 0.0
    %998 = vmatpush.xpose.msra.mxu0 0.0
    %999 = vmatpush.xpose.msra.mxu0 0.0
    %1000 = vmatpush.xpose.msra.mxu0 0.0
    %1001 = vmatpush.xpose.msra.mxu0 0.0
    %1002 = vmatpush.xpose.msra.mxu0 0.0
    %1003 = vmatpush.xpose.msra.mxu0 0.0
    %1004 = vmatpush.xpose.msra.mxu0 0.0
    %1005 = vmatpush.xpose.msra.mxu0 0.0
    %1006 = vmatpush.xpose.msra.mxu0 0.0
    %1007 = vmatpush.xpose.msra.mxu0 0.0
    %1008 = vmatpush.xpose.msra.mxu0 0.0
    %1009 = vmatpush.xpose.msra.mxu0 0.0
    %1010 = vmatpush.xpose.msra.mxu0 0.0
    %v1011 = vand.u32 %v843, 4294901760
    %1012 = vmatpush.xpose.msra.mxu0 %v1011
    %v1013 = vand.u32 %v994, 4294901760
    %v1014 = vsub.f32 %v994, %v1013
    %v1015 = vand.u32 %v1014, 4294901760
    %v1016 = vsub.f32 %v1014, %v1015
    %v1017 = vand.u32 %v1016, 4294901760
    %1018 = vmatmul.f32.gmra.mxu0 %v1017
    %v1019 = vpop.f32.mrf.mxu0
    %v1020 = vadd.f32 0.0, %v1019
    %1021 = vdwg.mxu0
    %1022 = vmatpush.xpose.msra.mxu0 0.0
    %1023 = vmatpush.xpose.msra.mxu0 0.0
    %1024 = vmatpush.xpose.msra.mxu0 0.0
    %1025 = vmatpush.xpose.msra.mxu0 0.0
    %1026 = vmatpush.xpose.msra.mxu0 0.0
    %1027 = vmatpush.xpose.msra.mxu0 0.0
    %1028 = vmatpush.xpose.msra.mxu0 0.0
    %1029 = vmatpush.xpose.msra.mxu0 0.0
    %1030 = vmatpush.xpose.msra.mxu0 0.0
    %1031 = vmatpush.xpose.msra.mxu0 0.0
    %1032 = vmatpush.xpose.msra.mxu0 0.0
    %1033 = vmatpush.xpose.msra.mxu0 0.0
    %1034 = vmatpush.xpose.msra.mxu0 0.0
    %1035 = vmatpush.xpose.msra.mxu0 0.0
    %1036 = vmatpush.xpose.msra.mxu0 0.0
    %v1037 = vand.u32 %v843, 4294901760
    %v1038 = vsub.f32 %v843, %v1037
    %v1039 = vand.u32 %v1038, 4294901760
    %v1040 = vsub.f32 %v1038, %v1039
    %v1041 = vand.u32 %v1040, 4294901760
    %1042 = vmatpush.xpose.msra.mxu0 %v1041
    %v1043 = vand.u32 %v994, 4294901760
    %1044 = vmatmul.f32.gmra.mxu0 %v1043
    %v1045 = vpop.f32.mrf.mxu0
    %v1046 = vadd.f32 %v1020, %v1045
    %1047 = vdwg.mxu0
    %1048 = vmatpush.xpose.msra.mxu0 0.0
    %1049 = vmatpush.xpose.msra.mxu0 0.0
    %1050 = vmatpush.xpose.msra.mxu0 0.0
    %1051 = vmatpush.xpose.msra.mxu0 0.0
    %1052 = vmatpush.xpose.msra.mxu0 0.0
    %1053 = vmatpush.xpose.msra.mxu0 0.0
    %1054 = vmatpush.xpose.msra.mxu0 0.0
    %1055 = vmatpush.xpose.msra.mxu0 0.0
    %1056 = vmatpush.xpose.msra.mxu0 0.0
    %1057 = vmatpush.xpose.msra.mxu0 0.0
    %1058 = vmatpush.xpose.msra.mxu0 0.0
    %1059 = vmatpush.xpose.msra.mxu0 0.0
    %1060 = vmatpush.xpose.msra.mxu0 0.0
    %1061 = vmatpush.xpose.msra.mxu0 0.0
    %1062 = vmatpush.xpose.msra.mxu0 0.0
    %v1063 = vand.u32 %v843, 4294901760
    %v1064 = vsub.f32 %v843, %v1063
    %1065 = vmatpush.xpose.msra.mxu0 %v1064
    %v1066 = vand.u32 %v994, 4294901760
    %v1067 = vsub.f32 %v994, %v1066
    %1068 = vmatmul.f32.gmra.mxu0 %v1067
    %v1069 = vpop.f32.mrf.mxu0
    %v1070 = vadd.f32 %v1046, %v1069
    %1071 = vdwg.mxu0
    %1072 = vmatpush.xpose.msra.mxu0 0.0
    %1073 = vmatpush.xpose.msra.mxu0 0.0
    %1074 = vmatpush.xpose.msra.mxu0 0.0
    %1075 = vmatpush.xpose.msra.mxu0 0.0
    %1076 = vmatpush.xpose.msra.mxu0 0.0
    %1077 = vmatpush.xpose.msra.mxu0 0.0
    %1078 = vmatpush.xpose.msra.mxu0 0.0
    %1079 = vmatpush.xpose.msra.mxu0 0.0
    %1080 = vmatpush.xpose.msra.mxu0 0.0
    %1081 = vmatpush.xpose.msra.mxu0 0.0
    %1082 = vmatpush.xpose.msra.mxu0 0.0
    %1083 = vmatpush.xpose.msra.mxu0 0.0
    %1084 = vmatpush.xpose.msra.mxu0 0.0
    %1085 = vmatpush.xpose.msra.mxu0 0.0
    %1086 = vmatpush.xpose.msra.mxu0 0.0
    %v1087 = vand.u32 %v843, 4294901760
    %1088 = vmatpush.xpose.msra.mxu0 %v1087
    %v1089 = vand.u32 %v994, 4294901760
    %v1090 = vsub.f32 %v994, %v1089
    %v1091 = vand.u32 %v1090, 4294901760
    %1092 = vmatmul.f32.gmra.mxu0 %v1091
    %v1093 = vpop.f32.mrf.mxu0
    %v1094 = vadd.f32 %v1070, %v1093
    %1095 = vdwg.mxu0
    %1096 = vmatpush.xpose.msra.mxu0 0.0
    %1097 = vmatpush.xpose.msra.mxu0 0.0
    %1098 = vmatpush.xpose.msra.mxu0 0.0
    %1099 = vmatpush.xpose.msra.mxu0 0.0
    %1100 = vmatpush.xpose.msra.mxu0 0.0
    %1101 = vmatpush.xpose.msra.mxu0 0.0
    %1102 = vmatpush.xpose.msra.mxu0 0.0
    %1103 = vmatpush.xpose.msra.mxu0 0.0
    %1104 = vmatpush.xpose.msra.mxu0 0.0
    %1105 = vmatpush.xpose.msra.mxu0 0.0
    %1106 = vmatpush.xpose.msra.mxu0 0.0
    %1107 = vmatpush.xpose.msra.mxu0 0.0
    %1108 = vmatpush.xpose.msra.mxu0 0.0
    %1109 = vmatpush.xpose.msra.mxu0 0.0
    %1110 = vmatpush.xpose.msra.mxu0 0.0
    %v1111 = vand.u32 %v843, 4294901760
    %v1112 = vsub.f32 %v843, %v1111
    %v1113 = vand.u32 %v1112, 4294901760
    %1114 = vmatpush.xpose.msra.mxu0 %v1113
    %v1115 = vand.u32 %v994, 4294901760
    %1116 = vmatmul.f32.gmra.mxu0 %v1115
    %v1117 = vpop.f32.mrf.mxu0
    %v1118 = vadd.f32 %v1094, %v1117
    %1119 = vdwg.mxu0
    %1120 = vmatpush.xpose.msra.mxu0 0.0
    %1121 = vmatpush.xpose.msra.mxu0 0.0
    %1122 = vmatpush.xpose.msra.mxu0 0.0
    %1123 = vmatpush.xpose.msra.mxu0 0.0
    %1124 = vmatpush.xpose.msra.mxu0 0.0
    %1125 = vmatpush.xpose.msra.mxu0 0.0
    %1126 = vmatpush.xpose.msra.mxu0 0.0
    %1127 = vmatpush.xpose.msra.mxu0 0.0
    %1128 = vmatpush.xpose.msra.mxu0 0.0
    %1129 = vmatpush.xpose.msra.mxu0 0.0
    %1130 = vmatpush.xpose.msra.mxu0 0.0
    %1131 = vmatpush.xpose.msra.mxu0 0.0
    %1132 = vmatpush.xpose.msra.mxu0 0.0
    %1133 = vmatpush.xpose.msra.mxu0 0.0
    %1134 = vmatpush.xpose.msra.mxu0 0.0
    %v1135 = vand.u32 %v843, 4294901760
    %1136 = vmatpush.xpose.msra.mxu0 %v1135
    %v1137 = vand.u32 %v994, 4294901760
    %1138 = vmatmul.f32.gmra.mxu0 %v1137
    %v1139 = vpop.f32.mrf.mxu0
    %v1140 = vadd.f32 %v1118, %v1139
    %1141 = vdwg.mxu0
    %v1142 = vld [vmem:[#allocation6 + $0x8] sm:$0xff]
    %v1144 = vsel %vm673, %v1140, 0
    %1146 = vmatpush.msra.mxu0 0.0
    %1147 = vmatpush.msra.mxu0 0.0
    %1148 = vmatpush.msra.mxu0 0.0
    %1149 = vmatpush.msra.mxu0 0.0
    %1150 = vmatpush.msra.mxu0 0.0
    %1151 = vmatpush.msra.mxu0 0.0
    %1152 = vmatpush.msra.mxu0 0.0
    %1153 = vmatpush.msra.mxu0 0.0
    %1154 = vmatpush.msra.mxu0 0.0
    %1155 = vmatpush.msra.mxu0 0.0
    %1156 = vmatpush.msra.mxu0 0.0
    %1157 = vmatpush.msra.mxu0 0.0
    %1158 = vmatpush.msra.mxu0 0.0
    %1159 = vmatpush.msra.mxu0 0.0
    %1160 = vmatpush.msra.mxu0 0.0
    %v1161 = vand.u32 %v1142, 4294901760
    %1162 = vmatpush.msra.mxu0 %v1161
    %v1163 = vand.u32 %v1144, 4294901760
    %v1164 = vsub.f32 %v1144, %v1163
    %v1165 = vand.u32 %v1164, 4294901760
    %v1166 = vsub.f32 %v1164, %v1165
    %v1167 = vand.u32 %v1166, 4294901760
    %1168 = vmatmul.f32.gmra.mxu0 %v1167
    %v1169 = vpop.f32.mrf.mxu0
    %v1170 = vadd.f32 0.0, %v1169
    %1171 = vdwg.mxu0
    %1172 = vmatpush.msra.mxu0 0.0
    %1173 = vmatpush.msra.mxu0 0.0
    %1174 = vmatpush.msra.mxu0 0.0
    %1175 = vmatpush.msra.mxu0 0.0
    %1176 = vmatpush.msra.mxu0 0.0
    %1177 = vmatpush.msra.mxu0 0.0
    %1178 = vmatpush.msra.mxu0 0.0
    %1179 = vmatpush.msra.mxu0 0.0
    %1180 = vmatpush.msra.mxu0 0.0
    %1181 = vmatpush.msra.mxu0 0.0
    %1182 = vmatpush.msra.mxu0 0.0
    %1183 = vmatpush.msra.mxu0 0.0
    %1184 = vmatpush.msra.mxu0 0.0
    %1185 = vmatpush.msra.mxu0 0.0
    %1186 = vmatpush.msra.mxu0 0.0
    %v1187 = vand.u32 %v1142, 4294901760
    %v1188 = vsub.f32 %v1142, %v1187
    %v1189 = vand.u32 %v1188, 4294901760
    %v1190 = vsub.f32 %v1188, %v1189
    %v1191 = vand.u32 %v1190, 4294901760
    %1192 = vmatpush.msra.mxu0 %v1191
    %v1193 = vand.u32 %v1144, 4294901760
    %1194 = vmatmul.f32.gmra.mxu0 %v1193
    %v1195 = vpop.f32.mrf.mxu0
    %v1196 = vadd.f32 %v1170, %v1195
    %1197 = vdwg.mxu0
    %1198 = vmatpush.msra.mxu0 0.0
    %1199 = vmatpush.msra.mxu0 0.0
    %1200 = vmatpush.msra.mxu0 0.0
    %1201 = vmatpush.msra.mxu0 0.0
    %1202 = vmatpush.msra.mxu0 0.0
    %1203 = vmatpush.msra.mxu0 0.0
    %1204 = vmatpush.msra.mxu0 0.0
    %1205 = vmatpush.msra.mxu0 0.0
    %1206 = vmatpush.msra.mxu0 0.0
    %1207 = vmatpush.msra.mxu0 0.0
    %1208 = vmatpush.msra.mxu0 0.0
    %1209 = vmatpush.msra.mxu0 0.0
    %1210 = vmatpush.msra.mxu0 0.0
    %1211 = vmatpush.msra.mxu0 0.0
    %1212 = vmatpush.msra.mxu0 0.0
    %v1213 = vand.u32 %v1142, 4294901760
    %v1214 = vsub.f32 %v1142, %v1213
    %1215 = vmatpush.msra.mxu0 %v1214
    %v1216 = vand.u32 %v1144, 4294901760
    %v1217 = vsub.f32 %v1144, %v1216
    %1218 = vmatmul.f32.gmra.mxu0 %v1217
    %v1219 = vpop.f32.mrf.mxu0
    %v1220 = vadd.f32 %v1196, %v1219
    %1221 = vdwg.mxu0
    %1222 = vmatpush.msra.mxu0 0.0
    %1223 = vmatpush.msra.mxu0 0.0
    %1224 = vmatpush.msra.mxu0 0.0
    %1225 = vmatpush.msra.mxu0 0.0
    %1226 = vmatpush.msra.mxu0 0.0
    %1227 = vmatpush.msra.mxu0 0.0
    %1228 = vmatpush.msra.mxu0 0.0
    %1229 = vmatpush.msra.mxu0 0.0
    %1230 = vmatpush.msra.mxu0 0.0
    %1231 = vmatpush.msra.mxu0 0.0
    %1232 = vmatpush.msra.mxu0 0.0
    %1233 = vmatpush.msra.mxu0 0.0
    %1234 = vmatpush.msra.mxu0 0.0
    %1235 = vmatpush.msra.mxu0 0.0
    %1236 = vmatpush.msra.mxu0 0.0
    %v1237 = vand.u32 %v1142, 4294901760
    %1238 = vmatpush.msra.mxu0 %v1237
    %v1239 = vand.u32 %v1144, 4294901760
    %v1240 = vsub.f32 %v1144, %v1239
    %v1241 = vand.u32 %v1240, 4294901760
    %1242 = vmatmul.f32.gmra.mxu0 %v1241
    %v1243 = vpop.f32.mrf.mxu0
    %v1244 = vadd.f32 %v1220, %v1243
    %1245 = vdwg.mxu0
    %1246 = vmatpush.msra.mxu0 0.0
    %1247 = vmatpush.msra.mxu0 0.0
    %1248 = vmatpush.msra.mxu0 0.0
    %1249 = vmatpush.msra.mxu0 0.0
    %1250 = vmatpush.msra.mxu0 0.0
    %1251 = vmatpush.msra.mxu0 0.0
    %1252 = vmatpush.msra.mxu0 0.0
    %1253 = vmatpush.msra.mxu0 0.0
    %1254 = vmatpush.msra.mxu0 0.0
    %1255 = vmatpush.msra.mxu0 0.0
    %1256 = vmatpush.msra.mxu0 0.0
    %1257 = vmatpush.msra.mxu0 0.0
    %1258 = vmatpush.msra.mxu0 0.0
    %1259 = vmatpush.msra.mxu0 0.0
    %1260 = vmatpush.msra.mxu0 0.0
    %v1261 = vand.u32 %v1142, 4294901760
    %v1262 = vsub.f32 %v1142, %v1261
    %v1263 = vand.u32 %v1262, 4294901760
    %1264 = vmatpush.msra.mxu0 %v1263
    %v1265 = vand.u32 %v1144, 4294901760
    %1266 = vmatmul.f32.gmra.mxu0 %v1265
    %v1267 = vpop.f32.mrf.mxu0
    %v1268 = vadd.f32 %v1244, %v1267
    %1269 = vdwg.mxu0
    %1270 = vmatpush.msra.mxu0 0.0
    %1271 = vmatpush.msra.mxu0 0.0
    %1272 = vmatpush.msra.mxu0 0.0
    %1273 = vmatpush.msra.mxu0 0.0
    %1274 = vmatpush.msra.mxu0 0.0
    %1275 = vmatpush.msra.mxu0 0.0
    %1276 = vmatpush.msra.mxu0 0.0
    %1277 = vmatpush.msra.mxu0 0.0
    %1278 = vmatpush.msra.mxu0 0.0
    %1279 = vmatpush.msra.mxu0 0.0
    %1280 = vmatpush.msra.mxu0 0.0
    %1281 = vmatpush.msra.mxu0 0.0
    %1282 = vmatpush.msra.mxu0 0.0
    %1283 = vmatpush.msra.mxu0 0.0
    %1284 = vmatpush.msra.mxu0 0.0
    %v1285 = vand.u32 %v1142, 4294901760
    %1286 = vmatpush.msra.mxu0 %v1285
    %v1287 = vand.u32 %v1144, 4294901760
    %1288 = vmatmul.f32.gmra.mxu0 %v1287
    %v1289 = vpop.f32.mrf.mxu0
    %v1290 = vadd.f32 %v1268, %v1289
    %1291 = vdwg.mxu0
    %v1293 = vsel %vm673, %v989, 0
    %1295 = vmatpush.msra.mxu0 0.0
    %1296 = vmatpush.msra.mxu0 0.0
    %1297 = vmatpush.msra.mxu0 0.0
    %1298 = vmatpush.msra.mxu0 0.0
    %1299 = vmatpush.msra.mxu0 0.0
    %1300 = vmatpush.msra.mxu0 0.0
    %1301 = vmatpush.msra.mxu0 0.0
    %1302 = vmatpush.msra.mxu0 0.0
    %1303 = vmatpush.msra.mxu0 0.0
    %1304 = vmatpush.msra.mxu0 0.0
    %1305 = vmatpush.msra.mxu0 0.0
    %1306 = vmatpush.msra.mxu0 0.0
    %1307 = vmatpush.msra.mxu0 0.0
    %1308 = vmatpush.msra.mxu0 0.0
    %1309 = vmatpush.msra.mxu0 0.0
    %v1310 = vand.u32 %v991, 4294901760
    %1311 = vmatpush.msra.mxu0 %v1310
    %v1312 = vand.u32 %v1293, 4294901760
    %v1313 = vsub.f32 %v1293, %v1312
    %v1314 = vand.u32 %v1313, 4294901760
    %v1315 = vsub.f32 %v1313, %v1314
    %v1316 = vand.u32 %v1315, 4294901760
    %1317 = vmatmul.f32.gmra.mxu0 %v1316
    %v1318 = vpop.f32.mrf.mxu0
    %v1319 = vadd.f32 %v1290, %v1318
    %1320 = vdwg.mxu0
    %1321 = vmatpush.msra.mxu0 0.0
    %1322 = vmatpush.msra.mxu0 0.0
    %1323 = vmatpush.msra.mxu0 0.0
    %1324 = vmatpush.msra.mxu0 0.0
    %1325 = vmatpush.msra.mxu0 0.0
    %1326 = vmatpush.msra.mxu0 0.0
    %1327 = vmatpush.msra.mxu0 0.0
    %1328 = vmatpush.msra.mxu0 0.0
    %1329 = vmatpush.msra.mxu0 0.0
    %1330 = vmatpush.msra.mxu0 0.0
    %1331 = vmatpush.msra.mxu0 0.0
    %1332 = vmatpush.msra.mxu0 0.0
    %1333 = vmatpush.msra.mxu0 0.0
    %1334 = vmatpush.msra.mxu0 0.0
    %1335 = vmatpush.msra.mxu0 0.0
    %v1336 = vand.u32 %v991, 4294901760
    %v1337 = vsub.f32 %v991, %v1336
    %v1338 = vand.u32 %v1337, 4294901760
    %v1339 = vsub.f32 %v1337, %v1338
    %v1340 = vand.u32 %v1339, 4294901760
    %1341 = vmatpush.msra.mxu0 %v1340
    %v1342 = vand.u32 %v1293, 4294901760
    %1343 = vmatmul.f32.gmra.mxu0 %v1342
    %v1344 = vpop.f32.mrf.mxu0
    %v1345 = vadd.f32 %v1319, %v1344
    %1346 = vdwg.mxu0
    %1347 = vmatpush.msra.mxu0 0.0
    %1348 = vmatpush.msra.mxu0 0.0
    %1349 = vmatpush.msra.mxu0 0.0
    %1350 = vmatpush.msra.mxu0 0.0
    %1351 = vmatpush.msra.mxu0 0.0
    %1352 = vmatpush.msra.mxu0 0.0
    %1353 = vmatpush.msra.mxu0 0.0
    %1354 = vmatpush.msra.mxu0 0.0
    %1355 = vmatpush.msra.mxu0 0.0
    %1356 = vmatpush.msra.mxu0 0.0
    %1357 = vmatpush.msra.mxu0 0.0
    %1358 = vmatpush.msra.mxu0 0.0
    %1359 = vmatpush.msra.mxu0 0.0
    %1360 = vmatpush.msra.mxu0 0.0
    %1361 = vmatpush.msra.mxu0 0.0
    %v1362 = vand.u32 %v991, 4294901760
    %v1363 = vsub.f32 %v991, %v1362
    %1364 = vmatpush.msra.mxu0 %v1363
    %v1365 = vand.u32 %v1293, 4294901760
    %v1366 = vsub.f32 %v1293, %v1365
    %1367 = vmatmul.f32.gmra.mxu0 %v1366
    %v1368 = vpop.f32.mrf.mxu0
    %v1369 = vadd.f32 %v1345, %v1368
    %1370 = vdwg.mxu0
    %1371 = vmatpush.msra.mxu0 0.0
    %1372 = vmatpush.msra.mxu0 0.0
    %1373 = vmatpush.msra.mxu0 0.0
    %1374 = vmatpush.msra.mxu0 0.0
    %1375 = vmatpush.msra.mxu0 0.0
    %1376 = vmatpush.msra.mxu0 0.0
    %1377 = vmatpush.msra.mxu0 0.0
    %1378 = vmatpush.msra.mxu0 0.0
    %1379 = vmatpush.msra.mxu0 0.0
    %1380 = vmatpush.msra.mxu0 0.0
    %1381 = vmatpush.msra.mxu0 0.0
    %1382 = vmatpush.msra.mxu0 0.0
    %1383 = vmatpush.msra.mxu0 0.0
    %1384 = vmatpush.msra.mxu0 0.0
    %1385 = vmatpush.msra.mxu0 0.0
    %v1386 = vand.u32 %v991, 4294901760
    %1387 = vmatpush.msra.mxu0 %v1386
    %v1388 = vand.u32 %v1293, 4294901760
    %v1389 = vsub.f32 %v1293, %v1388
    %v1390 = vand.u32 %v1389, 4294901760
    %1391 = vmatmul.f32.gmra.mxu0 %v1390
    %v1392 = vpop.f32.mrf.mxu0
    %v1393 = vadd.f32 %v1369, %v1392
    %1394 = vdwg.mxu0
    %1395 = vmatpush.msra.mxu0 0.0
    %1396 = vmatpush.msra.mxu0 0.0
    %1397 = vmatpush.msra.mxu0 0.0
    %1398 = vmatpush.msra.mxu0 0.0
    %1399 = vmatpush.msra.mxu0 0.0
    %1400 = vmatpush.msra.mxu0 0.0
    %1401 = vmatpush.msra.mxu0 0.0
    %1402 = vmatpush.msra.mxu0 0.0
    %1403 = vmatpush.msra.mxu0 0.0
    %1404 = vmatpush.msra.mxu0 0.0
    %1405 = vmatpush.msra.mxu0 0.0
    %1406 = vmatpush.msra.mxu0 0.0
    %1407 = vmatpush.msra.mxu0 0.0
    %1408 = vmatpush.msra.mxu0 0.0
    %1409 = vmatpush.msra.mxu0 0.0
    %v1410 = vand.u32 %v991, 4294901760
    %v1411 = vsub.f32 %v991, %v1410
    %v1412 = vand.u32 %v1411, 4294901760
    %1413 = vmatpush.msra.mxu0 %v1412
    %v1414 = vand.u32 %v1293, 4294901760
    %1415 = vmatmul.f32.gmra.mxu0 %v1414
    %v1416 = vpop.f32.mrf.mxu0
    %v1417 = vadd.f32 %v1393, %v1416
    %1418 = vdwg.mxu0
    %1419 = vmatpush.msra.mxu0 0.0
    %1420 = vmatpush.msra.mxu0 0.0
    %1421 = vmatpush.msra.mxu0 0.0
    %1422 = vmatpush.msra.mxu0 0.0
    %1423 = vmatpush.msra.mxu0 0.0
    %1424 = vmatpush.msra.mxu0 0.0
    %1425 = vmatpush.msra.mxu0 0.0
    %1426 = vmatpush.msra.mxu0 0.0
    %1427 = vmatpush.msra.mxu0 0.0
    %1428 = vmatpush.msra.mxu0 0.0
    %1429 = vmatpush.msra.mxu0 0.0
    %1430 = vmatpush.msra.mxu0 0.0
    %1431 = vmatpush.msra.mxu0 0.0
    %1432 = vmatpush.msra.mxu0 0.0
    %1433 = vmatpush.msra.mxu0 0.0
    %v1434 = vand.u32 %v991, 4294901760
    %1435 = vmatpush.msra.mxu0 %v1434
    %v1436 = vand.u32 %v1293, 4294901760
    %1437 = vmatmul.f32.gmra.mxu0 %v1436
    %v1438 = vpop.f32.mrf.mxu0
    %v1439 = vadd.f32 %v1417, %v1438
    %1440 = vdwg.mxu0
    %v1441 = vld [vmem:[#allocation9 + $0x10] sm:$0xff]
    %v1443 = vsel %vm219, %v1441, 0
    %1445 = vmatpush.xpose.msra.mxu0 0.0
    %1446 = vmatpush.xpose.msra.mxu0 0.0
    %1447 = vmatpush.xpose.msra.mxu0 0.0
    %1448 = vmatpush.xpose.msra.mxu0 0.0
    %1449 = vmatpush.xpose.msra.mxu0 0.0
    %1450 = vmatpush.xpose.msra.mxu0 0.0
    %1451 = vmatpush.xpose.msra.mxu0 0.0
    %1452 = vmatpush.xpose.msra.mxu0 0.0
    %1453 = vmatpush.xpose.msra.mxu0 0.0
    %1454 = vmatpush.xpose.msra.mxu0 0.0
    %1455 = vmatpush.xpose.msra.mxu0 0.0
    %1456 = vmatpush.xpose.msra.mxu0 0.0
    %1457 = vmatpush.xpose.msra.mxu0 0.0
    %1458 = vmatpush.xpose.msra.mxu0 0.0
    %1459 = vmatpush.xpose.msra.mxu0 0.0
    %v1460 = vand.u32 %v843, 4294901760
    %1461 = vmatpush.xpose.msra.mxu0 %v1460
    %v1462 = vand.u32 %v1443, 4294901760
    %v1463 = vsub.f32 %v1443, %v1462
    %v1464 = vand.u32 %v1463, 4294901760
    %v1465 = vsub.f32 %v1463, %v1464
    %v1466 = vand.u32 %v1465, 4294901760
    %1467 = vmatmul.f32.gmra.mxu0 %v1466
    %v1468 = vpop.f32.mrf.mxu0
    %v1469 = vadd.f32 0.0, %v1468
    %1470 = vdwg.mxu0
    %1471 = vmatpush.xpose.msra.mxu0 0.0
    %1472 = vmatpush.xpose.msra.mxu0 0.0
    %1473 = vmatpush.xpose.msra.mxu0 0.0
    %1474 = vmatpush.xpose.msra.mxu0 0.0
    %1475 = vmatpush.xpose.msra.mxu0 0.0
    %1476 = vmatpush.xpose.msra.mxu0 0.0
    %1477 = vmatpush.xpose.msra.mxu0 0.0
    %1478 = vmatpush.xpose.msra.mxu0 0.0
    %1479 = vmatpush.xpose.msra.mxu0 0.0
    %1480 = vmatpush.xpose.msra.mxu0 0.0
    %1481 = vmatpush.xpose.msra.mxu0 0.0
    %1482 = vmatpush.xpose.msra.mxu0 0.0
    %1483 = vmatpush.xpose.msra.mxu0 0.0
    %1484 = vmatpush.xpose.msra.mxu0 0.0
    %1485 = vmatpush.xpose.msra.mxu0 0.0
    %v1486 = vand.u32 %v843, 4294901760
    %v1487 = vsub.f32 %v843, %v1486
    %v1488 = vand.u32 %v1487, 4294901760
    %v1489 = vsub.f32 %v1487, %v1488
    %v1490 = vand.u32 %v1489, 4294901760
    %1491 = vmatpush.xpose.msra.mxu0 %v1490
    %v1492 = vand.u32 %v1443, 4294901760
    %1493 = vmatmul.f32.gmra.mxu0 %v1492
    %v1494 = vpop.f32.mrf.mxu0
    %v1495 = vadd.f32 %v1469, %v1494
    %1496 = vdwg.mxu0
    %1497 = vmatpush.xpose.msra.mxu0 0.0
    %1498 = vmatpush.xpose.msra.mxu0 0.0
    %1499 = vmatpush.xpose.msra.mxu0 0.0
    %1500 = vmatpush.xpose.msra.mxu0 0.0
    %1501 = vmatpush.xpose.msra.mxu0 0.0
    %1502 = vmatpush.xpose.msra.mxu0 0.0
    %1503 = vmatpush.xpose.msra.mxu0 0.0
    %1504 = vmatpush.xpose.msra.mxu0 0.0
    %1505 = vmatpush.xpose.msra.mxu0 0.0
    %1506 = vmatpush.xpose.msra.mxu0 0.0
    %1507 = vmatpush.xpose.msra.mxu0 0.0
    %1508 = vmatpush.xpose.msra.mxu0 0.0
    %1509 = vmatpush.xpose.msra.mxu0 0.0
    %1510 = vmatpush.xpose.msra.mxu0 0.0
    %1511 = vmatpush.xpose.msra.mxu0 0.0
    %v1512 = vand.u32 %v843, 4294901760
    %v1513 = vsub.f32 %v843, %v1512
    %1514 = vmatpush.xpose.msra.mxu0 %v1513
    %v1515 = vand.u32 %v1443, 4294901760
    %v1516 = vsub.f32 %v1443, %v1515
    %1517 = vmatmul.f32.gmra.mxu0 %v1516
    %v1518 = vpop.f32.mrf.mxu0
    %v1519 = vadd.f32 %v1495, %v1518
    %1520 = vdwg.mxu0
    %1521 = vmatpush.xpose.msra.mxu0 0.0
    %1522 = vmatpush.xpose.msra.mxu0 0.0
    %1523 = vmatpush.xpose.msra.mxu0 0.0
    %1524 = vmatpush.xpose.msra.mxu0 0.0
    %1525 = vmatpush.xpose.msra.mxu0 0.0
    %1526 = vmatpush.xpose.msra.mxu0 0.0
    %1527 = vmatpush.xpose.msra.mxu0 0.0
    %1528 = vmatpush.xpose.msra.mxu0 0.0
    %1529 = vmatpush.xpose.msra.mxu0 0.0
    %1530 = vmatpush.xpose.msra.mxu0 0.0
    %1531 = vmatpush.xpose.msra.mxu0 0.0
    %1532 = vmatpush.xpose.msra.mxu0 0.0
    %1533 = vmatpush.xpose.msra.mxu0 0.0
    %1534 = vmatpush.xpose.msra.mxu0 0.0
    %1535 = vmatpush.xpose.msra.mxu0 0.0
    %v1536 = vand.u32 %v843, 4294901760
    %1537 = vmatpush.xpose.msra.mxu0 %v1536
    %v1538 = vand.u32 %v1443, 4294901760
    %v1539 = vsub.f32 %v1443, %v1538
    %v1540 = vand.u32 %v1539, 4294901760
    %1541 = vmatmul.f32.gmra.mxu0 %v1540
    %v1542 = vpop.f32.mrf.mxu0
    %v1543 = vadd.f32 %v1519, %v1542
    %1544 = vdwg.mxu0
    %1545 = vmatpush.xpose.msra.mxu0 0.0
    %1546 = vmatpush.xpose.msra.mxu0 0.0
    %1547 = vmatpush.xpose.msra.mxu0 0.0
    %1548 = vmatpush.xpose.msra.mxu0 0.0
    %1549 = vmatpush.xpose.msra.mxu0 0.0
    %1550 = vmatpush.xpose.msra.mxu0 0.0
    %1551 = vmatpush.xpose.msra.mxu0 0.0
    %1552 = vmatpush.xpose.msra.mxu0 0.0
    %1553 = vmatpush.xpose.msra.mxu0 0.0
    %1554 = vmatpush.xpose.msra.mxu0 0.0
    %1555 = vmatpush.xpose.msra.mxu0 0.0
    %1556 = vmatpush.xpose.msra.mxu0 0.0
    %1557 = vmatpush.xpose.msra.mxu0 0.0
    %1558 = vmatpush.xpose.msra.mxu0 0.0
    %1559 = vmatpush.xpose.msra.mxu0 0.0
    %v1560 = vand.u32 %v843, 4294901760
    %v1561 = vsub.f32 %v843, %v1560
    %v1562 = vand.u32 %v1561, 4294901760
    %1563 = vmatpush.xpose.msra.mxu0 %v1562
    %v1564 = vand.u32 %v1443, 4294901760
    %1565 = vmatmul.f32.gmra.mxu0 %v1564
    %v1566 = vpop.f32.mrf.mxu0
    %v1567 = vadd.f32 %v1543, %v1566
    %1568 = vdwg.mxu0
    %1569 = vmatpush.xpose.msra.mxu0 0.0
    %1570 = vmatpush.xpose.msra.mxu0 0.0
    %1571 = vmatpush.xpose.msra.mxu0 0.0
    %1572 = vmatpush.xpose.msra.mxu0 0.0
    %1573 = vmatpush.xpose.msra.mxu0 0.0
    %1574 = vmatpush.xpose.msra.mxu0 0.0
    %1575 = vmatpush.xpose.msra.mxu0 0.0
    %1576 = vmatpush.xpose.msra.mxu0 0.0
    %1577 = vmatpush.xpose.msra.mxu0 0.0
    %1578 = vmatpush.xpose.msra.mxu0 0.0
    %1579 = vmatpush.xpose.msra.mxu0 0.0
    %1580 = vmatpush.xpose.msra.mxu0 0.0
    %1581 = vmatpush.xpose.msra.mxu0 0.0
    %1582 = vmatpush.xpose.msra.mxu0 0.0
    %1583 = vmatpush.xpose.msra.mxu0 0.0
    %v1584 = vand.u32 %v843, 4294901760
    %1585 = vmatpush.xpose.msra.mxu0 %v1584
    %v1586 = vand.u32 %v1443, 4294901760
    %1587 = vmatmul.f32.gmra.mxu0 %v1586
    %v1588 = vpop.f32.mrf.mxu0
    %v1589 = vadd.f32 %v1567, %v1588
    %1590 = vdwg.mxu0
    %v1591 = vld [vmem:[#allocation6 + $0x10] sm:$0xff]
    %v1593 = vsel %vm673, %v1589, 0
    %1595 = vmatpush.msra.mxu0 0.0
    %1596 = vmatpush.msra.mxu0 0.0
    %1597 = vmatpush.msra.mxu0 0.0
    %1598 = vmatpush.msra.mxu0 0.0
    %1599 = vmatpush.msra.mxu0 0.0
    %1600 = vmatpush.msra.mxu0 0.0
    %1601 = vmatpush.msra.mxu0 0.0
    %1602 = vmatpush.msra.mxu0 0.0
    %1603 = vmatpush.msra.mxu0 0.0
    %1604 = vmatpush.msra.mxu0 0.0
    %1605 = vmatpush.msra.mxu0 0.0
    %1606 = vmatpush.msra.mxu0 0.0
    %1607 = vmatpush.msra.mxu0 0.0
    %1608 = vmatpush.msra.mxu0 0.0
    %1609 = vmatpush.msra.mxu0 0.0
    %v1610 = vand.u32 %v1591, 4294901760
    %1611 = vmatpush.msra.mxu0 %v1610
    %v1612 = vand.u32 %v1593, 4294901760
    %v1613 = vsub.f32 %v1593, %v1612
    %v1614 = vand.u32 %v1613, 4294901760
    %v1615 = vsub.f32 %v1613, %v1614
    %v1616 = vand.u32 %v1615, 4294901760
    %1617 = vmatmul.f32.gmra.mxu0 %v1616
    %v1618 = vpop.f32.mrf.mxu0
    %v1619 = vadd.f32 0.0, %v1618
    %1620 = vdwg.mxu0
    %1621 = vmatpush.msra.mxu0 0.0
    %1622 = vmatpush.msra.mxu0 0.0
    %1623 = vmatpush.msra.mxu0 0.0
    %1624 = vmatpush.msra.mxu0 0.0
    %1625 = vmatpush.msra.mxu0 0.0
    %1626 = vmatpush.msra.mxu0 0.0
    %1627 = vmatpush.msra.mxu0 0.0
    %1628 = vmatpush.msra.mxu0 0.0
    %1629 = vmatpush.msra.mxu0 0.0
    %1630 = vmatpush.msra.mxu0 0.0
    %1631 = vmatpush.msra.mxu0 0.0
    %1632 = vmatpush.msra.mxu0 0.0
    %1633 = vmatpush.msra.mxu0 0.0
    %1634 = vmatpush.msra.mxu0 0.0
    %1635 = vmatpush.msra.mxu0 0.0
    %v1636 = vand.u32 %v1591, 4294901760
    %v1637 = vsub.f32 %v1591, %v1636
    %v1638 = vand.u32 %v1637, 4294901760
    %v1639 = vsub.f32 %v1637, %v1638
    %v1640 = vand.u32 %v1639, 4294901760
    %1641 = vmatpush.msra.mxu0 %v1640
    %v1642 = vand.u32 %v1593, 4294901760
    %1643 = vmatmul.f32.gmra.mxu0 %v1642
    %v1644 = vpop.f32.mrf.mxu0
    %v1645 = vadd.f32 %v1619, %v1644
    %1646 = vdwg.mxu0
    %1647 = vmatpush.msra.mxu0 0.0
    %1648 = vmatpush.msra.mxu0 0.0
    %1649 = vmatpush.msra.mxu0 0.0
    %1650 = vmatpush.msra.mxu0 0.0
    %1651 = vmatpush.msra.mxu0 0.0
    %1652 = vmatpush.msra.mxu0 0.0
    %1653 = vmatpush.msra.mxu0 0.0
    %1654 = vmatpush.msra.mxu0 0.0
    %1655 = vmatpush.msra.mxu0 0.0
    %1656 = vmatpush.msra.mxu0 0.0
    %1657 = vmatpush.msra.mxu0 0.0
    %1658 = vmatpush.msra.mxu0 0.0
    %1659 = vmatpush.msra.mxu0 0.0
    %1660 = vmatpush.msra.mxu0 0.0
    %1661 = vmatpush.msra.mxu0 0.0
    %v1662 = vand.u32 %v1591, 4294901760
    %v1663 = vsub.f32 %v1591, %v1662
    %1664 = vmatpush.msra.mxu0 %v1663
    %v1665 = vand.u32 %v1593, 4294901760
    %v1666 = vsub.f32 %v1593, %v1665
    %1667 = vmatmul.f32.gmra.mxu0 %v1666
    %v1668 = vpop.f32.mrf.mxu0
    %v1669 = vadd.f32 %v1645, %v1668
    %1670 = vdwg.mxu0
    %1671 = vmatpush.msra.mxu0 0.0
    %1672 = vmatpush.msra.mxu0 0.0
    %1673 = vmatpush.msra.mxu0 0.0
    %1674 = vmatpush.msra.mxu0 0.0
    %1675 = vmatpush.msra.mxu0 0.0
    %1676 = vmatpush.msra.mxu0 0.0
    %1677 = vmatpush.msra.mxu0 0.0
    %1678 = vmatpush.msra.mxu0 0.0
    %1679 = vmatpush.msra.mxu0 0.0
    %1680 = vmatpush.msra.mxu0 0.0
    %1681 = vmatpush.msra.mxu0 0.0
    %1682 = vmatpush.msra.mxu0 0.0
    %1683 = vmatpush.msra.mxu0 0.0
    %1684 = vmatpush.msra.mxu0 0.0
    %1685 = vmatpush.msra.mxu0 0.0
    %v1686 = vand.u32 %v1591, 4294901760
    %1687 = vmatpush.msra.mxu0 %v1686
    %v1688 = vand.u32 %v1593, 4294901760
    %v1689 = vsub.f32 %v1593, %v1688
    %v1690 = vand.u32 %v1689, 4294901760
    %1691 = vmatmul.f32.gmra.mxu0 %v1690
    %v1692 = vpop.f32.mrf.mxu0
    %v1693 = vadd.f32 %v1669, %v1692
    %1694 = vdwg.mxu0
    %1695 = vmatpush.msra.mxu0 0.0
    %1696 = vmatpush.msra.mxu0 0.0
    %1697 = vmatpush.msra.mxu0 0.0
    %1698 = vmatpush.msra.mxu0 0.0
    %1699 = vmatpush.msra.mxu0 0.0
    %1700 = vmatpush.msra.mxu0 0.0
    %1701 = vmatpush.msra.mxu0 0.0
    %1702 = vmatpush.msra.mxu0 0.0
    %1703 = vmatpush.msra.mxu0 0.0
    %1704 = vmatpush.msra.mxu0 0.0
    %1705 = vmatpush.msra.mxu0 0.0
    %1706 = vmatpush.msra.mxu0 0.0
    %1707 = vmatpush.msra.mxu0 0.0
    %1708 = vmatpush.msra.mxu0 0.0
    %1709 = vmatpush.msra.mxu0 0.0
    %v1710 = vand.u32 %v1591, 4294901760
    %v1711 = vsub.f32 %v1591, %v1710
    %v1712 = vand.u32 %v1711, 4294901760
    %1713 = vmatpush.msra.mxu0 %v1712
    %v1714 = vand.u32 %v1593, 4294901760
    %1715 = vmatmul.f32.gmra.mxu0 %v1714
    %v1716 = vpop.f32.mrf.mxu0
    %v1717 = vadd.f32 %v1693, %v1716
    %1718 = vdwg.mxu0
    %1719 = vmatpush.msra.mxu0 0.0
    %1720 = vmatpush.msra.mxu0 0.0
    %1721 = vmatpush.msra.mxu0 0.0
    %1722 = vmatpush.msra.mxu0 0.0
    %1723 = vmatpush.msra.mxu0 0.0
    %1724 = vmatpush.msra.mxu0 0.0
    %1725 = vmatpush.msra.mxu0 0.0
    %1726 = vmatpush.msra.mxu0 0.0
    %1727 = vmatpush.msra.mxu0 0.0
    %1728 = vmatpush.msra.mxu0 0.0
    %1729 = vmatpush.msra.mxu0 0.0
    %1730 = vmatpush.msra.mxu0 0.0
    %1731 = vmatpush.msra.mxu0 0.0
    %1732 = vmatpush.msra.mxu0 0.0
    %1733 = vmatpush.msra.mxu0 0.0
    %v1734 = vand.u32 %v1591, 4294901760
    %1735 = vmatpush.msra.mxu0 %v1734
    %v1736 = vand.u32 %v1593, 4294901760
    %1737 = vmatmul.f32.gmra.mxu0 %v1736
    %v1738 = vpop.f32.mrf.mxu0
    %v1739 = vadd.f32 %v1717, %v1738
    %1740 = vdwg.mxu0
    %v1741 = vadd.f32 %v1439, %v1739
    %v1742 = vld [vmem:[#allocation9 + $0x18] sm:$0xff]
    %v1744 = vsel %vm219, %v1742, 0
    %1746 = vmatpush.xpose.msra.mxu0 0.0
    %1747 = vmatpush.xpose.msra.mxu0 0.0
    %1748 = vmatpush.xpose.msra.mxu0 0.0
    %1749 = vmatpush.xpose.msra.mxu0 0.0
    %1750 = vmatpush.xpose.msra.mxu0 0.0
    %1751 = vmatpush.xpose.msra.mxu0 0.0
    %1752 = vmatpush.xpose.msra.mxu0 0.0
    %1753 = vmatpush.xpose.msra.mxu0 0.0
    %1754 = vmatpush.xpose.msra.mxu0 0.0
    %1755 = vmatpush.xpose.msra.mxu0 0.0
    %1756 = vmatpush.xpose.msra.mxu0 0.0
    %1757 = vmatpush.xpose.msra.mxu0 0.0
    %1758 = vmatpush.xpose.msra.mxu0 0.0
    %1759 = vmatpush.xpose.msra.mxu0 0.0
    %1760 = vmatpush.xpose.msra.mxu0 0.0
    %v1761 = vand.u32 %v843, 4294901760
    %1762 = vmatpush.xpose.msra.mxu0 %v1761
    %v1763 = vand.u32 %v1744, 4294901760
    %v1764 = vsub.f32 %v1744, %v1763
    %v1765 = vand.u32 %v1764, 4294901760
    %v1766 = vsub.f32 %v1764, %v1765
    %v1767 = vand.u32 %v1766, 4294901760
    %1768 = vmatmul.f32.gmra.mxu0 %v1767
    %v1769 = vpop.f32.mrf.mxu0
    %v1770 = vadd.f32 0.0, %v1769
    %1771 = vdwg.mxu0
    %1772 = vmatpush.xpose.msra.mxu0 0.0
    %1773 = vmatpush.xpose.msra.mxu0 0.0
    %1774 = vmatpush.xpose.msra.mxu0 0.0
    %1775 = vmatpush.xpose.msra.mxu0 0.0
    %1776 = vmatpush.xpose.msra.mxu0 0.0
    %1777 = vmatpush.xpose.msra.mxu0 0.0
    %1778 = vmatpush.xpose.msra.mxu0 0.0
    %1779 = vmatpush.xpose.msra.mxu0 0.0
    %1780 = vmatpush.xpose.msra.mxu0 0.0
    %1781 = vmatpush.xpose.msra.mxu0 0.0
    %1782 = vmatpush.xpose.msra.mxu0 0.0
    %1783 = vmatpush.xpose.msra.mxu0 0.0
    %1784 = vmatpush.xpose.msra.mxu0 0.0
    %1785 = vmatpush.xpose.msra.mxu0 0.0
    %1786 = vmatpush.xpose.msra.mxu0 0.0
    %v1787 = vand.u32 %v843, 4294901760
    %v1788 = vsub.f32 %v843, %v1787
    %v1789 = vand.u32 %v1788, 4294901760
    %v1790 = vsub.f32 %v1788, %v1789
    %v1791 = vand.u32 %v1790, 4294901760
    %1792 = vmatpush.xpose.msra.mxu0 %v1791
    %v1793 = vand.u32 %v1744, 4294901760
    %1794 = vmatmul.f32.gmra.mxu0 %v1793
    %v1795 = vpop.f32.mrf.mxu0
    %v1796 = vadd.f32 %v1770, %v1795
    %1797 = vdwg.mxu0
    %1798 = vmatpush.xpose.msra.mxu0 0.0
    %1799 = vmatpush.xpose.msra.mxu0 0.0
    %1800 = vmatpush.xpose.msra.mxu0 0.0
    %1801 = vmatpush.xpose.msra.mxu0 0.0
    %1802 = vmatpush.xpose.msra.mxu0 0.0
    %1803 = vmatpush.xpose.msra.mxu0 0.0
    %1804 = vmatpush.xpose.msra.mxu0 0.0
    %1805 = vmatpush.xpose.msra.mxu0 0.0
    %1806 = vmatpush.xpose.msra.mxu0 0.0
    %1807 = vmatpush.xpose.msra.mxu0 0.0
    %1808 = vmatpush.xpose.msra.mxu0 0.0
    %1809 = vmatpush.xpose.msra.mxu0 0.0
    %1810 = vmatpush.xpose.msra.mxu0 0.0
    %1811 = vmatpush.xpose.msra.mxu0 0.0
    %1812 = vmatpush.xpose.msra.mxu0 0.0
    %v1813 = vand.u32 %v843, 4294901760
    %v1814 = vsub.f32 %v843, %v1813
    %1815 = vmatpush.xpose.msra.mxu0 %v1814
    %v1816 = vand.u32 %v1744, 4294901760
    %v1817 = vsub.f32 %v1744, %v1816
    %1818 = vmatmul.f32.gmra.mxu0 %v1817
    %v1819 = vpop.f32.mrf.mxu0
    %v1820 = vadd.f32 %v1796, %v1819
    %1821 = vdwg.mxu0
    %1822 = vmatpush.xpose.msra.mxu0 0.0
    %1823 = vmatpush.xpose.msra.mxu0 0.0
    %1824 = vmatpush.xpose.msra.mxu0 0.0
    %1825 = vmatpush.xpose.msra.mxu0 0.0
    %1826 = vmatpush.xpose.msra.mxu0 0.0
    %1827 = vmatpush.xpose.msra.mxu0 0.0
    %1828 = vmatpush.xpose.msra.mxu0 0.0
    %1829 = vmatpush.xpose.msra.mxu0 0.0
    %1830 = vmatpush.xpose.msra.mxu0 0.0
    %1831 = vmatpush.xpose.msra.mxu0 0.0
    %1832 = vmatpush.xpose.msra.mxu0 0.0
    %1833 = vmatpush.xpose.msra.mxu0 0.0
    %1834 = vmatpush.xpose.msra.mxu0 0.0
    %1835 = vmatpush.xpose.msra.mxu0 0.0
    %1836 = vmatpush.xpose.msra.mxu0 0.0
    %v1837 = vand.u32 %v843, 4294901760
    %1838 = vmatpush.xpose.msra.mxu0 %v1837
    %v1839 = vand.u32 %v1744, 4294901760
    %v1840 = vsub.f32 %v1744, %v1839
    %v1841 = vand.u32 %v1840, 4294901760
    %1842 = vmatmul.f32.gmra.mxu0 %v1841
    %v1843 = vpop.f32.mrf.mxu0
    %v1844 = vadd.f32 %v1820, %v1843
    %1845 = vdwg.mxu0
    %1846 = vmatpush.xpose.msra.mxu0 0.0
    %1847 = vmatpush.xpose.msra.mxu0 0.0
    %1848 = vmatpush.xpose.msra.mxu0 0.0
    %1849 = vmatpush.xpose.msra.mxu0 0.0
    %1850 = vmatpush.xpose.msra.mxu0 0.0
    %1851 = vmatpush.xpose.msra.mxu0 0.0
    %1852 = vmatpush.xpose.msra.mxu0 0.0
    %1853 = vmatpush.xpose.msra.mxu0 0.0
    %1854 = vmatpush.xpose.msra.mxu0 0.0
    %1855 = vmatpush.xpose.msra.mxu0 0.0
    %1856 = vmatpush.xpose.msra.mxu0 0.0
    %1857 = vmatpush.xpose.msra.mxu0 0.0
    %1858 = vmatpush.xpose.msra.mxu0 0.0
    %1859 = vmatpush.xpose.msra.mxu0 0.0
    %1860 = vmatpush.xpose.msra.mxu0 0.0
    %v1861 = vand.u32 %v843, 4294901760
    %v1862 = vsub.f32 %v843, %v1861
    %v1863 = vand.u32 %v1862, 4294901760
    %1864 = vmatpush.xpose.msra.mxu0 %v1863
    %v1865 = vand.u32 %v1744, 4294901760
    %1866 = vmatmul.f32.gmra.mxu0 %v1865
    %v1867 = vpop.f32.mrf.mxu0
    %v1868 = vadd.f32 %v1844, %v1867
    %1869 = vdwg.mxu0
    %1870 = vmatpush.xpose.msra.mxu0 0.0
    %1871 = vmatpush.xpose.msra.mxu0 0.0
    %1872 = vmatpush.xpose.msra.mxu0 0.0
    %1873 = vmatpush.xpose.msra.mxu0 0.0
    %1874 = vmatpush.xpose.msra.mxu0 0.0
    %1875 = vmatpush.xpose.msra.mxu0 0.0
    %1876 = vmatpush.xpose.msra.mxu0 0.0
    %1877 = vmatpush.xpose.msra.mxu0 0.0
    %1878 = vmatpush.xpose.msra.mxu0 0.0
    %1879 = vmatpush.xpose.msra.mxu0 0.0
    %1880 = vmatpush.xpose.msra.mxu0 0.0
    %1881 = vmatpush.xpose.msra.mxu0 0.0
    %1882 = vmatpush.xpose.msra.mxu0 0.0
    %1883 = vmatpush.xpose.msra.mxu0 0.0
    %1884 = vmatpush.xpose.msra.mxu0 0.0
    %v1885 = vand.u32 %v843, 4294901760
    %1886 = vmatpush.xpose.msra.mxu0 %v1885
    %v1887 = vand.u32 %v1744, 4294901760
    %1888 = vmatmul.f32.gmra.mxu0 %v1887
    %v1889 = vpop.f32.mrf.mxu0
    %v1890 = vadd.f32 %v1868, %v1889
    %1891 = vdwg.mxu0
    %v1892 = vld [vmem:[#allocation6 + $0x18] sm:$0xff]
    %v1894 = vsel %vm673, %v1890, 0
    %1896 = vmatpush.msra.mxu0 0.0
    %1897 = vmatpush.msra.mxu0 0.0
    %1898 = vmatpush.msra.mxu0 0.0
    %1899 = vmatpush.msra.mxu0 0.0
    %1900 = vmatpush.msra.mxu0 0.0
    %1901 = vmatpush.msra.mxu0 0.0
    %1902 = vmatpush.msra.mxu0 0.0
    %1903 = vmatpush.msra.mxu0 0.0
    %1904 = vmatpush.msra.mxu0 0.0
    %1905 = vmatpush.msra.mxu0 0.0
    %1906 = vmatpush.msra.mxu0 0.0
    %1907 = vmatpush.msra.mxu0 0.0
    %1908 = vmatpush.msra.mxu0 0.0
    %1909 = vmatpush.msra.mxu0 0.0
    %1910 = vmatpush.msra.mxu0 0.0
    %v1911 = vand.u32 %v1892, 4294901760
    %1912 = vmatpush.msra.mxu0 %v1911
    %v1913 = vand.u32 %v1894, 4294901760
    %v1914 = vsub.f32 %v1894, %v1913
    %v1915 = vand.u32 %v1914, 4294901760
    %v1916 = vsub.f32 %v1914, %v1915
    %v1917 = vand.u32 %v1916, 4294901760
    %1918 = vmatmul.f32.gmra.mxu0 %v1917
    %v1919 = vpop.f32.mrf.mxu0
    %v1920 = vadd.f32 0.0, %v1919
    %1921 = vdwg.mxu0
    %1922 = vmatpush.msra.mxu0 0.0
    %1923 = vmatpush.msra.mxu0 0.0
    %1924 = vmatpush.msra.mxu0 0.0
    %1925 = vmatpush.msra.mxu0 0.0
    %1926 = vmatpush.msra.mxu0 0.0
    %1927 = vmatpush.msra.mxu0 0.0
    %1928 = vmatpush.msra.mxu0 0.0
    %1929 = vmatpush.msra.mxu0 0.0
    %1930 = vmatpush.msra.mxu0 0.0
    %1931 = vmatpush.msra.mxu0 0.0
    %1932 = vmatpush.msra.mxu0 0.0
    %1933 = vmatpush.msra.mxu0 0.0
    %1934 = vmatpush.msra.mxu0 0.0
    %1935 = vmatpush.msra.mxu0 0.0
    %1936 = vmatpush.msra.mxu0 0.0
    %v1937 = vand.u32 %v1892, 4294901760
    %v1938 = vsub.f32 %v1892, %v1937
    %v1939 = vand.u32 %v1938, 4294901760
    %v1940 = vsub.f32 %v1938, %v1939
    %v1941 = vand.u32 %v1940, 4294901760
    %1942 = vmatpush.msra.mxu0 %v1941
    %v1943 = vand.u32 %v1894, 4294901760
    %1944 = vmatmul.f32.gmra.mxu0 %v1943
    %v1945 = vpop.f32.mrf.mxu0
    %v1946 = vadd.f32 %v1920, %v1945
    %1947 = vdwg.mxu0
    %1948 = vmatpush.msra.mxu0 0.0
    %1949 = vmatpush.msra.mxu0 0.0
    %1950 = vmatpush.msra.mxu0 0.0
    %1951 = vmatpush.msra.mxu0 0.0
    %1952 = vmatpush.msra.mxu0 0.0
    %1953 = vmatpush.msra.mxu0 0.0
    %1954 = vmatpush.msra.mxu0 0.0
    %1955 = vmatpush.msra.mxu0 0.0
    %1956 = vmatpush.msra.mxu0 0.0
    %1957 = vmatpush.msra.mxu0 0.0
    %1958 = vmatpush.msra.mxu0 0.0
    %1959 = vmatpush.msra.mxu0 0.0
    %1960 = vmatpush.msra.mxu0 0.0
    %1961 = vmatpush.msra.mxu0 0.0
    %1962 = vmatpush.msra.mxu0 0.0
    %v1963 = vand.u32 %v1892, 4294901760
    %v1964 = vsub.f32 %v1892, %v1963
    %1965 = vmatpush.msra.mxu0 %v1964
    %v1966 = vand.u32 %v1894, 4294901760
    %v1967 = vsub.f32 %v1894, %v1966
    %1968 = vmatmul.f32.gmra.mxu0 %v1967
    %v1969 = vpop.f32.mrf.mxu0
    %v1970 = vadd.f32 %v1946, %v1969
    %1971 = vdwg.mxu0
    %1972 = vmatpush.msra.mxu0 0.0
    %1973 = vmatpush.msra.mxu0 0.0
    %1974 = vmatpush.msra.mxu0 0.0
    %1975 = vmatpush.msra.mxu0 0.0
    %1976 = vmatpush.msra.mxu0 0.0
    %1977 = vmatpush.msra.mxu0 0.0
    %1978 = vmatpush.msra.mxu0 0.0
    %1979 = vmatpush.msra.mxu0 0.0
    %1980 = vmatpush.msra.mxu0 0.0
    %1981 = vmatpush.msra.mxu0 0.0
    %1982 = vmatpush.msra.mxu0 0.0
    %1983 = vmatpush.msra.mxu0 0.0
    %1984 = vmatpush.msra.mxu0 0.0
    %1985 = vmatpush.msra.mxu0 0.0
    %1986 = vmatpush.msra.mxu0 0.0
    %v1987 = vand.u32 %v1892, 4294901760
    %1988 = vmatpush.msra.mxu0 %v1987
    %v1989 = vand.u32 %v1894, 4294901760
    %v1990 = vsub.f32 %v1894, %v1989
    %v1991 = vand.u32 %v1990, 4294901760
    %1992 = vmatmul.f32.gmra.mxu0 %v1991
    %v1993 = vpop.f32.mrf.mxu0
    %v1994 = vadd.f32 %v1970, %v1993
    %1995 = vdwg.mxu0
    %1996 = vmatpush.msra.mxu0 0.0
    %1997 = vmatpush.msra.mxu0 0.0
    %1998 = vmatpush.msra.mxu0 0.0
    %1999 = vmatpush.msra.mxu0 0.0
    %2000 = vmatpush.msra.mxu0 0.0
    %2001 = vmatpush.msra.mxu0 0.0
    %2002 = vmatpush.msra.mxu0 0.0
    %2003 = vmatpush.msra.mxu0 0.0
    %2004 = vmatpush.msra.mxu0 0.0
    %2005 = vmatpush.msra.mxu0 0.0
    %2006 = vmatpush.msra.mxu0 0.0
    %2007 = vmatpush.msra.mxu0 0.0
    %2008 = vmatpush.msra.mxu0 0.0
    %2009 = vmatpush.msra.mxu0 0.0
    %2010 = vmatpush.msra.mxu0 0.0
    %v2011 = vand.u32 %v1892, 4294901760
    %v2012 = vsub.f32 %v1892, %v2011
    %v2013 = vand.u32 %v2012, 4294901760
    %2014 = vmatpush.msra.mxu0 %v2013
    %v2015 = vand.u32 %v1894, 4294901760
    %2016 = vmatmul.f32.gmra.mxu0 %v2015
    %v2017 = vpop.f32.mrf.mxu0
    %v2018 = vadd.f32 %v1994, %v2017
    %2019 = vdwg.mxu0
    %2020 = vmatpush.msra.mxu0 0.0
    %2021 = vmatpush.msra.mxu0 0.0
    %2022 = vmatpush.msra.mxu0 0.0
    %2023 = vmatpush.msra.mxu0 0.0
    %2024 = vmatpush.msra.mxu0 0.0
    %2025 = vmatpush.msra.mxu0 0.0
    %2026 = vmatpush.msra.mxu0 0.0
    %2027 = vmatpush.msra.mxu0 0.0
    %2028 = vmatpush.msra.mxu0 0.0
    %2029 = vmatpush.msra.mxu0 0.0
    %2030 = vmatpush.msra.mxu0 0.0
    %2031 = vmatpush.msra.mxu0 0.0
    %2032 = vmatpush.msra.mxu0 0.0
    %2033 = vmatpush.msra.mxu0 0.0
    %2034 = vmatpush.msra.mxu0 0.0
    %v2035 = vand.u32 %v1892, 4294901760
    %2036 = vmatpush.msra.mxu0 %v2035
    %v2037 = vand.u32 %v1894, 4294901760
    %2038 = vmatmul.f32.gmra.mxu0 %v2037
    %v2039 = vpop.f32.mrf.mxu0
    %v2040 = vadd.f32 %v2018, %v2039
    %2041 = vdwg.mxu0
    %v2042 = vadd.f32 %v1741, %v2040
    %2043 = vst.msk [vmem:[#allocation2] sm:$0xff] %vm219, %v2042
    %2045 = vrot.lane.b32.xlu0 %v517, 96
    %v2046 = vpop.permute.xlu0 %2045
    %v2047 = vsel %vm219, %v517, 0
    %v2049 = vsel %vm219, %v2046, 0
    %2051 = vmatpush.xpose.msra.mxu0 0.0
    %2052 = vmatpush.xpose.msra.mxu0 0.0
    %2053 = vmatpush.xpose.msra.mxu0 0.0
    %2054 = vmatpush.xpose.msra.mxu0 0.0
    %2055 = vmatpush.xpose.msra.mxu0 0.0
    %2056 = vmatpush.xpose.msra.mxu0 0.0
    %2057 = vmatpush.xpose.msra.mxu0 0.0
    %2058 = vmatpush.xpose.msra.mxu0 0.0
    %2059 = vmatpush.xpose.msra.mxu0 0.0
    %2060 = vmatpush.xpose.msra.mxu0 0.0
    %2061 = vmatpush.xpose.msra.mxu0 0.0
    %2062 = vmatpush.xpose.msra.mxu0 0.0
    %2063 = vmatpush.xpose.msra.mxu0 0.0
    %2064 = vmatpush.xpose.msra.mxu0 0.0
    %2065 = vmatpush.xpose.msra.mxu0 0.0
    %v2066 = vand.u32 %v2049, 4294901760
    %2067 = vmatpush.xpose.msra.mxu0 %v2066
    %v2068 = vand.u32 %v2047, 4294901760
    %v2069 = vsub.f32 %v2047, %v2068
    %v2070 = vand.u32 %v2069, 4294901760
    %v2071 = vsub.f32 %v2069, %v2070
    %v2072 = vand.u32 %v2071, 4294901760
    %2073 = vmatmul.f32.gmra.mxu0 %v2072
    %v2074 = vpop.f32.mrf.mxu0
    %v2075 = vadd.f32 0.0, %v2074
    %2076 = vdwg.mxu0
    %2077 = vmatpush.xpose.msra.mxu0 0.0
    %2078 = vmatpush.xpose.msra.mxu0 0.0
    %2079 = vmatpush.xpose.msra.mxu0 0.0
    %2080 = vmatpush.xpose.msra.mxu0 0.0
    %2081 = vmatpush.xpose.msra.mxu0 0.0
    %2082 = vmatpush.xpose.msra.mxu0 0.0
    %2083 = vmatpush.xpose.msra.mxu0 0.0
    %2084 = vmatpush.xpose.msra.mxu0 0.0
    %2085 = vmatpush.xpose.msra.mxu0 0.0
    %2086 = vmatpush.xpose.msra.mxu0 0.0
    %2087 = vmatpush.xpose.msra.mxu0 0.0
    %2088 = vmatpush.xpose.msra.mxu0 0.0
    %2089 = vmatpush.xpose.msra.mxu0 0.0
    %2090 = vmatpush.xpose.msra.mxu0 0.0
    %2091 = vmatpush.xpose.msra.mxu0 0.0
    %v2092 = vand.u32 %v2049, 4294901760
    %v2093 = vsub.f32 %v2049, %v2092
    %v2094 = vand.u32 %v2093, 4294901760
    %v2095 = vsub.f32 %v2093, %v2094
    %v2096 = vand.u32 %v2095, 4294901760
    %2097 = vmatpush.xpose.msra.mxu0 %v2096
    %v2098 = vand.u32 %v2047, 4294901760
    %2099 = vmatmul.f32.gmra.mxu0 %v2098
    %v2100 = vpop.f32.mrf.mxu0
    %v2101 = vadd.f32 %v2075, %v2100
    %2102 = vdwg.mxu0
    %2103 = vmatpush.xpose.msra.mxu0 0.0
    %2104 = vmatpush.xpose.msra.mxu0 0.0
    %2105 = vmatpush.xpose.msra.mxu0 0.0
    %2106 = vmatpush.xpose.msra.mxu0 0.0
    %2107 = vmatpush.xpose.msra.mxu0 0.0
    %2108 = vmatpush.xpose.msra.mxu0 0.0
    %2109 = vmatpush.xpose.msra.mxu0 0.0
    %2110 = vmatpush.xpose.msra.mxu0 0.0
    %2111 = vmatpush.xpose.msra.mxu0 0.0
    %2112 = vmatpush.xpose.msra.mxu0 0.0
    %2113 = vmatpush.xpose.msra.mxu0 0.0
    %2114 = vmatpush.xpose.msra.mxu0 0.0
    %2115 = vmatpush.xpose.msra.mxu0 0.0
    %2116 = vmatpush.xpose.msra.mxu0 0.0
    %2117 = vmatpush.xpose.msra.mxu0 0.0
    %v2118 = vand.u32 %v2049, 4294901760
    %v2119 = vsub.f32 %v2049, %v2118
    %2120 = vmatpush.xpose.msra.mxu0 %v2119
    %v2121 = vand.u32 %v2047, 4294901760
    %v2122 = vsub.f32 %v2047, %v2121
    %2123 = vmatmul.f32.gmra.mxu0 %v2122
    %v2124 = vpop.f32.mrf.mxu0
    %v2125 = vadd.f32 %v2101, %v2124
    %2126 = vdwg.mxu0
    %2127 = vmatpush.xpose.msra.mxu0 0.0
    %2128 = vmatpush.xpose.msra.mxu0 0.0
    %2129 = vmatpush.xpose.msra.mxu0 0.0
    %2130 = vmatpush.xpose.msra.mxu0 0.0
    %2131 = vmatpush.xpose.msra.mxu0 0.0
    %2132 = vmatpush.xpose.msra.mxu0 0.0
    %2133 = vmatpush.xpose.msra.mxu0 0.0
    %2134 = vmatpush.xpose.msra.mxu0 0.0
    %2135 = vmatpush.xpose.msra.mxu0 0.0
    %2136 = vmatpush.xpose.msra.mxu0 0.0
    %2137 = vmatpush.xpose.msra.mxu0 0.0
    %2138 = vmatpush.xpose.msra.mxu0 0.0
    %2139 = vmatpush.xpose.msra.mxu0 0.0
    %2140 = vmatpush.xpose.msra.mxu0 0.0
    %2141 = vmatpush.xpose.msra.mxu0 0.0
    %v2142 = vand.u32 %v2049, 4294901760
    %2143 = vmatpush.xpose.msra.mxu0 %v2142
    %v2144 = vand.u32 %v2047, 4294901760
    %v2145 = vsub.f32 %v2047, %v2144
    %v2146 = vand.u32 %v2145, 4294901760
    %2147 = vmatmul.f32.gmra.mxu0 %v2146
    %v2148 = vpop.f32.mrf.mxu0
    %v2149 = vadd.f32 %v2125, %v2148
    %2150 = vdwg.mxu0
    %2151 = vmatpush.xpose.msra.mxu0 0.0
    %2152 = vmatpush.xpose.msra.mxu0 0.0
    %2153 = vmatpush.xpose.msra.mxu0 0.0
    %2154 = vmatpush.xpose.msra.mxu0 0.0
    %2155 = vmatpush.xpose.msra.mxu0 0.0
    %2156 = vmatpush.xpose.msra.mxu0 0.0
    %2157 = vmatpush.xpose.msra.mxu0 0.0
    %2158 = vmatpush.xpose.msra.mxu0 0.0
    %2159 = vmatpush.xpose.msra.mxu0 0.0
    %2160 = vmatpush.xpose.msra.mxu0 0.0
    %2161 = vmatpush.xpose.msra.mxu0 0.0
    %2162 = vmatpush.xpose.msra.mxu0 0.0
    %2163 = vmatpush.xpose.msra.mxu0 0.0
    %2164 = vmatpush.xpose.msra.mxu0 0.0
    %2165 = vmatpush.xpose.msra.mxu0 0.0
    %v2166 = vand.u32 %v2049, 4294901760
    %v2167 = vsub.f32 %v2049, %v2166
    %v2168 = vand.u32 %v2167, 4294901760
    %2169 = vmatpush.xpose.msra.mxu0 %v2168
    %v2170 = vand.u32 %v2047, 4294901760
    %2171 = vmatmul.f32.gmra.mxu0 %v2170
    %v2172 = vpop.f32.mrf.mxu0
    %v2173 = vadd.f32 %v2149, %v2172
    %2174 = vdwg.mxu0
    %2175 = vmatpush.xpose.msra.mxu0 0.0
    %2176 = vmatpush.xpose.msra.mxu0 0.0
    %2177 = vmatpush.xpose.msra.mxu0 0.0
    %2178 = vmatpush.xpose.msra.mxu0 0.0
    %2179 = vmatpush.xpose.msra.mxu0 0.0
    %2180 = vmatpush.xpose.msra.mxu0 0.0
    %2181 = vmatpush.xpose.msra.mxu0 0.0
    %2182 = vmatpush.xpose.msra.mxu0 0.0
    %2183 = vmatpush.xpose.msra.mxu0 0.0
    %2184 = vmatpush.xpose.msra.mxu0 0.0
    %2185 = vmatpush.xpose.msra.mxu0 0.0
    %2186 = vmatpush.xpose.msra.mxu0 0.0
    %2187 = vmatpush.xpose.msra.mxu0 0.0
    %2188 = vmatpush.xpose.msra.mxu0 0.0
    %2189 = vmatpush.xpose.msra.mxu0 0.0
    %v2190 = vand.u32 %v2049, 4294901760
    %2191 = vmatpush.xpose.msra.mxu0 %v2190
    %v2192 = vand.u32 %v2047, 4294901760
    %2193 = vmatmul.f32.gmra.mxu0 %v2192
    %v2194 = vpop.f32.mrf.mxu0
    %v2195 = vadd.f32 %v2173, %v2194
    %2196 = vdwg.mxu0
    %v2197 = vmul.f32 %v2195, 0.17677669
    %s2198 = scalar_lea.vmem [#allocation21], 8
    %2199 = vst.msk [vmem:[%s2198] sm:$0xff] %vm673, %v2197
    %v2200 = vsel %vm673, %v2197, -inf
    %2201 = vmax.xlane.f32.xlu0 %v2200
    %v2202 = vpop.xlane.xlu0 %2201
    %v2203 = vsub.f32 %v2197, %v2202
    %v2204 = vmul.f32 %v2203, 1.442695
    %v2205 = vpow.pop %v2204
    %v2206 = vsel %vm673, %v2205, 0.0
    %2207 = vadd.xlane.f32.xlu0 %v2206
    %v2208 = vpop.xlane.xlu0 %2207
    %v2209 = vrcp.pop %v2208
    %v2210 = vmul.f32 %v2205, %v2209
    %2211 = vrot.lane.b32.xlu0 %v517, 64
    %v2212 = vpop.permute.xlu0 %2211
    %v2215 = vsel %vm673, %v2210, 0
    %2217 = vmatpush.msra.mxu0 0.0
    %2218 = vmatpush.msra.mxu0 0.0
    %2219 = vmatpush.msra.mxu0 0.0
    %2220 = vmatpush.msra.mxu0 0.0
    %2221 = vmatpush.msra.mxu0 0.0
    %2222 = vmatpush.msra.mxu0 0.0
    %2223 = vmatpush.msra.mxu0 0.0
    %2224 = vmatpush.msra.mxu0 0.0
    %2225 = vmatpush.msra.mxu0 0.0
    %2226 = vmatpush.msra.mxu0 0.0
    %2227 = vmatpush.msra.mxu0 0.0
    %2228 = vmatpush.msra.mxu0 0.0
    %2229 = vmatpush.msra.mxu0 0.0
    %2230 = vmatpush.msra.mxu0 0.0
    %2231 = vmatpush.msra.mxu0 0.0
    %v2232 = vand.u32 %v2212, 4294901760
    %2233 = vmatpush.msra.mxu0 %v2232
    %v2234 = vand.u32 %v2215, 4294901760
    %v2235 = vsub.f32 %v2215, %v2234
    %v2236 = vand.u32 %v2235, 4294901760
    %v2237 = vsub.f32 %v2235, %v2236
    %v2238 = vand.u32 %v2237, 4294901760
    %2239 = vmatmul.f32.gmra.mxu0 %v2238
    %v2240 = vpop.f32.mrf.mxu0
    %v2241 = vadd.f32 0.0, %v2240
    %2242 = vdwg.mxu0
    %2243 = vmatpush.msra.mxu0 0.0
    %2244 = vmatpush.msra.mxu0 0.0
    %2245 = vmatpush.msra.mxu0 0.0
    %2246 = vmatpush.msra.mxu0 0.0
    %2247 = vmatpush.msra.mxu0 0.0
    %2248 = vmatpush.msra.mxu0 0.0
    %2249 = vmatpush.msra.mxu0 0.0
    %2250 = vmatpush.msra.mxu0 0.0
    %2251 = vmatpush.msra.mxu0 0.0
    %2252 = vmatpush.msra.mxu0 0.0
    %2253 = vmatpush.msra.mxu0 0.0
    %2254 = vmatpush.msra.mxu0 0.0
    %2255 = vmatpush.msra.mxu0 0.0
    %2256 = vmatpush.msra.mxu0 0.0
    %2257 = vmatpush.msra.mxu0 0.0
    %v2258 = vand.u32 %v2212, 4294901760
    %v2259 = vsub.f32 %v2212, %v2258
    %v2260 = vand.u32 %v2259, 4294901760
    %v2261 = vsub.f32 %v2259, %v2260
    %v2262 = vand.u32 %v2261, 4294901760
    %2263 = vmatpush.msra.mxu0 %v2262
    %v2264 = vand.u32 %v2215, 4294901760
    %2265 = vmatmul.f32.gmra.mxu0 %v2264
    %v2266 = vpop.f32.mrf.mxu0
    %v2267 = vadd.f32 %v2241, %v2266
    %2268 = vdwg.mxu0
    %2269 = vmatpush.msra.mxu0 0.0
    %2270 = vmatpush.msra.mxu0 0.0
    %2271 = vmatpush.msra.mxu0 0.0
    %2272 = vmatpush.msra.mxu0 0.0
    %2273 = vmatpush.msra.mxu0 0.0
    %2274 = vmatpush.msra.mxu0 0.0
    %2275 = vmatpush.msra.mxu0 0.0
    %2276 = vmatpush.msra.mxu0 0.0
    %2277 = vmatpush.msra.mxu0 0.0
    %2278 = vmatpush.msra.mxu0 0.0
    %2279 = vmatpush.msra.mxu0 0.0
    %2280 = vmatpush.msra.mxu0 0.0
    %2281 = vmatpush.msra.mxu0 0.0
    %2282 = vmatpush.msra.mxu0 0.0
    %2283 = vmatpush.msra.mxu0 0.0
    %v2284 = vand.u32 %v2212, 4294901760
    %v2285 = vsub.f32 %v2212, %v2284
    %2286 = vmatpush.msra.mxu0 %v2285
    %v2287 = vand.u32 %v2215, 4294901760
    %v2288 = vsub.f32 %v2215, %v2287
    %2289 = vmatmul.f32.gmra.mxu0 %v2288
    %v2290 = vpop.f32.mrf.mxu0
    %v2291 = vadd.f32 %v2267, %v2290
    %2292 = vdwg.mxu0
    %2293 = vmatpush.msra.mxu0 0.0
    %2294 = vmatpush.msra.mxu0 0.0
    %2295 = vmatpush.msra.mxu0 0.0
    %2296 = vmatpush.msra.mxu0 0.0
    %2297 = vmatpush.msra.mxu0 0.0
    %2298 = vmatpush.msra.mxu0 0.0
    %2299 = vmatpush.msra.mxu0 0.0
    %2300 = vmatpush.msra.mxu0 0.0
    %2301 = vmatpush.msra.mxu0 0.0
    %2302 = vmatpush.msra.mxu0 0.0
    %2303 = vmatpush.msra.mxu0 0.0
    %2304 = vmatpush.msra.mxu0 0.0
    %2305 = vmatpush.msra.mxu0 0.0
    %2306 = vmatpush.msra.mxu0 0.0
    %2307 = vmatpush.msra.mxu0 0.0
    %v2308 = vand.u32 %v2212, 4294901760
    %2309 = vmatpush.msra.mxu0 %v2308
    %v2310 = vand.u32 %v2215, 4294901760
    %v2311 = vsub.f32 %v2215, %v2310
    %v2312 = vand.u32 %v2311, 4294901760
    %2313 = vmatmul.f32.gmra.mxu0 %v2312
    %v2314 = vpop.f32.mrf.mxu0
    %v2315 = vadd.f32 %v2291, %v2314
    %2316 = vdwg.mxu0
    %2317 = vmatpush.msra.mxu0 0.0
    %2318 = vmatpush.msra.mxu0 0.0
    %2319 = vmatpush.msra.mxu0 0.0
    %2320 = vmatpush.msra.mxu0 0.0
    %2321 = vmatpush.msra.mxu0 0.0
    %2322 = vmatpush.msra.mxu0 0.0
    %2323 = vmatpush.msra.mxu0 0.0
    %2324 = vmatpush.msra.mxu0 0.0
    %2325 = vmatpush.msra.mxu0 0.0
    %2326 = vmatpush.msra.mxu0 0.0
    %2327 = vmatpush.msra.mxu0 0.0
    %2328 = vmatpush.msra.mxu0 0.0
    %2329 = vmatpush.msra.mxu0 0.0
    %2330 = vmatpush.msra.mxu0 0.0
    %2331 = vmatpush.msra.mxu0 0.0
    %v2332 = vand.u32 %v2212, 4294901760
    %v2333 = vsub.f32 %v2212, %v2332
    %v2334 = vand.u32 %v2333, 4294901760
    %2335 = vmatpush.msra.mxu0 %v2334
    %v2336 = vand.u32 %v2215, 4294901760
    %2337 = vmatmul.f32.gmra.mxu0 %v2336
    %v2338 = vpop.f32.mrf.mxu0
    %v2339 = vadd.f32 %v2315, %v2338
    %2340 = vdwg.mxu0
    %2341 = vmatpush.msra.mxu0 0.0
    %2342 = vmatpush.msra.mxu0 0.0
    %2343 = vmatpush.msra.mxu0 0.0
    %2344 = vmatpush.msra.mxu0 0.0
    %2345 = vmatpush.msra.mxu0 0.0
    %2346 = vmatpush.msra.mxu0 0.0
    %2347 = vmatpush.msra.mxu0 0.0
    %2348 = vmatpush.msra.mxu0 0.0
    %2349 = vmatpush.msra.mxu0 0.0
    %2350 = vmatpush.msra.mxu0 0.0
    %2351 = vmatpush.msra.mxu0 0.0
    %2352 = vmatpush.msra.mxu0 0.0
    %2353 = vmatpush.msra.mxu0 0.0
    %2354 = vmatpush.msra.mxu0 0.0
    %2355 = vmatpush.msra.mxu0 0.0
    %v2356 = vand.u32 %v2212, 4294901760
    %2357 = vmatpush.msra.mxu0 %v2356
    %v2358 = vand.u32 %v2215, 4294901760
    %2359 = vmatmul.f32.gmra.mxu0 %v2358
    %v2360 = vpop.f32.mrf.mxu0
    %v2361 = vadd.f32 %v2339, %v2360
    %2362 = vdwg.mxu0
    %v2363 = vld [vmem:[#allocation9] sm:$0xff]
    %v2365 = vsel %vm219, %v2363, 0
    %v2368 = vsel %vm219, %v2361, 0
    %2370 = vmatpush.xpose.msra.mxu0 0.0
    %2371 = vmatpush.xpose.msra.mxu0 0.0
    %2372 = vmatpush.xpose.msra.mxu0 0.0
    %2373 = vmatpush.xpose.msra.mxu0 0.0
    %2374 = vmatpush.xpose.msra.mxu0 0.0
    %2375 = vmatpush.xpose.msra.mxu0 0.0
    %2376 = vmatpush.xpose.msra.mxu0 0.0
    %2377 = vmatpush.xpose.msra.mxu0 0.0
    %2378 = vmatpush.xpose.msra.mxu0 0.0
    %2379 = vmatpush.xpose.msra.mxu0 0.0
    %2380 = vmatpush.xpose.msra.mxu0 0.0
    %2381 = vmatpush.xpose.msra.mxu0 0.0
    %2382 = vmatpush.xpose.msra.mxu0 0.0
    %2383 = vmatpush.xpose.msra.mxu0 0.0
    %2384 = vmatpush.xpose.msra.mxu0 0.0
    %v2385 = vand.u32 %v2368, 4294901760
    %2386 = vmatpush.xpose.msra.mxu0 %v2385
    %v2387 = vand.u32 %v2365, 4294901760
    %v2388 = vsub.f32 %v2365, %v2387
    %v2389 = vand.u32 %v2388, 4294901760
    %v2390 = vsub.f32 %v2388, %v2389
    %v2391 = vand.u32 %v2390, 4294901760
    %2392 = vmatmul.f32.gmra.mxu0 %v2391
    %v2393 = vpop.f32.mrf.mxu0
    %v2394 = vadd.f32 0.0, %v2393
    %2395 = vdwg.mxu0
    %2396 = vmatpush.xpose.msra.mxu0 0.0
    %2397 = vmatpush.xpose.msra.mxu0 0.0
    %2398 = vmatpush.xpose.msra.mxu0 0.0
    %2399 = vmatpush.xpose.msra.mxu0 0.0
    %2400 = vmatpush.xpose.msra.mxu0 0.0
    %2401 = vmatpush.xpose.msra.mxu0 0.0
    %2402 = vmatpush.xpose.msra.mxu0 0.0
    %2403 = vmatpush.xpose.msra.mxu0 0.0
    %2404 = vmatpush.xpose.msra.mxu0 0.0
    %2405 = vmatpush.xpose.msra.mxu0 0.0
    %2406 = vmatpush.xpose.msra.mxu0 0.0
    %2407 = vmatpush.xpose.msra.mxu0 0.0
    %2408 = vmatpush.xpose.msra.mxu0 0.0
    %2409 = vmatpush.xpose.msra.mxu0 0.0
    %2410 = vmatpush.xpose.msra.mxu0 0.0
    %v2411 = vand.u32 %v2368, 4294901760
    %v2412 = vsub.f32 %v2368, %v2411
    %v2413 = vand.u32 %v2412, 4294901760
    %v2414 = vsub.f32 %v2412, %v2413
    %v2415 = vand.u32 %v2414, 4294901760
    %2416 = vmatpush.xpose.msra.mxu0 %v2415
    %v2417 = vand.u32 %v2365, 4294901760
    %2418 = vmatmul.f32.gmra.mxu0 %v2417
    %v2419 = vpop.f32.mrf.mxu0
    %v2420 = vadd.f32 %v2394, %v2419
    %2421 = vdwg.mxu0
    %2422 = vmatpush.xpose.msra.mxu0 0.0
    %2423 = vmatpush.xpose.msra.mxu0 0.0
    %2424 = vmatpush.xpose.msra.mxu0 0.0
    %2425 = vmatpush.xpose.msra.mxu0 0.0
    %2426 = vmatpush.xpose.msra.mxu0 0.0
    %2427 = vmatpush.xpose.msra.mxu0 0.0
    %2428 = vmatpush.xpose.msra.mxu0 0.0
    %2429 = vmatpush.xpose.msra.mxu0 0.0
    %2430 = vmatpush.xpose.msra.mxu0 0.0
    %2431 = vmatpush.xpose.msra.mxu0 0.0
    %2432 = vmatpush.xpose.msra.mxu0 0.0
    %2433 = vmatpush.xpose.msra.mxu0 0.0
    %2434 = vmatpush.xpose.msra.mxu0 0.0
    %2435 = vmatpush.xpose.msra.mxu0 0.0
    %2436 = vmatpush.xpose.msra.mxu0 0.0
    %v2437 = vand.u32 %v2368, 4294901760
    %v2438 = vsub.f32 %v2368, %v2437
    %2439 = vmatpush.xpose.msra.mxu0 %v2438
    %v2440 = vand.u32 %v2365, 4294901760
    %v2441 = vsub.f32 %v2365, %v2440
    %2442 = vmatmul.f32.gmra.mxu0 %v2441
    %v2443 = vpop.f32.mrf.mxu0
    %v2444 = vadd.f32 %v2420, %v2443
    %2445 = vdwg.mxu0
    %2446 = vmatpush.xpose.msra.mxu0 0.0
    %2447 = vmatpush.xpose.msra.mxu0 0.0
    %2448 = vmatpush.xpose.msra.mxu0 0.0
    %2449 = vmatpush.xpose.msra.mxu0 0.0
    %2450 = vmatpush.xpose.msra.mxu0 0.0
    %2451 = vmatpush.xpose.msra.mxu0 0.0
    %2452 = vmatpush.xpose.msra.mxu0 0.0
    %2453 = vmatpush.xpose.msra.mxu0 0.0
    %2454 = vmatpush.xpose.msra.mxu0 0.0
    %2455 = vmatpush.xpose.msra.mxu0 0.0
    %2456 = vmatpush.xpose.msra.mxu0 0.0
    %2457 = vmatpush.xpose.msra.mxu0 0.0
    %2458 = vmatpush.xpose.msra.mxu0 0.0
    %2459 = vmatpush.xpose.msra.mxu0 0.0
    %2460 = vmatpush.xpose.msra.mxu0 0.0
    %v2461 = vand.u32 %v2368, 4294901760
    %2462 = vmatpush.xpose.msra.mxu0 %v2461
    %v2463 = vand.u32 %v2365, 4294901760
    %v2464 = vsub.f32 %v2365, %v2463
    %v2465 = vand.u32 %v2464, 4294901760
    %2466 = vmatmul.f32.gmra.mxu0 %v2465
    %v2467 = vpop.f32.mrf.mxu0
    %v2468 = vadd.f32 %v2444, %v2467
    %2469 = vdwg.mxu0
    %2470 = vmatpush.xpose.msra.mxu0 0.0
    %2471 = vmatpush.xpose.msra.mxu0 0.0
    %2472 = vmatpush.xpose.msra.mxu0 0.0
    %2473 = vmatpush.xpose.msra.mxu0 0.0
    %2474 = vmatpush.xpose.msra.mxu0 0.0
    %2475 = vmatpush.xpose.msra.mxu0 0.0
    %2476 = vmatpush.xpose.msra.mxu0 0.0
    %2477 = vmatpush.xpose.msra.mxu0 0.0
    %2478 = vmatpush.xpose.msra.mxu0 0.0
    %2479 = vmatpush.xpose.msra.mxu0 0.0
    %2480 = vmatpush.xpose.msra.mxu0 0.0
    %2481 = vmatpush.xpose.msra.mxu0 0.0
    %2482 = vmatpush.xpose.msra.mxu0 0.0
    %2483 = vmatpush.xpose.msra.mxu0 0.0
    %2484 = vmatpush.xpose.msra.mxu0 0.0
    %v2485 = vand.u32 %v2368, 4294901760
    %v2486 = vsub.f32 %v2368, %v2485
    %v2487 = vand.u32 %v2486, 4294901760
    %2488 = vmatpush.xpose.msra.mxu0 %v2487
    %v2489 = vand.u32 %v2365, 4294901760
    %2490 = vmatmul.f32.gmra.mxu0 %v2489
    %v2491 = vpop.f32.mrf.mxu0
    %v2492 = vadd.f32 %v2468, %v2491
    %2493 = vdwg.mxu0
    %2494 = vmatpush.xpose.msra.mxu0 0.0
    %2495 = vmatpush.xpose.msra.mxu0 0.0
    %2496 = vmatpush.xpose.msra.mxu0 0.0
    %2497 = vmatpush.xpose.msra.mxu0 0.0
    %2498 = vmatpush.xpose.msra.mxu0 0.0
    %2499 = vmatpush.xpose.msra.mxu0 0.0
    %2500 = vmatpush.xpose.msra.mxu0 0.0
    %2501 = vmatpush.xpose.msra.mxu0 0.0
    %2502 = vmatpush.xpose.msra.mxu0 0.0
    %2503 = vmatpush.xpose.msra.mxu0 0.0
    %2504 = vmatpush.xpose.msra.mxu0 0.0
    %2505 = vmatpush.xpose.msra.mxu0 0.0
    %2506 = vmatpush.xpose.msra.mxu0 0.0
    %2507 = vmatpush.xpose.msra.mxu0 0.0
    %2508 = vmatpush.xpose.msra.mxu0 0.0
    %v2509 = vand.u32 %v2368, 4294901760
    %2510 = vmatpush.xpose.msra.mxu0 %v2509
    %v2511 = vand.u32 %v2365, 4294901760
    %2512 = vmatmul.f32.gmra.mxu0 %v2511
    %v2513 = vpop.f32.mrf.mxu0
    %v2514 = vadd.f32 %v2492, %v2513
    %2515 = vdwg.mxu0
    %v2516 = vld [vmem:[#allocation6] sm:$0xff]
    %v2517 = vld [vmem:[#allocation9 + $0x8] sm:$0xff]
    %v2519 = vsel %vm219, %v2517, 0
    %2521 = vmatpush.xpose.msra.mxu0 0.0
    %2522 = vmatpush.xpose.msra.mxu0 0.0
    %2523 = vmatpush.xpose.msra.mxu0 0.0
    %2524 = vmatpush.xpose.msra.mxu0 0.0
    %2525 = vmatpush.xpose.msra.mxu0 0.0
    %2526 = vmatpush.xpose.msra.mxu0 0.0
    %2527 = vmatpush.xpose.msra.mxu0 0.0
    %2528 = vmatpush.xpose.msra.mxu0 0.0
    %2529 = vmatpush.xpose.msra.mxu0 0.0
    %2530 = vmatpush.xpose.msra.mxu0 0.0
    %2531 = vmatpush.xpose.msra.mxu0 0.0
    %2532 = vmatpush.xpose.msra.mxu0 0.0
    %2533 = vmatpush.xpose.msra.mxu0 0.0
    %2534 = vmatpush.xpose.msra.mxu0 0.0
    %2535 = vmatpush.xpose.msra.mxu0 0.0
    %v2536 = vand.u32 %v2368, 4294901760
    %2537 = vmatpush.xpose.msra.mxu0 %v2536
    %v2538 = vand.u32 %v2519, 4294901760
    %v2539 = vsub.f32 %v2519, %v2538
    %v2540 = vand.u32 %v2539, 4294901760
    %v2541 = vsub.f32 %v2539, %v2540
    %v2542 = vand.u32 %v2541, 4294901760
    %2543 = vmatmul.f32.gmra.mxu0 %v2542
    %v2544 = vpop.f32.mrf.mxu0
    %v2545 = vadd.f32 0.0, %v2544
    %2546 = vdwg.mxu0
    %2547 = vmatpush.xpose.msra.mxu0 0.0
    %2548 = vmatpush.xpose.msra.mxu0 0.0
    %2549 = vmatpush.xpose.msra.mxu0 0.0
    %2550 = vmatpush.xpose.msra.mxu0 0.0
    %2551 = vmatpush.xpose.msra.mxu0 0.0
    %2552 = vmatpush.xpose.msra.mxu0 0.0
    %2553 = vmatpush.xpose.msra.mxu0 0.0
    %2554 = vmatpush.xpose.msra.mxu0 0.0
    %2555 = vmatpush.xpose.msra.mxu0 0.0
    %2556 = vmatpush.xpose.msra.mxu0 0.0
    %2557 = vmatpush.xpose.msra.mxu0 0.0
    %2558 = vmatpush.xpose.msra.mxu0 0.0
    %2559 = vmatpush.xpose.msra.mxu0 0.0
    %2560 = vmatpush.xpose.msra.mxu0 0.0
    %2561 = vmatpush.xpose.msra.mxu0 0.0
    %v2562 = vand.u32 %v2368, 4294901760
    %v2563 = vsub.f32 %v2368, %v2562
    %v2564 = vand.u32 %v2563, 4294901760
    %v2565 = vsub.f32 %v2563, %v2564
    %v2566 = vand.u32 %v2565, 4294901760
    %2567 = vmatpush.xpose.msra.mxu0 %v2566
    %v2568 = vand.u32 %v2519, 4294901760
    %2569 = vmatmul.f32.gmra.mxu0 %v2568
    %v2570 = vpop.f32.mrf.mxu0
    %v2571 = vadd.f32 %v2545, %v2570
    %2572 = vdwg.mxu0
    %2573 = vmatpush.xpose.msra.mxu0 0.0
    %2574 = vmatpush.xpose.msra.mxu0 0.0
    %2575 = vmatpush.xpose.msra.mxu0 0.0
    %2576 = vmatpush.xpose.msra.mxu0 0.0
    %2577 = vmatpush.xpose.msra.mxu0 0.0
    %2578 = vmatpush.xpose.msra.mxu0 0.0
    %2579 = vmatpush.xpose.msra.mxu0 0.0
    %2580 = vmatpush.xpose.msra.mxu0 0.0
    %2581 = vmatpush.xpose.msra.mxu0 0.0
    %2582 = vmatpush.xpose.msra.mxu0 0.0
    %2583 = vmatpush.xpose.msra.mxu0 0.0
    %2584 = vmatpush.xpose.msra.mxu0 0.0
    %2585 = vmatpush.xpose.msra.mxu0 0.0
    %2586 = vmatpush.xpose.msra.mxu0 0.0
    %2587 = vmatpush.xpose.msra.mxu0 0.0
    %v2588 = vand.u32 %v2368, 4294901760
    %v2589 = vsub.f32 %v2368, %v2588
    %2590 = vmatpush.xpose.msra.mxu0 %v2589
    %v2591 = vand.u32 %v2519, 4294901760
    %v2592 = vsub.f32 %v2519, %v2591
    %2593 = vmatmul.f32.gmra.mxu0 %v2592
    %v2594 = vpop.f32.mrf.mxu0
    %v2595 = vadd.f32 %v2571, %v2594
    %2596 = vdwg.mxu0
    %2597 = vmatpush.xpose.msra.mxu0 0.0
    %2598 = vmatpush.xpose.msra.mxu0 0.0
    %2599 = vmatpush.xpose.msra.mxu0 0.0
    %2600 = vmatpush.xpose.msra.mxu0 0.0
    %2601 = vmatpush.xpose.msra.mxu0 0.0
    %2602 = vmatpush.xpose.msra.mxu0 0.0
    %2603 = vmatpush.xpose.msra.mxu0 0.0
    %2604 = vmatpush.xpose.msra.mxu0 0.0
    %2605 = vmatpush.xpose.msra.mxu0 0.0
    %2606 = vmatpush.xpose.msra.mxu0 0.0
    %2607 = vmatpush.xpose.msra.mxu0 0.0
    %2608 = vmatpush.xpose.msra.mxu0 0.0
    %2609 = vmatpush.xpose.msra.mxu0 0.0
    %2610 = vmatpush.xpose.msra.mxu0 0.0
    %2611 = vmatpush.xpose.msra.mxu0 0.0
    %v2612 = vand.u32 %v2368, 4294901760
    %2613 = vmatpush.xpose.msra.mxu0 %v2612
    %v2614 = vand.u32 %v2519, 4294901760
    %v2615 = vsub.f32 %v2519, %v2614
    %v2616 = vand.u32 %v2615, 4294901760
    %2617 = vmatmul.f32.gmra.mxu0 %v2616
    %v2618 = vpop.f32.mrf.mxu0
    %v2619 = vadd.f32 %v2595, %v2618
    %2620 = vdwg.mxu0
    %2621 = vmatpush.xpose.msra.mxu0 0.0
    %2622 = vmatpush.xpose.msra.mxu0 0.0
    %2623 = vmatpush.xpose.msra.mxu0 0.0
    %2624 = vmatpush.xpose.msra.mxu0 0.0
    %2625 = vmatpush.xpose.msra.mxu0 0.0
    %2626 = vmatpush.xpose.msra.mxu0 0.0
    %2627 = vmatpush.xpose.msra.mxu0 0.0
    %2628 = vmatpush.xpose.msra.mxu0 0.0
    %2629 = vmatpush.xpose.msra.mxu0 0.0
    %2630 = vmatpush.xpose.msra.mxu0 0.0
    %2631 = vmatpush.xpose.msra.mxu0 0.0
    %2632 = vmatpush.xpose.msra.mxu0 0.0
    %2633 = vmatpush.xpose.msra.mxu0 0.0
    %2634 = vmatpush.xpose.msra.mxu0 0.0
    %2635 = vmatpush.xpose.msra.mxu0 0.0
    %v2636 = vand.u32 %v2368, 4294901760
    %v2637 = vsub.f32 %v2368, %v2636
    %v2638 = vand.u32 %v2637, 4294901760
    %2639 = vmatpush.xpose.msra.mxu0 %v2638
    %v2640 = vand.u32 %v2519, 4294901760
    %2641 = vmatmul.f32.gmra.mxu0 %v2640
    %v2642 = vpop.f32.mrf.mxu0
    %v2643 = vadd.f32 %v2619, %v2642
    %2644 = vdwg.mxu0
    %2645 = vmatpush.xpose.msra.mxu0 0.0
    %2646 = vmatpush.xpose.msra.mxu0 0.0
    %2647 = vmatpush.xpose.msra.mxu0 0.0
    %2648 = vmatpush.xpose.msra.mxu0 0.0
    %2649 = vmatpush.xpose.msra.mxu0 0.0
    %2650 = vmatpush.xpose.msra.mxu0 0.0
    %2651 = vmatpush.xpose.msra.mxu0 0.0
    %2652 = vmatpush.xpose.msra.mxu0 0.0
    %2653 = vmatpush.xpose.msra.mxu0 0.0
    %2654 = vmatpush.xpose.msra.mxu0 0.0
    %2655 = vmatpush.xpose.msra.mxu0 0.0
    %2656 = vmatpush.xpose.msra.mxu0 0.0
    %2657 = vmatpush.xpose.msra.mxu0 0.0
    %2658 = vmatpush.xpose.msra.mxu0 0.0
    %2659 = vmatpush.xpose.msra.mxu0 0.0
    %v2660 = vand.u32 %v2368, 4294901760
    %2661 = vmatpush.xpose.msra.mxu0 %v2660
    %v2662 = vand.u32 %v2519, 4294901760
    %2663 = vmatmul.f32.gmra.mxu0 %v2662
    %v2664 = vpop.f32.mrf.mxu0
    %v2665 = vadd.f32 %v2643, %v2664
    %2666 = vdwg.mxu0
    %v2667 = vld [vmem:[#allocation6 + $0x8] sm:$0xff]
    %v2669 = vsel %vm673, %v2665, 0
    %2671 = vmatpush.msra.mxu0 0.0
    %2672 = vmatpush.msra.mxu0 0.0
    %2673 = vmatpush.msra.mxu0 0.0
    %2674 = vmatpush.msra.mxu0 0.0
    %2675 = vmatpush.msra.mxu0 0.0
    %2676 = vmatpush.msra.mxu0 0.0
    %2677 = vmatpush.msra.mxu0 0.0
    %2678 = vmatpush.msra.mxu0 0.0
    %2679 = vmatpush.msra.mxu0 0.0
    %2680 = vmatpush.msra.mxu0 0.0
    %2681 = vmatpush.msra.mxu0 0.0
    %2682 = vmatpush.msra.mxu0 0.0
    %2683 = vmatpush.msra.mxu0 0.0
    %2684 = vmatpush.msra.mxu0 0.0
    %2685 = vmatpush.msra.mxu0 0.0
    %v2686 = vand.u32 %v2667, 4294901760
    %2687 = vmatpush.msra.mxu0 %v2686
    %v2688 = vand.u32 %v2669, 4294901760
    %v2689 = vsub.f32 %v2669, %v2688
    %v2690 = vand.u32 %v2689, 4294901760
    %v2691 = vsub.f32 %v2689, %v2690
    %v2692 = vand.u32 %v2691, 4294901760
    %2693 = vmatmul.f32.gmra.mxu0 %v2692
    %v2694 = vpop.f32.mrf.mxu0
    %v2695 = vadd.f32 0.0, %v2694
    %2696 = vdwg.mxu0
    %2697 = vmatpush.msra.mxu0 0.0
    %2698 = vmatpush.msra.mxu0 0.0
    %2699 = vmatpush.msra.mxu0 0.0
    %2700 = vmatpush.msra.mxu0 0.0
    %2701 = vmatpush.msra.mxu0 0.0
    %2702 = vmatpush.msra.mxu0 0.0
    %2703 = vmatpush.msra.mxu0 0.0
    %2704 = vmatpush.msra.mxu0 0.0
    %2705 = vmatpush.msra.mxu0 0.0
    %2706 = vmatpush.msra.mxu0 0.0
    %2707 = vmatpush.msra.mxu0 0.0
    %2708 = vmatpush.msra.mxu0 0.0
    %2709 = vmatpush.msra.mxu0 0.0
    %2710 = vmatpush.msra.mxu0 0.0
    %2711 = vmatpush.msra.mxu0 0.0
    %v2712 = vand.u32 %v2667, 4294901760
    %v2713 = vsub.f32 %v2667, %v2712
    %v2714 = vand.u32 %v2713, 4294901760
    %v2715 = vsub.f32 %v2713, %v2714
    %v2716 = vand.u32 %v2715, 4294901760
    %2717 = vmatpush.msra.mxu0 %v2716
    %v2718 = vand.u32 %v2669, 4294901760
    %2719 = vmatmul.f32.gmra.mxu0 %v2718
    %v2720 = vpop.f32.mrf.mxu0
    %v2721 = vadd.f32 %v2695, %v2720
    %2722 = vdwg.mxu0
    %2723 = vmatpush.msra.mxu0 0.0
    %2724 = vmatpush.msra.mxu0 0.0
    %2725 = vmatpush.msra.mxu0 0.0
    %2726 = vmatpush.msra.mxu0 0.0
    %2727 = vmatpush.msra.mxu0 0.0
    %2728 = vmatpush.msra.mxu0 0.0
    %2729 = vmatpush.msra.mxu0 0.0
    %2730 = vmatpush.msra.mxu0 0.0
    %2731 = vmatpush.msra.mxu0 0.0
    %2732 = vmatpush.msra.mxu0 0.0
    %2733 = vmatpush.msra.mxu0 0.0
    %2734 = vmatpush.msra.mxu0 0.0
    %2735 = vmatpush.msra.mxu0 0.0
    %2736 = vmatpush.msra.mxu0 0.0
    %2737 = vmatpush.msra.mxu0 0.0
    %v2738 = vand.u32 %v2667, 4294901760
    %v2739 = vsub.f32 %v2667, %v2738
    %2740 = vmatpush.msra.mxu0 %v2739
    %v2741 = vand.u32 %v2669, 4294901760
    %v2742 = vsub.f32 %v2669, %v2741
    %2743 = vmatmul.f32.gmra.mxu0 %v2742
    %v2744 = vpop.f32.mrf.mxu0
    %v2745 = vadd.f32 %v2721, %v2744
    %2746 = vdwg.mxu0
    %2747 = vmatpush.msra.mxu0 0.0
    %2748 = vmatpush.msra.mxu0 0.0
    %2749 = vmatpush.msra.mxu0 0.0
    %2750 = vmatpush.msra.mxu0 0.0
    %2751 = vmatpush.msra.mxu0 0.0
    %2752 = vmatpush.msra.mxu0 0.0
    %2753 = vmatpush.msra.mxu0 0.0
    %2754 = vmatpush.msra.mxu0 0.0
    %2755 = vmatpush.msra.mxu0 0.0
    %2756 = vmatpush.msra.mxu0 0.0
    %2757 = vmatpush.msra.mxu0 0.0
    %2758 = vmatpush.msra.mxu0 0.0
    %2759 = vmatpush.msra.mxu0 0.0
    %2760 = vmatpush.msra.mxu0 0.0
    %2761 = vmatpush.msra.mxu0 0.0
    %v2762 = vand.u32 %v2667, 4294901760
    %2763 = vmatpush.msra.mxu0 %v2762
    %v2764 = vand.u32 %v2669, 4294901760
    %v2765 = vsub.f32 %v2669, %v2764
    %v2766 = vand.u32 %v2765, 4294901760
    %2767 = vmatmul.f32.gmra.mxu0 %v2766
    %v2768 = vpop.f32.mrf.mxu0
    %v2769 = vadd.f32 %v2745, %v2768
    %2770 = vdwg.mxu0
    %2771 = vmatpush.msra.mxu0 0.0
    %2772 = vmatpush.msra.mxu0 0.0
    %2773 = vmatpush.msra.mxu0 0.0
    %2774 = vmatpush.msra.mxu0 0.0
    %2775 = vmatpush.msra.mxu0 0.0
    %2776 = vmatpush.msra.mxu0 0.0
    %2777 = vmatpush.msra.mxu0 0.0
    %2778 = vmatpush.msra.mxu0 0.0
    %2779 = vmatpush.msra.mxu0 0.0
    %2780 = vmatpush.msra.mxu0 0.0
    %2781 = vmatpush.msra.mxu0 0.0
    %2782 = vmatpush.msra.mxu0 0.0
    %2783 = vmatpush.msra.mxu0 0.0
    %2784 = vmatpush.msra.mxu0 0.0
    %2785 = vmatpush.msra.mxu0 0.0
    %v2786 = vand.u32 %v2667, 4294901760
    %v2787 = vsub.f32 %v2667, %v2786
    %v2788 = vand.u32 %v2787, 4294901760
    %2789 = vmatpush.msra.mxu0 %v2788
    %v2790 = vand.u32 %v2669, 4294901760
    %2791 = vmatmul.f32.gmra.mxu0 %v2790
    %v2792 = vpop.f32.mrf.mxu0
    %v2793 = vadd.f32 %v2769, %v2792
    %2794 = vdwg.mxu0
    %2795 = vmatpush.msra.mxu0 0.0
    %2796 = vmatpush.msra.mxu0 0.0
    %2797 = vmatpush.msra.mxu0 0.0
    %2798 = vmatpush.msra.mxu0 0.0
    %2799 = vmatpush.msra.mxu0 0.0
    %2800 = vmatpush.msra.mxu0 0.0
    %2801 = vmatpush.msra.mxu0 0.0
    %2802 = vmatpush.msra.mxu0 0.0
    %2803 = vmatpush.msra.mxu0 0.0
    %2804 = vmatpush.msra.mxu0 0.0
    %2805 = vmatpush.msra.mxu0 0.0
    %2806 = vmatpush.msra.mxu0 0.0
    %2807 = vmatpush.msra.mxu0 0.0
    %2808 = vmatpush.msra.mxu0 0.0
    %2809 = vmatpush.msra.mxu0 0.0
    %v2810 = vand.u32 %v2667, 4294901760
    %2811 = vmatpush.msra.mxu0 %v2810
    %v2812 = vand.u32 %v2669, 4294901760
    %2813 = vmatmul.f32.gmra.mxu0 %v2812
    %v2814 = vpop.f32.mrf.mxu0
    %v2815 = vadd.f32 %v2793, %v2814
    %2816 = vdwg.mxu0
    %v2818 = vsel %vm673, %v2514, 0
    %2820 = vmatpush.msra.mxu0 0.0
    %2821 = vmatpush.msra.mxu0 0.0
    %2822 = vmatpush.msra.mxu0 0.0
    %2823 = vmatpush.msra.mxu0 0.0
    %2824 = vmatpush.msra.mxu0 0.0
    %2825 = vmatpush.msra.mxu0 0.0
    %2826 = vmatpush.msra.mxu0 0.0
    %2827 = vmatpush.msra.mxu0 0.0
    %2828 = vmatpush.msra.mxu0 0.0
    %2829 = vmatpush.msra.mxu0 0.0
    %2830 = vmatpush.msra.mxu0 0.0
    %2831 = vmatpush.msra.mxu0 0.0
    %2832 = vmatpush.msra.mxu0 0.0
    %2833 = vmatpush.msra.mxu0 0.0
    %2834 = vmatpush.msra.mxu0 0.0
    %v2835 = vand.u32 %v2516, 4294901760
    %2836 = vmatpush.msra.mxu0 %v2835
    %v2837 = vand.u32 %v2818, 4294901760
    %v2838 = vsub.f32 %v2818, %v2837
    %v2839 = vand.u32 %v2838, 4294901760
    %v2840 = vsub.f32 %v2838, %v2839
    %v2841 = vand.u32 %v2840, 4294901760
    %2842 = vmatmul.f32.gmra.mxu0 %v2841
    %v2843 = vpop.f32.mrf.mxu0
    %v2844 = vadd.f32 %v2815, %v2843
    %2845 = vdwg.mxu0
    %2846 = vmatpush.msra.mxu0 0.0
    %2847 = vmatpush.msra.mxu0 0.0
    %2848 = vmatpush.msra.mxu0 0.0
    %2849 = vmatpush.msra.mxu0 0.0
    %2850 = vmatpush.msra.mxu0 0.0
    %2851 = vmatpush.msra.mxu0 0.0
    %2852 = vmatpush.msra.mxu0 0.0
    %2853 = vmatpush.msra.mxu0 0.0
    %2854 = vmatpush.msra.mxu0 0.0
    %2855 = vmatpush.msra.mxu0 0.0
    %2856 = vmatpush.msra.mxu0 0.0
    %2857 = vmatpush.msra.mxu0 0.0
    %2858 = vmatpush.msra.mxu0 0.0
    %2859 = vmatpush.msra.mxu0 0.0
    %2860 = vmatpush.msra.mxu0 0.0
    %v2861 = vand.u32 %v2516, 4294901760
    %v2862 = vsub.f32 %v2516, %v2861
    %v2863 = vand.u32 %v2862, 4294901760
    %v2864 = vsub.f32 %v2862, %v2863
    %v2865 = vand.u32 %v2864, 4294901760
    %2866 = vmatpush.msra.mxu0 %v2865
    %v2867 = vand.u32 %v2818, 4294901760
    %2868 = vmatmul.f32.gmra.mxu0 %v2867
    %v2869 = vpop.f32.mrf.mxu0
    %v2870 = vadd.f32 %v2844, %v2869
    %2871 = vdwg.mxu0
    %2872 = vmatpush.msra.mxu0 0.0
    %2873 = vmatpush.msra.mxu0 0.0
    %2874 = vmatpush.msra.mxu0 0.0
    %2875 = vmatpush.msra.mxu0 0.0
    %2876 = vmatpush.msra.mxu0 0.0
    %2877 = vmatpush.msra.mxu0 0.0
    %2878 = vmatpush.msra.mxu0 0.0
    %2879 = vmatpush.msra.mxu0 0.0
    %2880 = vmatpush.msra.mxu0 0.0
    %2881 = vmatpush.msra.mxu0 0.0
    %2882 = vmatpush.msra.mxu0 0.0
    %2883 = vmatpush.msra.mxu0 0.0
    %2884 = vmatpush.msra.mxu0 0.0
    %2885 = vmatpush.msra.mxu0 0.0
    %2886 = vmatpush.msra.mxu0 0.0
    %v2887 = vand.u32 %v2516, 4294901760
    %v2888 = vsub.f32 %v2516, %v2887
    %2889 = vmatpush.msra.mxu0 %v2888
    %v2890 = vand.u32 %v2818, 4294901760
    %v2891 = vsub.f32 %v2818, %v2890
    %2892 = vmatmul.f32.gmra.mxu0 %v2891
    %v2893 = vpop.f32.mrf.mxu0
    %v2894 = vadd.f32 %v2870, %v2893
    %2895 = vdwg.mxu0
    %2896 = vmatpush.msra.mxu0 0.0
    %2897 = vmatpush.msra.mxu0 0.0
    %2898 = vmatpush.msra.mxu0 0.0
    %2899 = vmatpush.msra.mxu0 0.0
    %2900 = vmatpush.msra.mxu0 0.0
    %2901 = vmatpush.msra.mxu0 0.0
    %2902 = vmatpush.msra.mxu0 0.0
    %2903 = vmatpush.msra.mxu0 0.0
    %2904 = vmatpush.msra.mxu0 0.0
    %2905 = vmatpush.msra.mxu0 0.0
    %2906 = vmatpush.msra.mxu0 0.0
    %2907 = vmatpush.msra.mxu0 0.0
    %2908 = vmatpush.msra.mxu0 0.0
    %2909 = vmatpush.msra.mxu0 0.0
    %2910 = vmatpush.msra.mxu0 0.0
    %v2911 = vand.u32 %v2516, 4294901760
    %2912 = vmatpush.msra.mxu0 %v2911
    %v2913 = vand.u32 %v2818, 4294901760
    %v2914 = vsub.f32 %v2818, %v2913
    %v2915 = vand.u32 %v2914, 4294901760
    %2916 = vmatmul.f32.gmra.mxu0 %v2915
    %v2917 = vpop.f32.mrf.mxu0
    %v2918 = vadd.f32 %v2894, %v2917
    %2919 = vdwg.mxu0
    %2920 = vmatpush.msra.mxu0 0.0
    %2921 = vmatpush.msra.mxu0 0.0
    %2922 = vmatpush.msra.mxu0 0.0
    %2923 = vmatpush.msra.mxu0 0.0
    %2924 = vmatpush.msra.mxu0 0.0
    %2925 = vmatpush.msra.mxu0 0.0
    %2926 = vmatpush.msra.mxu0 0.0
    %2927 = vmatpush.msra.mxu0 0.0
    %2928 = vmatpush.msra.mxu0 0.0
    %2929 = vmatpush.msra.mxu0 0.0
    %2930 = vmatpush.msra.mxu0 0.0
    %2931 = vmatpush.msra.mxu0 0.0
    %2932 = vmatpush.msra.mxu0 0.0
    %2933 = vmatpush.msra.mxu0 0.0
    %2934 = vmatpush.msra.mxu0 0.0
    %v2935 = vand.u32 %v2516, 4294901760
    %v2936 = vsub.f32 %v2516, %v2935
    %v2937 = vand.u32 %v2936, 4294901760
    %2938 = vmatpush.msra.mxu0 %v2937
    %v2939 = vand.u32 %v2818, 4294901760
    %2940 = vmatmul.f32.gmra.mxu0 %v2939
    %v2941 = vpop.f32.mrf.mxu0
    %v2942 = vadd.f32 %v2918, %v2941
    %2943 = vdwg.mxu0
    %2944 = vmatpush.msra.mxu0 0.0
    %2945 = vmatpush.msra.mxu0 0.0
    %2946 = vmatpush.msra.mxu0 0.0
    %2947 = vmatpush.msra.mxu0 0.0
    %2948 = vmatpush.msra.mxu0 0.0
    %2949 = vmatpush.msra.mxu0 0.0
    %2950 = vmatpush.msra.mxu0 0.0
    %2951 = vmatpush.msra.mxu0 0.0
    %2952 = vmatpush.msra.mxu0 0.0
    %2953 = vmatpush.msra.mxu0 0.0
    %2954 = vmatpush.msra.mxu0 0.0
    %2955 = vmatpush.msra.mxu0 0.0
    %2956 = vmatpush.msra.mxu0 0.0
    %2957 = vmatpush.msra.mxu0 0.0
    %2958 = vmatpush.msra.mxu0 0.0
    %v2959 = vand.u32 %v2516, 4294901760
    %2960 = vmatpush.msra.mxu0 %v2959
    %v2961 = vand.u32 %v2818, 4294901760
    %2962 = vmatmul.f32.gmra.mxu0 %v2961
    %v2963 = vpop.f32.mrf.mxu0
    %v2964 = vadd.f32 %v2942, %v2963
    %2965 = vdwg.mxu0
    %v2966 = vld [vmem:[#allocation9 + $0x10] sm:$0xff]
    %v2968 = vsel %vm219, %v2966, 0
    %2970 = vmatpush.xpose.msra.mxu0 0.0
    %2971 = vmatpush.xpose.msra.mxu0 0.0
    %2972 = vmatpush.xpose.msra.mxu0 0.0
    %2973 = vmatpush.xpose.msra.mxu0 0.0
    %2974 = vmatpush.xpose.msra.mxu0 0.0
    %2975 = vmatpush.xpose.msra.mxu0 0.0
    %2976 = vmatpush.xpose.msra.mxu0 0.0
    %2977 = vmatpush.xpose.msra.mxu0 0.0
    %2978 = vmatpush.xpose.msra.mxu0 0.0
    %2979 = vmatpush.xpose.msra.mxu0 0.0
    %2980 = vmatpush.xpose.msra.mxu0 0.0
    %2981 = vmatpush.xpose.msra.mxu0 0.0
    %2982 = vmatpush.xpose.msra.mxu0 0.0
    %2983 = vmatpush.xpose.msra.mxu0 0.0
    %2984 = vmatpush.xpose.msra.mxu0 0.0
    %v2985 = vand.u32 %v2368, 4294901760
    %2986 = vmatpush.xpose.msra.mxu0 %v2985
    %v2987 = vand.u32 %v2968, 4294901760
    %v2988 = vsub.f32 %v2968, %v2987
    %v2989 = vand.u32 %v2988, 4294901760
    %v2990 = vsub.f32 %v2988, %v2989
    %v2991 = vand.u32 %v2990, 4294901760
    %2992 = vmatmul.f32.gmra.mxu0 %v2991
    %v2993 = vpop.f32.mrf.mxu0
    %v2994 = vadd.f32 0.0, %v2993
    %2995 = vdwg.mxu0
    %2996 = vmatpush.xpose.msra.mxu0 0.0
    %2997 = vmatpush.xpose.msra.mxu0 0.0
    %2998 = vmatpush.xpose.msra.mxu0 0.0
    %2999 = vmatpush.xpose.msra.mxu0 0.0
    %3000 = vmatpush.xpose.msra.mxu0 0.0
    %3001 = vmatpush.xpose.msra.mxu0 0.0
    %3002 = vmatpush.xpose.msra.mxu0 0.0
    %3003 = vmatpush.xpose.msra.mxu0 0.0
    %3004 = vmatpush.xpose.msra.mxu0 0.0
    %3005 = vmatpush.xpose.msra.mxu0 0.0
    %3006 = vmatpush.xpose.msra.mxu0 0.0
    %3007 = vmatpush.xpose.msra.mxu0 0.0
    %3008 = vmatpush.xpose.msra.mxu0 0.0
    %3009 = vmatpush.xpose.msra.mxu0 0.0
    %3010 = vmatpush.xpose.msra.mxu0 0.0
    %v3011 = vand.u32 %v2368, 4294901760
    %v3012 = vsub.f32 %v2368, %v3011
    %v3013 = vand.u32 %v3012, 4294901760
    %v3014 = vsub.f32 %v3012, %v3013
    %v3015 = vand.u32 %v3014, 4294901760
    %3016 = vmatpush.xpose.msra.mxu0 %v3015
    %v3017 = vand.u32 %v2968, 4294901760
    %3018 = vmatmul.f32.gmra.mxu0 %v3017
    %v3019 = vpop.f32.mrf.mxu0
    %v3020 = vadd.f32 %v2994, %v3019
    %3021 = vdwg.mxu0
    %3022 = vmatpush.xpose.msra.mxu0 0.0
    %3023 = vmatpush.xpose.msra.mxu0 0.0
    %3024 = vmatpush.xpose.msra.mxu0 0.0
    %3025 = vmatpush.xpose.msra.mxu0 0.0
    %3026 = vmatpush.xpose.msra.mxu0 0.0
    %3027 = vmatpush.xpose.msra.mxu0 0.0
    %3028 = vmatpush.xpose.msra.mxu0 0.0
    %3029 = vmatpush.xpose.msra.mxu0 0.0
    %3030 = vmatpush.xpose.msra.mxu0 0.0
    %3031 = vmatpush.xpose.msra.mxu0 0.0
    %3032 = vmatpush.xpose.msra.mxu0 0.0
    %3033 = vmatpush.xpose.msra.mxu0 0.0
    %3034 = vmatpush.xpose.msra.mxu0 0.0
    %3035 = vmatpush.xpose.msra.mxu0 0.0
    %3036 = vmatpush.xpose.msra.mxu0 0.0
    %v3037 = vand.u32 %v2368, 4294901760
    %v3038 = vsub.f32 %v2368, %v3037
    %3039 = vmatpush.xpose.msra.mxu0 %v3038
    %v3040 = vand.u32 %v2968, 4294901760
    %v3041 = vsub.f32 %v2968, %v3040
    %3042 = vmatmul.f32.gmra.mxu0 %v3041
    %v3043 = vpop.f32.mrf.mxu0
    %v3044 = vadd.f32 %v3020, %v3043
    %3045 = vdwg.mxu0
    %3046 = vmatpush.xpose.msra.mxu0 0.0
    %3047 = vmatpush.xpose.msra.mxu0 0.0
    %3048 = vmatpush.xpose.msra.mxu0 0.0
    %3049 = vmatpush.xpose.msra.mxu0 0.0
    %3050 = vmatpush.xpose.msra.mxu0 0.0
    %3051 = vmatpush.xpose.msra.mxu0 0.0
    %3052 = vmatpush.xpose.msra.mxu0 0.0
    %3053 = vmatpush.xpose.msra.mxu0 0.0
    %3054 = vmatpush.xpose.msra.mxu0 0.0
    %3055 = vmatpush.xpose.msra.mxu0 0.0
    %3056 = vmatpush.xpose.msra.mxu0 0.0
    %3057 = vmatpush.xpose.msra.mxu0 0.0
    %3058 = vmatpush.xpose.msra.mxu0 0.0
    %3059 = vmatpush.xpose.msra.mxu0 0.0
    %3060 = vmatpush.xpose.msra.mxu0 0.0
    %v3061 = vand.u32 %v2368, 4294901760
    %3062 = vmatpush.xpose.msra.mxu0 %v3061
    %v3063 = vand.u32 %v2968, 4294901760
    %v3064 = vsub.f32 %v2968, %v3063
    %v3065 = vand.u32 %v3064, 4294901760
    %3066 = vmatmul.f32.gmra.mxu0 %v3065
    %v3067 = vpop.f32.mrf.mxu0
    %v3068 = vadd.f32 %v3044, %v3067
    %3069 = vdwg.mxu0
    %3070 = vmatpush.xpose.msra.mxu0 0.0
    %3071 = vmatpush.xpose.msra.mxu0 0.0
    %3072 = vmatpush.xpose.msra.mxu0 0.0
    %3073 = vmatpush.xpose.msra.mxu0 0.0
    %3074 = vmatpush.xpose.msra.mxu0 0.0
    %3075 = vmatpush.xpose.msra.mxu0 0.0
    %3076 = vmatpush.xpose.msra.mxu0 0.0
    %3077 = vmatpush.xpose.msra.mxu0 0.0
    %3078 = vmatpush.xpose.msra.mxu0 0.0
    %3079 = vmatpush.xpose.msra.mxu0 0.0
    %3080 = vmatpush.xpose.msra.mxu0 0.0
    %3081 = vmatpush.xpose.msra.mxu0 0.0
    %3082 = vmatpush.xpose.msra.mxu0 0.0
    %3083 = vmatpush.xpose.msra.mxu0 0.0
    %3084 = vmatpush.xpose.msra.mxu0 0.0
    %v3085 = vand.u32 %v2368, 4294901760
    %v3086 = vsub.f32 %v2368, %v3085
    %v3087 = vand.u32 %v3086, 4294901760
    %3088 = vmatpush.xpose.msra.mxu0 %v3087
    %v3089 = vand.u32 %v2968, 4294901760
    %3090 = vmatmul.f32.gmra.mxu0 %v3089
    %v3091 = vpop.f32.mrf.mxu0
    %v3092 = vadd.f32 %v3068, %v3091
    %3093 = vdwg.mxu0
    %3094 = vmatpush.xpose.msra.mxu0 0.0
    %3095 = vmatpush.xpose.msra.mxu0 0.0
    %3096 = vmatpush.xpose.msra.mxu0 0.0
    %3097 = vmatpush.xpose.msra.mxu0 0.0
    %3098 = vmatpush.xpose.msra.mxu0 0.0
    %3099 = vmatpush.xpose.msra.mxu0 0.0
    %3100 = vmatpush.xpose.msra.mxu0 0.0
    %3101 = vmatpush.xpose.msra.mxu0 0.0
    %3102 = vmatpush.xpose.msra.mxu0 0.0
    %3103 = vmatpush.xpose.msra.mxu0 0.0
    %3104 = vmatpush.xpose.msra.mxu0 0.0
    %3105 = vmatpush.xpose.msra.mxu0 0.0
    %3106 = vmatpush.xpose.msra.mxu0 0.0
    %3107 = vmatpush.xpose.msra.mxu0 0.0
    %3108 = vmatpush.xpose.msra.mxu0 0.0
    %v3109 = vand.u32 %v2368, 4294901760
    %3110 = vmatpush.xpose.msra.mxu0 %v3109
    %v3111 = vand.u32 %v2968, 4294901760
    %3112 = vmatmul.f32.gmra.mxu0 %v3111
    %v3113 = vpop.f32.mrf.mxu0
    %v3114 = vadd.f32 %v3092, %v3113
    %3115 = vdwg.mxu0
    %v3116 = vld [vmem:[#allocation6 + $0x10] sm:$0xff]
    %v3118 = vsel %vm673, %v3114, 0
    %3120 = vmatpush.msra.mxu0 0.0
    %3121 = vmatpush.msra.mxu0 0.0
    %3122 = vmatpush.msra.mxu0 0.0
    %3123 = vmatpush.msra.mxu0 0.0
    %3124 = vmatpush.msra.mxu0 0.0
    %3125 = vmatpush.msra.mxu0 0.0
    %3126 = vmatpush.msra.mxu0 0.0
    %3127 = vmatpush.msra.mxu0 0.0
    %3128 = vmatpush.msra.mxu0 0.0
    %3129 = vmatpush.msra.mxu0 0.0
    %3130 = vmatpush.msra.mxu0 0.0
    %3131 = vmatpush.msra.mxu0 0.0
    %3132 = vmatpush.msra.mxu0 0.0
    %3133 = vmatpush.msra.mxu0 0.0
    %3134 = vmatpush.msra.mxu0 0.0
    %v3135 = vand.u32 %v3116, 4294901760
    %3136 = vmatpush.msra.mxu0 %v3135
    %v3137 = vand.u32 %v3118, 4294901760
    %v3138 = vsub.f32 %v3118, %v3137
    %v3139 = vand.u32 %v3138, 4294901760
    %v3140 = vsub.f32 %v3138, %v3139
    %v3141 = vand.u32 %v3140, 4294901760
    %3142 = vmatmul.f32.gmra.mxu0 %v3141
    %v3143 = vpop.f32.mrf.mxu0
    %v3144 = vadd.f32 0.0, %v3143
    %3145 = vdwg.mxu0
    %3146 = vmatpush.msra.mxu0 0.0
    %3147 = vmatpush.msra.mxu0 0.0
    %3148 = vmatpush.msra.mxu0 0.0
    %3149 = vmatpush.msra.mxu0 0.0
    %3150 = vmatpush.msra.mxu0 0.0
    %3151 = vmatpush.msra.mxu0 0.0
    %3152 = vmatpush.msra.mxu0 0.0
    %3153 = vmatpush.msra.mxu0 0.0
    %3154 = vmatpush.msra.mxu0 0.0
    %3155 = vmatpush.msra.mxu0 0.0
    %3156 = vmatpush.msra.mxu0 0.0
    %3157 = vmatpush.msra.mxu0 0.0
    %3158 = vmatpush.msra.mxu0 0.0
    %3159 = vmatpush.msra.mxu0 0.0
    %3160 = vmatpush.msra.mxu0 0.0
    %v3161 = vand.u32 %v3116, 4294901760
    %v3162 = vsub.f32 %v3116, %v3161
    %v3163 = vand.u32 %v3162, 4294901760
    %v3164 = vsub.f32 %v3162, %v3163
    %v3165 = vand.u32 %v3164, 4294901760
    %3166 = vmatpush.msra.mxu0 %v3165
    %v3167 = vand.u32 %v3118, 4294901760
    %3168 = vmatmul.f32.gmra.mxu0 %v3167
    %v3169 = vpop.f32.mrf.mxu0
    %v3170 = vadd.f32 %v3144, %v3169
    %3171 = vdwg.mxu0
    %3172 = vmatpush.msra.mxu0 0.0
    %3173 = vmatpush.msra.mxu0 0.0
    %3174 = vmatpush.msra.mxu0 0.0
    %3175 = vmatpush.msra.mxu0 0.0
    %3176 = vmatpush.msra.mxu0 0.0
    %3177 = vmatpush.msra.mxu0 0.0
    %3178 = vmatpush.msra.mxu0 0.0
    %3179 = vmatpush.msra.mxu0 0.0
    %3180 = vmatpush.msra.mxu0 0.0
    %3181 = vmatpush.msra.mxu0 0.0
    %3182 = vmatpush.msra.mxu0 0.0
    %3183 = vmatpush.msra.mxu0 0.0
    %3184 = vmatpush.msra.mxu0 0.0
    %3185 = vmatpush.msra.mxu0 0.0
    %3186 = vmatpush.msra.mxu0 0.0
    %v3187 = vand.u32 %v3116, 4294901760
    %v3188 = vsub.f32 %v3116, %v3187
    %3189 = vmatpush.msra.mxu0 %v3188
    %v3190 = vand.u32 %v3118, 4294901760
    %v3191 = vsub.f32 %v3118, %v3190
    %3192 = vmatmul.f32.gmra.mxu0 %v3191
    %v3193 = vpop.f32.mrf.mxu0
    %v3194 = vadd.f32 %v3170, %v3193
    %3195 = vdwg.mxu0
    %3196 = vmatpush.msra.mxu0 0.0
    %3197 = vmatpush.msra.mxu0 0.0
    %3198 = vmatpush.msra.mxu0 0.0
    %3199 = vmatpush.msra.mxu0 0.0
    %3200 = vmatpush.msra.mxu0 0.0
    %3201 = vmatpush.msra.mxu0 0.0
    %3202 = vmatpush.msra.mxu0 0.0
    %3203 = vmatpush.msra.mxu0 0.0
    %3204 = vmatpush.msra.mxu0 0.0
    %3205 = vmatpush.msra.mxu0 0.0
    %3206 = vmatpush.msra.mxu0 0.0
    %3207 = vmatpush.msra.mxu0 0.0
    %3208 = vmatpush.msra.mxu0 0.0
    %3209 = vmatpush.msra.mxu0 0.0
    %3210 = vmatpush.msra.mxu0 0.0
    %v3211 = vand.u32 %v3116, 4294901760
    %3212 = vmatpush.msra.mxu0 %v3211
    %v3213 = vand.u32 %v3118, 4294901760
    %v3214 = vsub.f32 %v3118, %v3213
    %v3215 = vand.u32 %v3214, 4294901760
    %3216 = vmatmul.f32.gmra.mxu0 %v3215
    %v3217 = vpop.f32.mrf.mxu0
    %v3218 = vadd.f32 %v3194, %v3217
    %3219 = vdwg.mxu0
    %3220 = vmatpush.msra.mxu0 0.0
    %3221 = vmatpush.msra.mxu0 0.0
    %3222 = vmatpush.msra.mxu0 0.0
    %3223 = vmatpush.msra.mxu0 0.0
    %3224 = vmatpush.msra.mxu0 0.0
    %3225 = vmatpush.msra.mxu0 0.0
    %3226 = vmatpush.msra.mxu0 0.0
    %3227 = vmatpush.msra.mxu0 0.0
    %3228 = vmatpush.msra.mxu0 0.0
    %3229 = vmatpush.msra.mxu0 0.0
    %3230 = vmatpush.msra.mxu0 0.0
    %3231 = vmatpush.msra.mxu0 0.0
    %3232 = vmatpush.msra.mxu0 0.0
    %3233 = vmatpush.msra.mxu0 0.0
    %3234 = vmatpush.msra.mxu0 0.0
    %v3235 = vand.u32 %v3116, 4294901760
    %v3236 = vsub.f32 %v3116, %v3235
    %v3237 = vand.u32 %v3236, 4294901760
    %3238 = vmatpush.msra.mxu0 %v3237
    %v3239 = vand.u32 %v3118, 4294901760
    %3240 = vmatmul.f32.gmra.mxu0 %v3239
    %v3241 = vpop.f32.mrf.mxu0
    %v3242 = vadd.f32 %v3218, %v3241
    %3243 = vdwg.mxu0
    %3244 = vmatpush.msra.mxu0 0.0
    %3245 = vmatpush.msra.mxu0 0.0
    %3246 = vmatpush.msra.mxu0 0.0
    %3247 = vmatpush.msra.mxu0 0.0
    %3248 = vmatpush.msra.mxu0 0.0
    %3249 = vmatpush.msra.mxu0 0.0
    %3250 = vmatpush.msra.mxu0 0.0
    %3251 = vmatpush.msra.mxu0 0.0
    %3252 = vmatpush.msra.mxu0 0.0
    %3253 = vmatpush.msra.mxu0 0.0
    %3254 = vmatpush.msra.mxu0 0.0
    %3255 = vmatpush.msra.mxu0 0.0
    %3256 = vmatpush.msra.mxu0 0.0
    %3257 = vmatpush.msra.mxu0 0.0
    %3258 = vmatpush.msra.mxu0 0.0
    %v3259 = vand.u32 %v3116, 4294901760
    %3260 = vmatpush.msra.mxu0 %v3259
    %v3261 = vand.u32 %v3118, 4294901760
    %3262 = vmatmul.f32.gmra.mxu0 %v3261
    %v3263 = vpop.f32.mrf.mxu0
    %v3264 = vadd.f32 %v3242, %v3263
    %3265 = vdwg.mxu0
    %v3266 = vadd.f32 %v2964, %v3264
    %v3267 = vld [vmem:[#allocation9 + $0x18] sm:$0xff]
    %v3269 = vsel %vm219, %v3267, 0
    %3271 = vmatpush.xpose.msra.mxu0 0.0
    %3272 = vmatpush.xpose.msra.mxu0 0.0
    %3273 = vmatpush.xpose.msra.mxu0 0.0
    %3274 = vmatpush.xpose.msra.mxu0 0.0
    %3275 = vmatpush.xpose.msra.mxu0 0.0
    %3276 = vmatpush.xpose.msra.mxu0 0.0
    %3277 = vmatpush.xpose.msra.mxu0 0.0
    %3278 = vmatpush.xpose.msra.mxu0 0.0
    %3279 = vmatpush.xpose.msra.mxu0 0.0
    %3280 = vmatpush.xpose.msra.mxu0 0.0
    %3281 = vmatpush.xpose.msra.mxu0 0.0
    %3282 = vmatpush.xpose.msra.mxu0 0.0
    %3283 = vmatpush.xpose.msra.mxu0 0.0
    %3284 = vmatpush.xpose.msra.mxu0 0.0
    %3285 = vmatpush.xpose.msra.mxu0 0.0
    %v3286 = vand.u32 %v2368, 4294901760
    %3287 = vmatpush.xpose.msra.mxu0 %v3286
    %v3288 = vand.u32 %v3269, 4294901760
    %v3289 = vsub.f32 %v3269, %v3288
    %v3290 = vand.u32 %v3289, 4294901760
    %v3291 = vsub.f32 %v3289, %v3290
    %v3292 = vand.u32 %v3291, 4294901760
    %3293 = vmatmul.f32.gmra.mxu0 %v3292
    %v3294 = vpop.f32.mrf.mxu0
    %v3295 = vadd.f32 0.0, %v3294
    %3296 = vdwg.mxu0
    %3297 = vmatpush.xpose.msra.mxu0 0.0
    %3298 = vmatpush.xpose.msra.mxu0 0.0
    %3299 = vmatpush.xpose.msra.mxu0 0.0
    %3300 = vmatpush.xpose.msra.mxu0 0.0
    %3301 = vmatpush.xpose.msra.mxu0 0.0
    %3302 = vmatpush.xpose.msra.mxu0 0.0
    %3303 = vmatpush.xpose.msra.mxu0 0.0
    %3304 = vmatpush.xpose.msra.mxu0 0.0
    %3305 = vmatpush.xpose.msra.mxu0 0.0
    %3306 = vmatpush.xpose.msra.mxu0 0.0
    %3307 = vmatpush.xpose.msra.mxu0 0.0
    %3308 = vmatpush.xpose.msra.mxu0 0.0
    %3309 = vmatpush.xpose.msra.mxu0 0.0
    %3310 = vmatpush.xpose.msra.mxu0 0.0
    %3311 = vmatpush.xpose.msra.mxu0 0.0
    %v3312 = vand.u32 %v2368, 4294901760
    %v3313 = vsub.f32 %v2368, %v3312
    %v3314 = vand.u32 %v3313, 4294901760
    %v3315 = vsub.f32 %v3313, %v3314
    %v3316 = vand.u32 %v3315, 4294901760
    %3317 = vmatpush.xpose.msra.mxu0 %v3316
    %v3318 = vand.u32 %v3269, 4294901760
    %3319 = vmatmul.f32.gmra.mxu0 %v3318
    %v3320 = vpop.f32.mrf.mxu0
    %v3321 = vadd.f32 %v3295, %v3320
    %3322 = vdwg.mxu0
    %3323 = vmatpush.xpose.msra.mxu0 0.0
    %3324 = vmatpush.xpose.msra.mxu0 0.0
    %3325 = vmatpush.xpose.msra.mxu0 0.0
    %3326 = vmatpush.xpose.msra.mxu0 0.0
    %3327 = vmatpush.xpose.msra.mxu0 0.0
    %3328 = vmatpush.xpose.msra.mxu0 0.0
    %3329 = vmatpush.xpose.msra.mxu0 0.0
    %3330 = vmatpush.xpose.msra.mxu0 0.0
    %3331 = vmatpush.xpose.msra.mxu0 0.0
    %3332 = vmatpush.xpose.msra.mxu0 0.0
    %3333 = vmatpush.xpose.msra.mxu0 0.0
    %3334 = vmatpush.xpose.msra.mxu0 0.0
    %3335 = vmatpush.xpose.msra.mxu0 0.0
    %3336 = vmatpush.xpose.msra.mxu0 0.0
    %3337 = vmatpush.xpose.msra.mxu0 0.0
    %v3338 = vand.u32 %v2368, 4294901760
    %v3339 = vsub.f32 %v2368, %v3338
    %3340 = vmatpush.xpose.msra.mxu0 %v3339
    %v3341 = vand.u32 %v3269, 4294901760
    %v3342 = vsub.f32 %v3269, %v3341
    %3343 = vmatmul.f32.gmra.mxu0 %v3342
    %v3344 = vpop.f32.mrf.mxu0
    %v3345 = vadd.f32 %v3321, %v3344
    %3346 = vdwg.mxu0
    %3347 = vmatpush.xpose.msra.mxu0 0.0
    %3348 = vmatpush.xpose.msra.mxu0 0.0
    %3349 = vmatpush.xpose.msra.mxu0 0.0
    %3350 = vmatpush.xpose.msra.mxu0 0.0
    %3351 = vmatpush.xpose.msra.mxu0 0.0
    %3352 = vmatpush.xpose.msra.mxu0 0.0
    %3353 = vmatpush.xpose.msra.mxu0 0.0
    %3354 = vmatpush.xpose.msra.mxu0 0.0
    %3355 = vmatpush.xpose.msra.mxu0 0.0
    %3356 = vmatpush.xpose.msra.mxu0 0.0
    %3357 = vmatpush.xpose.msra.mxu0 0.0
    %3358 = vmatpush.xpose.msra.mxu0 0.0
    %3359 = vmatpush.xpose.msra.mxu0 0.0
    %3360 = vmatpush.xpose.msra.mxu0 0.0
    %3361 = vmatpush.xpose.msra.mxu0 0.0
    %v3362 = vand.u32 %v2368, 4294901760
    %3363 = vmatpush.xpose.msra.mxu0 %v3362
    %v3364 = vand.u32 %v3269, 4294901760
    %v3365 = vsub.f32 %v3269, %v3364
    %v3366 = vand.u32 %v3365, 4294901760
    %3367 = vmatmul.f32.gmra.mxu0 %v3366
    %v3368 = vpop.f32.mrf.mxu0
    %v3369 = vadd.f32 %v3345, %v3368
    %3370 = vdwg.mxu0
    %3371 = vmatpush.xpose.msra.mxu0 0.0
    %3372 = vmatpush.xpose.msra.mxu0 0.0
    %3373 = vmatpush.xpose.msra.mxu0 0.0
    %3374 = vmatpush.xpose.msra.mxu0 0.0
    %3375 = vmatpush.xpose.msra.mxu0 0.0
    %3376 = vmatpush.xpose.msra.mxu0 0.0
    %3377 = vmatpush.xpose.msra.mxu0 0.0
    %3378 = vmatpush.xpose.msra.mxu0 0.0
    %3379 = vmatpush.xpose.msra.mxu0 0.0
    %3380 = vmatpush.xpose.msra.mxu0 0.0
    %3381 = vmatpush.xpose.msra.mxu0 0.0
    %3382 = vmatpush.xpose.msra.mxu0 0.0
    %3383 = vmatpush.xpose.msra.mxu0 0.0
    %3384 = vmatpush.xpose.msra.mxu0 0.0
    %3385 = vmatpush.xpose.msra.mxu0 0.0
    %v3386 = vand.u32 %v2368, 4294901760
    %v3387 = vsub.f32 %v2368, %v3386
    %v3388 = vand.u32 %v3387, 4294901760
    %3389 = vmatpush.xpose.msra.mxu0 %v3388
    %v3390 = vand.u32 %v3269, 4294901760
    %3391 = vmatmul.f32.gmra.mxu0 %v3390
    %v3392 = vpop.f32.mrf.mxu0
    %v3393 = vadd.f32 %v3369, %v3392
    %3394 = vdwg.mxu0
    %3395 = vmatpush.xpose.msra.mxu0 0.0
    %3396 = vmatpush.xpose.msra.mxu0 0.0
    %3397 = vmatpush.xpose.msra.mxu0 0.0
    %3398 = vmatpush.xpose.msra.mxu0 0.0
    %3399 = vmatpush.xpose.msra.mxu0 0.0
    %3400 = vmatpush.xpose.msra.mxu0 0.0
    %3401 = vmatpush.xpose.msra.mxu0 0.0
    %3402 = vmatpush.xpose.msra.mxu0 0.0
    %3403 = vmatpush.xpose.msra.mxu0 0.0
    %3404 = vmatpush.xpose.msra.mxu0 0.0
    %3405 = vmatpush.xpose.msra.mxu0 0.0
    %3406 = vmatpush.xpose.msra.mxu0 0.0
    %3407 = vmatpush.xpose.msra.mxu0 0.0
    %3408 = vmatpush.xpose.msra.mxu0 0.0
    %3409 = vmatpush.xpose.msra.mxu0 0.0
    %v3410 = vand.u32 %v2368, 4294901760
    %3411 = vmatpush.xpose.msra.mxu0 %v3410
    %v3412 = vand.u32 %v3269, 4294901760
    %3413 = vmatmul.f32.gmra.mxu0 %v3412
    %v3414 = vpop.f32.mrf.mxu0
    %v3415 = vadd.f32 %v3393, %v3414
    %3416 = vdwg.mxu0
    %v3417 = vld [vmem:[#allocation6 + $0x18] sm:$0xff]
    %v3419 = vsel %vm673, %v3415, 0
    %3421 = vmatpush.msra.mxu0 0.0
    %3422 = vmatpush.msra.mxu0 0.0
    %3423 = vmatpush.msra.mxu0 0.0
    %3424 = vmatpush.msra.mxu0 0.0
    %3425 = vmatpush.msra.mxu0 0.0
    %3426 = vmatpush.msra.mxu0 0.0
    %3427 = vmatpush.msra.mxu0 0.0
    %3428 = vmatpush.msra.mxu0 0.0
    %3429 = vmatpush.msra.mxu0 0.0
    %3430 = vmatpush.msra.mxu0 0.0
    %3431 = vmatpush.msra.mxu0 0.0
    %3432 = vmatpush.msra.mxu0 0.0
    %3433 = vmatpush.msra.mxu0 0.0
    %3434 = vmatpush.msra.mxu0 0.0
    %3435 = vmatpush.msra.mxu0 0.0
    %v3436 = vand.u32 %v3417, 4294901760
    %3437 = vmatpush.msra.mxu0 %v3436
    %v3438 = vand.u32 %v3419, 4294901760
    %v3439 = vsub.f32 %v3419, %v3438
    %v3440 = vand.u32 %v3439, 4294901760
    %v3441 = vsub.f32 %v3439, %v3440
    %v3442 = vand.u32 %v3441, 4294901760
    %3443 = vmatmul.f32.gmra.mxu0 %v3442
    %v3444 = vpop.f32.mrf.mxu0
    %v3445 = vadd.f32 0.0, %v3444
    %3446 = vdwg.mxu0
    %3447 = vmatpush.msra.mxu0 0.0
    %3448 = vmatpush.msra.mxu0 0.0
    %3449 = vmatpush.msra.mxu0 0.0
    %3450 = vmatpush.msra.mxu0 0.0
    %3451 = vmatpush.msra.mxu0 0.0
    %3452 = vmatpush.msra.mxu0 0.0
    %3453 = vmatpush.msra.mxu0 0.0
    %3454 = vmatpush.msra.mxu0 0.0
    %3455 = vmatpush.msra.mxu0 0.0
    %3456 = vmatpush.msra.mxu0 0.0
    %3457 = vmatpush.msra.mxu0 0.0
    %3458 = vmatpush.msra.mxu0 0.0
    %3459 = vmatpush.msra.mxu0 0.0
    %3460 = vmatpush.msra.mxu0 0.0
    %3461 = vmatpush.msra.mxu0 0.0
    %v3462 = vand.u32 %v3417, 4294901760
    %v3463 = vsub.f32 %v3417, %v3462
    %v3464 = vand.u32 %v3463, 4294901760
    %v3465 = vsub.f32 %v3463, %v3464
    %v3466 = vand.u32 %v3465, 4294901760
    %3467 = vmatpush.msra.mxu0 %v3466
    %v3468 = vand.u32 %v3419, 4294901760
    %3469 = vmatmul.f32.gmra.mxu0 %v3468
    %v3470 = vpop.f32.mrf.mxu0
    %v3471 = vadd.f32 %v3445, %v3470
    %3472 = vdwg.mxu0
    %3473 = vmatpush.msra.mxu0 0.0
    %3474 = vmatpush.msra.mxu0 0.0
    %3475 = vmatpush.msra.mxu0 0.0
    %3476 = vmatpush.msra.mxu0 0.0
    %3477 = vmatpush.msra.mxu0 0.0
    %3478 = vmatpush.msra.mxu0 0.0
    %3479 = vmatpush.msra.mxu0 0.0
    %3480 = vmatpush.msra.mxu0 0.0
    %3481 = vmatpush.msra.mxu0 0.0
    %3482 = vmatpush.msra.mxu0 0.0
    %3483 = vmatpush.msra.mxu0 0.0
    %3484 = vmatpush.msra.mxu0 0.0
    %3485 = vmatpush.msra.mxu0 0.0
    %3486 = vmatpush.msra.mxu0 0.0
    %3487 = vmatpush.msra.mxu0 0.0
    %v3488 = vand.u32 %v3417, 4294901760
    %v3489 = vsub.f32 %v3417, %v3488
    %3490 = vmatpush.msra.mxu0 %v3489
    %v3491 = vand.u32 %v3419, 4294901760
    %v3492 = vsub.f32 %v3419, %v3491
    %3493 = vmatmul.f32.gmra.mxu0 %v3492
    %v3494 = vpop.f32.mrf.mxu0
    %v3495 = vadd.f32 %v3471, %v3494
    %3496 = vdwg.mxu0
    %3497 = vmatpush.msra.mxu0 0.0
    %3498 = vmatpush.msra.mxu0 0.0
    %3499 = vmatpush.msra.mxu0 0.0
    %3500 = vmatpush.msra.mxu0 0.0
    %3501 = vmatpush.msra.mxu0 0.0
    %3502 = vmatpush.msra.mxu0 0.0
    %3503 = vmatpush.msra.mxu0 0.0
    %3504 = vmatpush.msra.mxu0 0.0
    %3505 = vmatpush.msra.mxu0 0.0
    %3506 = vmatpush.msra.mxu0 0.0
    %3507 = vmatpush.msra.mxu0 0.0
    %3508 = vmatpush.msra.mxu0 0.0
    %3509 = vmatpush.msra.mxu0 0.0
    %3510 = vmatpush.msra.mxu0 0.0
    %3511 = vmatpush.msra.mxu0 0.0
    %v3512 = vand.u32 %v3417, 4294901760
    %3513 = vmatpush.msra.mxu0 %v3512
    %v3514 = vand.u32 %v3419, 4294901760
    %v3515 = vsub.f32 %v3419, %v3514
    %v3516 = vand.u32 %v3515, 4294901760
    %3517 = vmatmul.f32.gmra.mxu0 %v3516
    %v3518 = vpop.f32.mrf.mxu0
    %v3519 = vadd.f32 %v3495, %v3518
    %3520 = vdwg.mxu0
    %3521 = vmatpush.msra.mxu0 0.0
    %3522 = vmatpush.msra.mxu0 0.0
    %3523 = vmatpush.msra.mxu0 0.0
    %3524 = vmatpush.msra.mxu0 0.0
    %3525 = vmatpush.msra.mxu0 0.0
    %3526 = vmatpush.msra.mxu0 0.0
    %3527 = vmatpush.msra.mxu0 0.0
    %3528 = vmatpush.msra.mxu0 0.0
    %3529 = vmatpush.msra.mxu0 0.0
    %3530 = vmatpush.msra.mxu0 0.0
    %3531 = vmatpush.msra.mxu0 0.0
    %3532 = vmatpush.msra.mxu0 0.0
    %3533 = vmatpush.msra.mxu0 0.0
    %3534 = vmatpush.msra.mxu0 0.0
    %3535 = vmatpush.msra.mxu0 0.0
    %v3536 = vand.u32 %v3417, 4294901760
    %v3537 = vsub.f32 %v3417, %v3536
    %v3538 = vand.u32 %v3537, 4294901760
    %3539 = vmatpush.msra.mxu0 %v3538
    %v3540 = vand.u32 %v3419, 4294901760
    %3541 = vmatmul.f32.gmra.mxu0 %v3540
    %v3542 = vpop.f32.mrf.mxu0
    %v3543 = vadd.f32 %v3519, %v3542
    %3544 = vdwg.mxu0
    %3545 = vmatpush.msra.mxu0 0.0
    %3546 = vmatpush.msra.mxu0 0.0
    %3547 = vmatpush.msra.mxu0 0.0
    %3548 = vmatpush.msra.mxu0 0.0
    %3549 = vmatpush.msra.mxu0 0.0
    %3550 = vmatpush.msra.mxu0 0.0
    %3551 = vmatpush.msra.mxu0 0.0
    %3552 = vmatpush.msra.mxu0 0.0
    %3553 = vmatpush.msra.mxu0 0.0
    %3554 = vmatpush.msra.mxu0 0.0
    %3555 = vmatpush.msra.mxu0 0.0
    %3556 = vmatpush.msra.mxu0 0.0
    %3557 = vmatpush.msra.mxu0 0.0
    %3558 = vmatpush.msra.mxu0 0.0
    %3559 = vmatpush.msra.mxu0 0.0
    %v3560 = vand.u32 %v3417, 4294901760
    %3561 = vmatpush.msra.mxu0 %v3560
    %v3562 = vand.u32 %v3419, 4294901760
    %3563 = vmatmul.f32.gmra.mxu0 %v3562
    %v3564 = vpop.f32.mrf.mxu0
    %v3565 = vadd.f32 %v3543, %v3564
    %3566 = vdwg.mxu0
    %v3567 = vadd.f32 %v3266, %v3565
    %3568 = vst.msk [vmem:[#allocation2 + $0x8] sm:$0xff] %vm219, %v3567
    %v3569 = vld [vmem:[#allocation2] sm:$0xff]
    %v3570 = vld [vmem:[#allocation2 + $0x8] sm:$0xff]
    %v3571 = vadd.f32 %v217, %v3569
    %v3572 = vadd.f32 %v218, %v3570
    %v3573 = vld [vmem:[#allocation8] sm:$0x1]
    %v3575 = vperm.slane %v3573, 0
    %v3577 = vadd.f32 %v3571, %v3575
    %v3578 = vadd.f32 %v3572, %v3575
    %v3579 = vsel %vm219, %v3577, 0.0
    %3580 = vadd.xlane.f32.xlu0 %v3579
    %v3581 = vpop.xlane.xlu0 %3580
    %v3582 = vsel %vm219, %v3578, 0.0
    %3583 = vadd.xlane.f32.xlu0 %v3582
    %v3584 = vpop.xlane.xlu0 %3583
    %v3585 = vmul.f32 %v3581, %v232
    %v3586 = vmul.f32 %v3584, %v232
    %v3587 = vsub.f32 %v3577, %v3585
    %v3588 = vsub.f32 %v3578, %v3586
    %v3589 = vmul.f32 %v3587, %v3587
    %v3590 = vmul.f32 %v3588, %v3588
    %v3591 = vsel %vm219, %v3589, 0.0
    %3592 = vadd.xlane.f32.xlu0 %v3591
    %v3593 = vpop.xlane.xlu0 %3592
    %v3594 = vsel %vm219, %v3590, 0.0
    %3595 = vadd.xlane.f32.xlu0 %v3594
    %v3596 = vpop.xlane.xlu0 %3595
    %v3597 = vmul.f32 %v3593, 0.032258064
    %v3598 = vmul.f32 %v3596, 0.032258064
    %v3599 = vrsqrt.pop %v3597
    %v3600 = vmul.f32 %v3599, %v3597
    %v3601 = vmul.f32 %v3600, %v3599
    %v3602 = vmul.f32 0.5, %v3601
    %v3603 = vsub.f32 1.5, %v3602
    %v3604 = vmul.f32 %v3599, %v3603
    %v3605 = vmul.f32 %v3597, %v3604
    %vm3606 = vcmp.eq.f32.partialorder %v3597, inf
    %v3607 = vsel %vm3606, %v3597, %v3605
    %vm3608 = vcmp.eq.f32.partialorder %v3597, 0.0
    %v3609 = vand.u32 %v3597, 2147483648
    %v3610 = vsel %vm3608, %v3609, %v3607
    %v3611 = vrsqrt.pop %v3598
    %v3612 = vmul.f32 %v3611, %v3598
    %v3613 = vmul.f32 %v3612, %v3611
    %v3614 = vmul.f32 0.5, %v3613
    %v3615 = vsub.f32 1.5, %v3614
    %v3616 = vmul.f32 %v3611, %v3615
    %v3617 = vmul.f32 %v3598, %v3616
    %vm3618 = vcmp.eq.f32.partialorder %v3598, inf
    %v3619 = vsel %vm3618, %v3598, %v3617
    %vm3620 = vcmp.eq.f32.partialorder %v3598, 0.0
    %v3621 = vand.u32 %v3598, 2147483648
    %v3622 = vsel %vm3620, %v3621, %v3619
    %v3623 = vld [vmem:[%s10] sm:$0x1]
    %v3625 = vperm.slane %v3623, 0
    %v3627 = vmul.f32 %v3625, %v3587
    %v3628 = vmul.f32 %v3625, %v3588
    %v3629 = vadd.f32 %v3610, 1e-06
    %v3630 = vadd.f32 %v3622, 1e-06
    %v3631 = vrcp.pop %v3629
    %v3632 = vrcp.pop %v3630
    %v3633 = vmul.f32 %v3627, %v3631
    %v3634 = vmul.f32 %v3628, %v3632
    %v3635 = vld [vmem:[%s11] sm:$0x1]
    %v3637 = vperm.slane %v3635, 0
    %v3639 = vadd.f32 %v3633, %v3637
    %v3640 = vadd.f32 %v3634, %v3637
    %v3641 = vld [vmem:[#allocation11] sm:$0xff]
    %v3642 = vld [vmem:[#allocation11 + $0x8] sm:$0xff]
    %v3643 = vld [vmem:[#allocation11 + $0x10] sm:$0xff]
    %v3644 = vld [vmem:[#allocation11 + $0x18] sm:$0xff]
    %v3645 = vld [vmem:[#allocation12] sm:$0x1]
    %v3647 = vperm.slane %v3645, 0
    %v3650 = vsel %vm219, %v3639, 0
    %v3653 = vsel %vm219, %v3640, 0
    %3655 = vmatpush.msra.mxu0 0.0
    %3656 = vmatpush.msra.mxu0 0.0
    %3657 = vmatpush.msra.mxu0 0.0
    %3658 = vmatpush.msra.mxu0 0.0
    %3659 = vmatpush.msra.mxu0 0.0
    %3660 = vmatpush.msra.mxu0 0.0
    %3661 = vmatpush.msra.mxu0 0.0
    %3662 = vmatpush.msra.mxu0 0.0
    %3663 = vmatpush.msra.mxu0 0.0
    %3664 = vmatpush.msra.mxu0 0.0
    %3665 = vmatpush.msra.mxu0 0.0
    %3666 = vmatpush.msra.mxu0 0.0
    %v3667 = vand.u32 %v3644, 4294901760
    %3668 = vmatpush.msra.mxu0 %v3667
    %v3669 = vand.u32 %v3643, 4294901760
    %3670 = vmatpush.msra.mxu0 %v3669
    %v3671 = vand.u32 %v3642, 4294901760
    %3672 = vmatpush.msra.mxu0 %v3671
    %v3673 = vand.u32 %v3641, 4294901760
    %3674 = vmatpush.msra.mxu0 %v3673
    %v3675 = vand.u32 %v3650, 4294901760
    %v3676 = vsub.f32 %v3650, %v3675
    %v3677 = vand.u32 %v3676, 4294901760
    %v3678 = vsub.f32 %v3676, %v3677
    %v3679 = vand.u32 %v3678, 4294901760
    %3680 = vmatmul.f32.gmra.mxu0 %v3679
    %v3681 = vpop.f32.mrf.mxu0
    %v3682 = vadd.f32 %v3647, %v3681
    %v3683 = vand.u32 %v3653, 4294901760
    %v3684 = vsub.f32 %v3653, %v3683
    %v3685 = vand.u32 %v3684, 4294901760
    %v3686 = vsub.f32 %v3684, %v3685
    %v3687 = vand.u32 %v3686, 4294901760
    %3688 = vmatmul.f32.gmra.mxu0 %v3687
    %v3689 = vpop.f32.mrf.mxu0
    %v3690 = vadd.f32 %v3647, %v3689
    %3691 = vdwg.mxu0
    %3692 = vmatpush.msra.mxu0 0.0
    %3693 = vmatpush.msra.mxu0 0.0
    %3694 = vmatpush.msra.mxu0 0.0
    %3695 = vmatpush.msra.mxu0 0.0
    %3696 = vmatpush.msra.mxu0 0.0
    %3697 = vmatpush.msra.mxu0 0.0
    %3698 = vmatpush.msra.mxu0 0.0
    %3699 = vmatpush.msra.mxu0 0.0
    %3700 = vmatpush.msra.mxu0 0.0
    %3701 = vmatpush.msra.mxu0 0.0
    %3702 = vmatpush.msra.mxu0 0.0
    %3703 = vmatpush.msra.mxu0 0.0
    %v3704 = vand.u32 %v3644, 4294901760
    %v3705 = vsub.f32 %v3644, %v3704
    %v3706 = vand.u32 %v3705, 4294901760
    %v3707 = vsub.f32 %v3705, %v3706
    %v3708 = vand.u32 %v3707, 4294901760
    %3709 = vmatpush.msra.mxu0 %v3708
    %v3710 = vand.u32 %v3643, 4294901760
    %v3711 = vsub.f32 %v3643, %v3710
    %v3712 = vand.u32 %v3711, 4294901760
    %v3713 = vsub.f32 %v3711, %v3712
    %v3714 = vand.u32 %v3713, 4294901760
    %3715 = vmatpush.msra.mxu0 %v3714
    %v3716 = vand.u32 %v3642, 4294901760
    %v3717 = vsub.f32 %v3642, %v3716
    %v3718 = vand.u32 %v3717, 4294901760
    %v3719 = vsub.f32 %v3717, %v3718
    %v3720 = vand.u32 %v3719, 4294901760
    %3721 = vmatpush.msra.mxu0 %v3720
    %v3722 = vand.u32 %v3641, 4294901760
    %v3723 = vsub.f32 %v3641, %v3722
    %v3724 = vand.u32 %v3723, 4294901760
    %v3725 = vsub.f32 %v3723, %v3724
    %v3726 = vand.u32 %v3725, 4294901760
    %3727 = vmatpush.msra.mxu0 %v3726
    %v3728 = vand.u32 %v3650, 4294901760
    %3729 = vmatmul.f32.gmra.mxu0 %v3728
    %v3730 = vpop.f32.mrf.mxu0
    %v3731 = vadd.f32 %v3682, %v3730
    %v3732 = vand.u32 %v3653, 4294901760
    %3733 = vmatmul.f32.gmra.mxu0 %v3732
    %v3734 = vpop.f32.mrf.mxu0
    %v3735 = vadd.f32 %v3690, %v3734
    %3736 = vdwg.mxu0
    %3737 = vmatpush.msra.mxu0 0.0
    %3738 = vmatpush.msra.mxu0 0.0
    %3739 = vmatpush.msra.mxu0 0.0
    %3740 = vmatpush.msra.mxu0 0.0
    %3741 = vmatpush.msra.mxu0 0.0
    %3742 = vmatpush.msra.mxu0 0.0
    %3743 = vmatpush.msra.mxu0 0.0
    %3744 = vmatpush.msra.mxu0 0.0
    %3745 = vmatpush.msra.mxu0 0.0
    %3746 = vmatpush.msra.mxu0 0.0
    %3747 = vmatpush.msra.mxu0 0.0
    %3748 = vmatpush.msra.mxu0 0.0
    %v3749 = vand.u32 %v3644, 4294901760
    %v3750 = vsub.f32 %v3644, %v3749
    %3751 = vmatpush.msra.mxu0 %v3750
    %v3752 = vand.u32 %v3643, 4294901760
    %v3753 = vsub.f32 %v3643, %v3752
    %3754 = vmatpush.msra.mxu0 %v3753
    %v3755 = vand.u32 %v3642, 4294901760
    %v3756 = vsub.f32 %v3642, %v3755
    %3757 = vmatpush.msra.mxu0 %v3756
    %v3758 = vand.u32 %v3641, 4294901760
    %v3759 = vsub.f32 %v3641, %v3758
    %3760 = vmatpush.msra.mxu0 %v3759
    %v3761 = vand.u32 %v3650, 4294901760
    %v3762 = vsub.f32 %v3650, %v3761
    %3763 = vmatmul.f32.gmra.mxu0 %v3762
    %v3764 = vpop.f32.mrf.mxu0
    %v3765 = vadd.f32 %v3731, %v3764
    %v3766 = vand.u32 %v3653, 4294901760
    %v3767 = vsub.f32 %v3653, %v3766
    %3768 = vmatmul.f32.gmra.mxu0 %v3767
    %v3769 = vpop.f32.mrf.mxu0
    %v3770 = vadd.f32 %v3735, %v3769
    %3771 = vdwg.mxu0
    %3772 = vmatpush.msra.mxu0 0.0
    %3773 = vmatpush.msra.mxu0 0.0
    %3774 = vmatpush.msra.mxu0 0.0
    %3775 = vmatpush.msra.mxu0 0.0
    %3776 = vmatpush.msra.mxu0 0.0
    %3777 = vmatpush.msra.mxu0 0.0
    %3778 = vmatpush.msra.mxu0 0.0
    %3779 = vmatpush.msra.mxu0 0.0
    %3780 = vmatpush.msra.mxu0 0.0
    %3781 = vmatpush.msra.mxu0 0.0
    %3782 = vmatpush.msra.mxu0 0.0
    %3783 = vmatpush.msra.mxu0 0.0
    %v3784 = vand.u32 %v3644, 4294901760
    %3785 = vmatpush.msra.mxu0 %v3784
    %v3786 = vand.u32 %v3643, 4294901760
    %3787 = vmatpush.msra.mxu0 %v3786
    %v3788 = vand.u32 %v3642, 4294901760
    %3789 = vmatpush.msra.mxu0 %v3788
    %v3790 = vand.u32 %v3641, 4294901760
    %3791 = vmatpush.msra.mxu0 %v3790
    %v3792 = vand.u32 %v3650, 4294901760
    %v3793 = vsub.f32 %v3650, %v3792
    %v3794 = vand.u32 %v3793, 4294901760
    %3795 = vmatmul.f32.gmra.mxu0 %v3794
    %v3796 = vpop.f32.mrf.mxu0
    %v3797 = vadd.f32 %v3765, %v3796
    %v3798 = vand.u32 %v3653, 4294901760
    %v3799 = vsub.f32 %v3653, %v3798
    %v3800 = vand.u32 %v3799, 4294901760
    %3801 = vmatmul.f32.gmra.mxu0 %v3800
    %v3802 = vpop.f32.mrf.mxu0
    %v3803 = vadd.f32 %v3770, %v3802
    %3804 = vdwg.mxu0
    %3805 = vmatpush.msra.mxu0 0.0
    %3806 = vmatpush.msra.mxu0 0.0
    %3807 = vmatpush.msra.mxu0 0.0
    %3808 = vmatpush.msra.mxu0 0.0
    %3809 = vmatpush.msra.mxu0 0.0
    %3810 = vmatpush.msra.mxu0 0.0
    %3811 = vmatpush.msra.mxu0 0.0
    %3812 = vmatpush.msra.mxu0 0.0
    %3813 = vmatpush.msra.mxu0 0.0
    %3814 = vmatpush.msra.mxu0 0.0
    %3815 = vmatpush.msra.mxu0 0.0
    %3816 = vmatpush.msra.mxu0 0.0
    %v3817 = vand.u32 %v3644, 4294901760
    %v3818 = vsub.f32 %v3644, %v3817
    %v3819 = vand.u32 %v3818, 4294901760
    %3820 = vmatpush.msra.mxu0 %v3819
    %v3821 = vand.u32 %v3643, 4294901760
    %v3822 = vsub.f32 %v3643, %v3821
    %v3823 = vand.u32 %v3822, 4294901760
    %3824 = vmatpush.msra.mxu0 %v3823
    %v3825 = vand.u32 %v3642, 4294901760
    %v3826 = vsub.f32 %v3642, %v3825
    %v3827 = vand.u32 %v3826, 4294901760
    %3828 = vmatpush.msra.mxu0 %v3827
    %v3829 = vand.u32 %v3641, 4294901760
    %v3830 = vsub.f32 %v3641, %v3829
    %v3831 = vand.u32 %v3830, 4294901760
    %3832 = vmatpush.msra.mxu0 %v3831
    %v3833 = vand.u32 %v3650, 4294901760
    %3834 = vmatmul.f32.gmra.mxu0 %v3833
    %v3835 = vpop.f32.mrf.mxu0
    %v3836 = vadd.f32 %v3797, %v3835
    %v3837 = vand.u32 %v3653, 4294901760
    %3838 = vmatmul.f32.gmra.mxu0 %v3837
    %v3839 = vpop.f32.mrf.mxu0
    %v3840 = vadd.f32 %v3803, %v3839
    %3841 = vdwg.mxu0
    %3842 = vmatpush.msra.mxu0 0.0
    %3843 = vmatpush.msra.mxu0 0.0
    %3844 = vmatpush.msra.mxu0 0.0
    %3845 = vmatpush.msra.mxu0 0.0
    %3846 = vmatpush.msra.mxu0 0.0
    %3847 = vmatpush.msra.mxu0 0.0
    %3848 = vmatpush.msra.mxu0 0.0
    %3849 = vmatpush.msra.mxu0 0.0
    %3850 = vmatpush.msra.mxu0 0.0
    %3851 = vmatpush.msra.mxu0 0.0
    %3852 = vmatpush.msra.mxu0 0.0
    %3853 = vmatpush.msra.mxu0 0.0
    %v3854 = vand.u32 %v3644, 4294901760
    %3855 = vmatpush.msra.mxu0 %v3854
    %v3856 = vand.u32 %v3643, 4294901760
    %3857 = vmatpush.msra.mxu0 %v3856
    %v3858 = vand.u32 %v3642, 4294901760
    %3859 = vmatpush.msra.mxu0 %v3858
    %v3860 = vand.u32 %v3641, 4294901760
    %3861 = vmatpush.msra.mxu0 %v3860
    %v3862 = vand.u32 %v3650, 4294901760
    %3863 = vmatmul.f32.gmra.mxu0 %v3862
    %v3864 = vpop.f32.mrf.mxu0
    %v3865 = vadd.f32 %v3836, %v3864
    %v3866 = vand.u32 %v3653, 4294901760
    %3867 = vmatmul.f32.gmra.mxu0 %v3866
    %v3868 = vpop.f32.mrf.mxu0
    %v3869 = vadd.f32 %v3840, %v3868
    %3870 = vdwg.mxu0
    %v3871 = vmax.f32 %v3865, 0.0
    %v3872 = vmax.f32 %v3869, 0.0
    %v3873 = vld [vmem:[#allocation14] sm:$0xff]
    %v3874 = vld [vmem:[#allocation14 + $0x8] sm:$0xff]
    %v3875 = vld [vmem:[#allocation14 + $0x10] sm:$0xff]
    %v3876 = vld [vmem:[#allocation14 + $0x18] sm:$0xff]
    %v3877 = vld [vmem:[#allocation14 + $0x20] sm:$0xff]
    %v3878 = vld [vmem:[#allocation14 + $0x28] sm:$0xff]
    %v3879 = vld [vmem:[#allocation14 + $0x30] sm:$0xff]
    %v3880 = vld [vmem:[#allocation14 + $0x38] sm:$0xff]
    %v3881 = vld [vmem:[#allocation14 + $0x40] sm:$0xff]
    %v3882 = vld [vmem:[#allocation14 + $0x48] sm:$0xff]
    %v3883 = vld [vmem:[#allocation14 + $0x50] sm:$0xff]
    %v3884 = vld [vmem:[#allocation14 + $0x58] sm:$0xff]
    %v3885 = vld [vmem:[#allocation14 + $0x60] sm:$0xff]
    %v3886 = vld [vmem:[#allocation14 + $0x68] sm:$0xff]
    %v3887 = vld [vmem:[#allocation14 + $0x70] sm:$0xff]
    %v3888 = vld [vmem:[#allocation14 + $0x78] sm:$0xff]
    %v3889 = vld [vmem:[#allocation15] sm:$0x1]
    %v3891 = vperm.slane %v3889, 0
    %v3893 = vand.u32 %v3888, 4294901760
    %3894 = vmatpush.msra.mxu0 %v3893
    %v3895 = vand.u32 %v3887, 4294901760
    %3896 = vmatpush.msra.mxu0 %v3895
    %v3897 = vand.u32 %v3886, 4294901760
    %3898 = vmatpush.msra.mxu0 %v3897
    %v3899 = vand.u32 %v3885, 4294901760
    %3900 = vmatpush.msra.mxu0 %v3899
    %v3901 = vand.u32 %v3884, 4294901760
    %3902 = vmatpush.msra.mxu0 %v3901
    %v3903 = vand.u32 %v3883, 4294901760
    %3904 = vmatpush.msra.mxu0 %v3903
    %v3905 = vand.u32 %v3882, 4294901760
    %3906 = vmatpush.msra.mxu0 %v3905
    %v3907 = vand.u32 %v3881, 4294901760
    %3908 = vmatpush.msra.mxu0 %v3907
    %v3909 = vand.u32 %v3880, 4294901760
    %3910 = vmatpush.msra.mxu0 %v3909
    %v3911 = vand.u32 %v3879, 4294901760
    %3912 = vmatpush.msra.mxu0 %v3911
    %v3913 = vand.u32 %v3878, 4294901760
    %3914 = vmatpush.msra.mxu0 %v3913
    %v3915 = vand.u32 %v3877, 4294901760
    %3916 = vmatpush.msra.mxu0 %v3915
    %v3917 = vand.u32 %v3876, 4294901760
    %3918 = vmatpush.msra.mxu0 %v3917
    %v3919 = vand.u32 %v3875, 4294901760
    %3920 = vmatpush.msra.mxu0 %v3919
    %v3921 = vand.u32 %v3874, 4294901760
    %3922 = vmatpush.msra.mxu0 %v3921
    %v3923 = vand.u32 %v3873, 4294901760
    %3924 = vmatpush.msra.mxu0 %v3923
    %v3925 = vand.u32 %v3871, 4294901760
    %v3926 = vsub.f32 %v3871, %v3925
    %v3927 = vand.u32 %v3926, 4294901760
    %v3928 = vsub.f32 %v3926, %v3927
    %v3929 = vand.u32 %v3928, 4294901760
    %3930 = vmatmul.f32.gmra.mxu0 %v3929
    %v3931 = vpop.f32.mrf.mxu0
    %v3932 = vadd.f32 %v3891, %v3931
    %v3933 = vand.u32 %v3872, 4294901760
    %v3934 = vsub.f32 %v3872, %v3933
    %v3935 = vand.u32 %v3934, 4294901760
    %v3936 = vsub.f32 %v3934, %v3935
    %v3937 = vand.u32 %v3936, 4294901760
    %3938 = vmatmul.f32.gmra.mxu0 %v3937
    %v3939 = vpop.f32.mrf.mxu0
    %v3940 = vadd.f32 %v3891, %v3939
    %3941 = vdwg.mxu0
    %v3942 = vand.u32 %v3888, 4294901760
    %v3943 = vsub.f32 %v3888, %v3942
    %v3944 = vand.u32 %v3943, 4294901760
    %v3945 = vsub.f32 %v3943, %v3944
    %v3946 = vand.u32 %v3945, 4294901760
    %3947 = vmatpush.msra.mxu0 %v3946
    %v3948 = vand.u32 %v3887, 4294901760
    %v3949 = vsub.f32 %v3887, %v3948
    %v3950 = vand.u32 %v3949, 4294901760
    %v3951 = vsub.f32 %v3949, %v3950
    %v3952 = vand.u32 %v3951, 4294901760
    %3953 = vmatpush.msra.mxu0 %v3952
    %v3954 = vand.u32 %v3886, 4294901760
    %v3955 = vsub.f32 %v3886, %v3954
    %v3956 = vand.u32 %v3955, 4294901760
    %v3957 = vsub.f32 %v3955, %v3956
    %v3958 = vand.u32 %v3957, 4294901760
    %3959 = vmatpush.msra.mxu0 %v3958
    %v3960 = vand.u32 %v3885, 4294901760
    %v3961 = vsub.f32 %v3885, %v3960
    %v3962 = vand.u32 %v3961, 4294901760
    %v3963 = vsub.f32 %v3961, %v3962
    %v3964 = vand.u32 %v3963, 4294901760
    %3965 = vmatpush.msra.mxu0 %v3964
    %v3966 = vand.u32 %v3884, 4294901760
    %v3967 = vsub.f32 %v3884, %v3966
    %v3968 = vand.u32 %v3967, 4294901760
    %v3969 = vsub.f32 %v3967, %v3968
    %v3970 = vand.u32 %v3969, 4294901760
    %3971 = vmatpush.msra.mxu0 %v3970
    %v3972 = vand.u32 %v3883, 4294901760
    %v3973 = vsub.f32 %v3883, %v3972
    %v3974 = vand.u32 %v3973, 4294901760
    %v3975 = vsub.f32 %v3973, %v3974
    %v3976 = vand.u32 %v3975, 4294901760
    %3977 = vmatpush.msra.mxu0 %v3976
    %v3978 = vand.u32 %v3882, 4294901760
    %v3979 = vsub.f32 %v3882, %v3978
    %v3980 = vand.u32 %v3979, 4294901760
    %v3981 = vsub.f32 %v3979, %v3980
    %v3982 = vand.u32 %v3981, 4294901760
    %3983 = vmatpush.msra.mxu0 %v3982
    %v3984 = vand.u32 %v3881, 4294901760
    %v3985 = vsub.f32 %v3881, %v3984
    %v3986 = vand.u32 %v3985, 4294901760
    %v3987 = vsub.f32 %v3985, %v3986
    %v3988 = vand.u32 %v3987, 4294901760
    %3989 = vmatpush.msra.mxu0 %v3988
    %v3990 = vand.u32 %v3880, 4294901760
    %v3991 = vsub.f32 %v3880, %v3990
    %v3992 = vand.u32 %v3991, 4294901760
    %v3993 = vsub.f32 %v3991, %v3992
    %v3994 = vand.u32 %v3993, 4294901760
    %3995 = vmatpush.msra.mxu0 %v3994
    %v3996 = vand.u32 %v3879, 4294901760
    %v3997 = vsub.f32 %v3879, %v3996
    %v3998 = vand.u32 %v3997, 4294901760
    %v3999 = vsub.f32 %v3997, %v3998
    %v4000 = vand.u32 %v3999, 4294901760
    %4001 = vmatpush.msra.mxu0 %v4000
    %v4002 = vand.u32 %v3878, 4294901760
    %v4003 = vsub.f32 %v3878, %v4002
    %v4004 = vand.u32 %v4003, 4294901760
    %v4005 = vsub.f32 %v4003, %v4004
    %v4006 = vand.u32 %v4005, 4294901760
    %4007 = vmatpush.msra.mxu0 %v4006
    %v4008 = vand.u32 %v3877, 4294901760
    %v4009 = vsub.f32 %v3877, %v4008
    %v4010 = vand.u32 %v4009, 4294901760
    %v4011 = vsub.f32 %v4009, %v4010
    %v4012 = vand.u32 %v4011, 4294901760
    %4013 = vmatpush.msra.mxu0 %v4012
    %v4014 = vand.u32 %v3876, 4294901760
    %v4015 = vsub.f32 %v3876, %v4014
    %v4016 = vand.u32 %v4015, 4294901760
    %v4017 = vsub.f32 %v4015, %v4016
    %v4018 = vand.u32 %v4017, 4294901760
    %4019 = vmatpush.msra.mxu0 %v4018
    %v4020 = vand.u32 %v3875, 4294901760
    %v4021 = vsub.f32 %v3875, %v4020
    %v4022 = vand.u32 %v4021, 4294901760
    %v4023 = vsub.f32 %v4021, %v4022
    %v4024 = vand.u32 %v4023, 4294901760
    %4025 = vmatpush.msra.mxu0 %v4024
    %v4026 = vand.u32 %v3874, 4294901760
    %v4027 = vsub.f32 %v3874, %v4026
    %v4028 = vand.u32 %v4027, 4294901760
    %v4029 = vsub.f32 %v4027, %v4028
    %v4030 = vand.u32 %v4029, 4294901760
    %4031 = vmatpush.msra.mxu0 %v4030
    %v4032 = vand.u32 %v3873, 4294901760
    %v4033 = vsub.f32 %v3873, %v4032
    %v4034 = vand.u32 %v4033, 4294901760
    %v4035 = vsub.f32 %v4033, %v4034
    %v4036 = vand.u32 %v4035, 4294901760
    %4037 = vmatpush.msra.mxu0 %v4036
    %v4038 = vand.u32 %v3871, 4294901760
    %4039 = vmatmul.f32.gmra.mxu0 %v4038
    %v4040 = vpop.f32.mrf.mxu0
    %v4041 = vadd.f32 %v3932, %v4040
    %v4042 = vand.u32 %v3872, 4294901760
    %4043 = vmatmul.f32.gmra.mxu0 %v4042
    %v4044 = vpop.f32.mrf.mxu0
    %v4045 = vadd.f32 %v3940, %v4044
    %4046 = vdwg.mxu0
    %v4047 = vand.u32 %v3888, 4294901760
    %v4048 = vsub.f32 %v3888, %v4047
    %4049 = vmatpush.msra.mxu0 %v4048
    %v4050 = vand.u32 %v3887, 4294901760
    %v4051 = vsub.f32 %v3887, %v4050
    %4052 = vmatpush.msra.mxu0 %v4051
    %v4053 = vand.u32 %v3886, 4294901760
    %v4054 = vsub.f32 %v3886, %v4053
    %4055 = vmatpush.msra.mxu0 %v4054
    %v4056 = vand.u32 %v3885, 4294901760
    %v4057 = vsub.f32 %v3885, %v4056
    %4058 = vmatpush.msra.mxu0 %v4057
    %v4059 = vand.u32 %v3884, 4294901760
    %v4060 = vsub.f32 %v3884, %v4059
    %4061 = vmatpush.msra.mxu0 %v4060
    %v4062 = vand.u32 %v3883, 4294901760
    %v4063 = vsub.f32 %v3883, %v4062
    %4064 = vmatpush.msra.mxu0 %v4063
    %v4065 = vand.u32 %v3882, 4294901760
    %v4066 = vsub.f32 %v3882, %v4065
    %4067 = vmatpush.msra.mxu0 %v4066
    %v4068 = vand.u32 %v3881, 4294901760
    %v4069 = vsub.f32 %v3881, %v4068
    %4070 = vmatpush.msra.mxu0 %v4069
    %v4071 = vand.u32 %v3880, 4294901760
    %v4072 = vsub.f32 %v3880, %v4071
    %4073 = vmatpush.msra.mxu0 %v4072
    %v4074 = vand.u32 %v3879, 4294901760
    %v4075 = vsub.f32 %v3879, %v4074
    %4076 = vmatpush.msra.mxu0 %v4075
    %v4077 = vand.u32 %v3878, 4294901760
    %v4078 = vsub.f32 %v3878, %v4077
    %4079 = vmatpush.msra.mxu0 %v4078
    %v4080 = vand.u32 %v3877, 4294901760
    %v4081 = vsub.f32 %v3877, %v4080
    %4082 = vmatpush.msra.mxu0 %v4081
    %v4083 = vand.u32 %v3876, 4294901760
    %v4084 = vsub.f32 %v3876, %v4083
    %4085 = vmatpush.msra.mxu0 %v4084
    %v4086 = vand.u32 %v3875, 4294901760
    %v4087 = vsub.f32 %v3875, %v4086
    %4088 = vmatpush.msra.mxu0 %v4087
    %v4089 = vand.u32 %v3874, 4294901760
    %v4090 = vsub.f32 %v3874, %v4089
    %4091 = vmatpush.msra.mxu0 %v4090
    %v4092 = vand.u32 %v3873, 4294901760
    %v4093 = vsub.f32 %v3873, %v4092
    %4094 = vmatpush.msra.mxu0 %v4093
    %v4095 = vand.u32 %v3871, 4294901760
    %v4096 = vsub.f32 %v3871, %v4095
    %4097 = vmatmul.f32.gmra.mxu0 %v4096
    %v4098 = vpop.f32.mrf.mxu0
    %v4099 = vadd.f32 %v4041, %v4098
    %v4100 = vand.u32 %v3872, 4294901760
    %v4101 = vsub.f32 %v3872, %v4100
    %4102 = vmatmul.f32.gmra.mxu0 %v4101
    %v4103 = vpop.f32.mrf.mxu0
    %v4104 = vadd.f32 %v4045, %v4103
    %4105 = vdwg.mxu0
    %v4106 = vand.u32 %v3888, 4294901760
    %4107 = vmatpush.msra.mxu0 %v4106
    %v4108 = vand.u32 %v3887, 4294901760
    %4109 = vmatpush.msra.mxu0 %v4108
    %v4110 = vand.u32 %v3886, 4294901760
    %4111 = vmatpush.msra.mxu0 %v4110
    %v4112 = vand.u32 %v3885, 4294901760
    %4113 = vmatpush.msra.mxu0 %v4112
    %v4114 = vand.u32 %v3884, 4294901760
    %4115 = vmatpush.msra.mxu0 %v4114
    %v4116 = vand.u32 %v3883, 4294901760
    %4117 = vmatpush.msra.mxu0 %v4116
    %v4118 = vand.u32 %v3882, 4294901760
    %4119 = vmatpush.msra.mxu0 %v4118
    %v4120 = vand.u32 %v3881, 4294901760
    %4121 = vmatpush.msra.mxu0 %v4120
    %v4122 = vand.u32 %v3880, 4294901760
    %4123 = vmatpush.msra.mxu0 %v4122
    %v4124 = vand.u32 %v3879, 4294901760
    %4125 = vmatpush.msra.mxu0 %v4124
    %v4126 = vand.u32 %v3878, 4294901760
    %4127 = vmatpush.msra.mxu0 %v4126
    %v4128 = vand.u32 %v3877, 4294901760
    %4129 = vmatpush.msra.mxu0 %v4128
    %v4130 = vand.u32 %v3876, 4294901760
    %4131 = vmatpush.msra.mxu0 %v4130
    %v4132 = vand.u32 %v3875, 4294901760
    %4133 = vmatpush.msra.mxu0 %v4132
    %v4134 = vand.u32 %v3874, 4294901760
    %4135 = vmatpush.msra.mxu0 %v4134
    %v4136 = vand.u32 %v3873, 4294901760
    %4137 = vmatpush.msra.mxu0 %v4136
    %v4138 = vand.u32 %v3871, 4294901760
    %v4139 = vsub.f32 %v3871, %v4138
    %v4140 = vand.u32 %v4139, 4294901760
    %4141 = vmatmul.f32.gmra.mxu0 %v4140
    %v4142 = vpop.f32.mrf.mxu0
    %v4143 = vadd.f32 %v4099, %v4142
    %v4144 = vand.u32 %v3872, 4294901760
    %v4145 = vsub.f32 %v3872, %v4144
    %v4146 = vand.u32 %v4145, 4294901760
    %4147 = vmatmul.f32.gmra.mxu0 %v4146
    %v4148 = vpop.f32.mrf.mxu0
    %v4149 = vadd.f32 %v4104, %v4148
    %4150 = vdwg.mxu0
    %v4151 = vand.u32 %v3888, 4294901760
    %v4152 = vsub.f32 %v3888, %v4151
    %v4153 = vand.u32 %v4152, 4294901760
    %4154 = vmatpush.msra.mxu0 %v4153
    %v4155 = vand.u32 %v3887, 4294901760
    %v4156 = vsub.f32 %v3887, %v4155
    %v4157 = vand.u32 %v4156, 4294901760
    %4158 = vmatpush.msra.mxu0 %v4157
    %v4159 = vand.u32 %v3886, 4294901760
    %v4160 = vsub.f32 %v3886, %v4159
    %v4161 = vand.u32 %v4160, 4294901760
    %4162 = vmatpush.msra.mxu0 %v4161
    %v4163 = vand.u32 %v3885, 4294901760
    %v4164 = vsub.f32 %v3885, %v4163
    %v4165 = vand.u32 %v4164, 4294901760
    %4166 = vmatpush.msra.mxu0 %v4165
    %v4167 = vand.u32 %v3884, 4294901760
    %v4168 = vsub.f32 %v3884, %v4167
    %v4169 = vand.u32 %v4168, 4294901760
    %4170 = vmatpush.msra.mxu0 %v4169
    %v4171 = vand.u32 %v3883, 4294901760
    %v4172 = vsub.f32 %v3883, %v4171
    %v4173 = vand.u32 %v4172, 4294901760
    %4174 = vmatpush.msra.mxu0 %v4173
    %v4175 = vand.u32 %v3882, 4294901760
    %v4176 = vsub.f32 %v3882, %v4175
    %v4177 = vand.u32 %v4176, 4294901760
    %4178 = vmatpush.msra.mxu0 %v4177
    %v4179 = vand.u32 %v3881, 4294901760
    %v4180 = vsub.f32 %v3881, %v4179
    %v4181 = vand.u32 %v4180, 4294901760
    %4182 = vmatpush.msra.mxu0 %v4181
    %v4183 = vand.u32 %v3880, 4294901760
    %v4184 = vsub.f32 %v3880, %v4183
    %v4185 = vand.u32 %v4184, 4294901760
    %4186 = vmatpush.msra.mxu0 %v4185
    %v4187 = vand.u32 %v3879, 4294901760
    %v4188 = vsub.f32 %v3879, %v4187
    %v4189 = vand.u32 %v4188, 4294901760
    %4190 = vmatpush.msra.mxu0 %v4189
    %v4191 = vand.u32 %v3878, 4294901760
    %v4192 = vsub.f32 %v3878, %v4191
    %v4193 = vand.u32 %v4192, 4294901760
    %4194 = vmatpush.msra.mxu0 %v4193
    %v4195 = vand.u32 %v3877, 4294901760
    %v4196 = vsub.f32 %v3877, %v4195
    %v4197 = vand.u32 %v4196, 4294901760
    %4198 = vmatpush.msra.mxu0 %v4197
    %v4199 = vand.u32 %v3876, 4294901760
    %v4200 = vsub.f32 %v3876, %v4199
    %v4201 = vand.u32 %v4200, 4294901760
    %4202 = vmatpush.msra.mxu0 %v4201
    %v4203 = vand.u32 %v3875, 4294901760
    %v4204 = vsub.f32 %v3875, %v4203
    %v4205 = vand.u32 %v4204, 4294901760
    %4206 = vmatpush.msra.mxu0 %v4205
    %v4207 = vand.u32 %v3874, 4294901760
    %v4208 = vsub.f32 %v3874, %v4207
    %v4209 = vand.u32 %v4208, 4294901760
    %4210 = vmatpush.msra.mxu0 %v4209
    %v4211 = vand.u32 %v3873, 4294901760
    %v4212 = vsub.f32 %v3873, %v4211
    %v4213 = vand.u32 %v4212, 4294901760
    %4214 = vmatpush.msra.mxu0 %v4213
    %v4215 = vand.u32 %v3871, 4294901760
    %4216 = vmatmul.f32.gmra.mxu0 %v4215
    %v4217 = vpop.f32.mrf.mxu0
    %v4218 = vadd.f32 %v4143, %v4217
    %v4219 = vand.u32 %v3872, 4294901760
    %4220 = vmatmul.f32.gmra.mxu0 %v4219
    %v4221 = vpop.f32.mrf.mxu0
    %v4222 = vadd.f32 %v4149, %v4221
    %4223 = vdwg.mxu0
    %v4224 = vand.u32 %v3888, 4294901760
    %4225 = vmatpush.msra.mxu0 %v4224
    %v4226 = vand.u32 %v3887, 4294901760
    %4227 = vmatpush.msra.mxu0 %v4226
    %v4228 = vand.u32 %v3886, 4294901760
    %4229 = vmatpush.msra.mxu0 %v4228
    %v4230 = vand.u32 %v3885, 4294901760
    %4231 = vmatpush.msra.mxu0 %v4230
    %v4232 = vand.u32 %v3884, 4294901760
    %4233 = vmatpush.msra.mxu0 %v4232
    %v4234 = vand.u32 %v3883, 4294901760
    %4235 = vmatpush.msra.mxu0 %v4234
    %v4236 = vand.u32 %v3882, 4294901760
    %4237 = vmatpush.msra.mxu0 %v4236
    %v4238 = vand.u32 %v3881, 4294901760
    %4239 = vmatpush.msra.mxu0 %v4238
    %v4240 = vand.u32 %v3880, 4294901760
    %4241 = vmatpush.msra.mxu0 %v4240
    %v4242 = vand.u32 %v3879, 4294901760
    %4243 = vmatpush.msra.mxu0 %v4242
    %v4244 = vand.u32 %v3878, 4294901760
    %4245 = vmatpush.msra.mxu0 %v4244
    %v4246 = vand.u32 %v3877, 4294901760
    %4247 = vmatpush.msra.mxu0 %v4246
    %v4248 = vand.u32 %v3876, 4294901760
    %4249 = vmatpush.msra.mxu0 %v4248
    %v4250 = vand.u32 %v3875, 4294901760
    %4251 = vmatpush.msra.mxu0 %v4250
    %v4252 = vand.u32 %v3874, 4294901760
    %4253 = vmatpush.msra.mxu0 %v4252
    %v4254 = vand.u32 %v3873, 4294901760
    %4255 = vmatpush.msra.mxu0 %v4254
    %v4256 = vand.u32 %v3871, 4294901760
    %4257 = vmatmul.f32.gmra.mxu0 %v4256
    %v4258 = vpop.f32.mrf.mxu0
    %v4259 = vadd.f32 %v4218, %v4258
    %v4260 = vand.u32 %v3872, 4294901760
    %4261 = vmatmul.f32.gmra.mxu0 %v4260
    %v4262 = vpop.f32.mrf.mxu0
    %v4263 = vadd.f32 %v4222, %v4262
    %4264 = vdwg.mxu0
    %v4265 = vld [vmem:[%s9] sm:$0x3]
    %vm4266 = vcmask 130048
    %v4268 = vsel %vm4266, %v4265, 0
    %4270 = vmatpush.msra.mxu0 0.0
    %4271 = vmatpush.msra.mxu0 0.0
    %4272 = vmatpush.msra.mxu0 0.0
    %4273 = vmatpush.msra.mxu0 0.0
    %4274 = vmatpush.msra.mxu0 0.0
    %4275 = vmatpush.msra.mxu0 0.0
    %4276 = vmatpush.msra.mxu0 0.0
    %4277 = vmatpush.msra.mxu0 0.0
    %4278 = vmatpush.msra.mxu0 0.0
    %4279 = vmatpush.msra.mxu0 0.0
    %4280 = vmatpush.msra.mxu0 0.0
    %4281 = vmatpush.msra.mxu0 0.0
    %4282 = vmatpush.msra.mxu0 0.0
    %4283 = vmatpush.msra.mxu0 0.0
    %v4284 = vand.u32 %v4263, 4294901760
    %4285 = vmatpush.msra.mxu0 %v4284
    %v4286 = vand.u32 %v4259, 4294901760
    %4287 = vmatpush.msra.mxu0 %v4286
    %v4288 = vand.u32 %v4268, 4294901760
    %v4289 = vsub.f32 %v4268, %v4288
    %v4290 = vand.u32 %v4289, 4294901760
    %v4291 = vsub.f32 %v4289, %v4290
    %v4292 = vand.u32 %v4291, 4294901760
    %4293 = vmatmul.f32.gmra.mxu0 %v4292
    %v4294 = vpop.f32.mrf.mxu0
    %v4295 = vadd.f32 0.0, %v4294
    %4296 = vdwg.mxu0
    %4297 = vmatpush.msra.mxu0 0.0
    %4298 = vmatpush.msra.mxu0 0.0
    %4299 = vmatpush.msra.mxu0 0.0
    %4300 = vmatpush.msra.mxu0 0.0
    %4301 = vmatpush.msra.mxu0 0.0
    %4302 = vmatpush.msra.mxu0 0.0
    %4303 = vmatpush.msra.mxu0 0.0
    %4304 = vmatpush.msra.mxu0 0.0
    %4305 = vmatpush.msra.mxu0 0.0
    %4306 = vmatpush.msra.mxu0 0.0
    %4307 = vmatpush.msra.mxu0 0.0
    %4308 = vmatpush.msra.mxu0 0.0
    %4309 = vmatpush.msra.mxu0 0.0
    %4310 = vmatpush.msra.mxu0 0.0
    %v4311 = vand.u32 %v4263, 4294901760
    %v4312 = vsub.f32 %v4263, %v4311
    %v4313 = vand.u32 %v4312, 4294901760
    %v4314 = vsub.f32 %v4312, %v4313
    %v4315 = vand.u32 %v4314, 4294901760
    %4316 = vmatpush.msra.mxu0 %v4315
    %v4317 = vand.u32 %v4259, 4294901760
    %v4318 = vsub.f32 %v4259, %v4317
    %v4319 = vand.u32 %v4318, 4294901760
    %v4320 = vsub.f32 %v4318, %v4319
    %v4321 = vand.u32 %v4320, 4294901760
    %4322 = vmatpush.msra.mxu0 %v4321
    %v4323 = vand.u32 %v4268, 4294901760
    %4324 = vmatmul.f32.gmra.mxu0 %v4323
    %v4325 = vpop.f32.mrf.mxu0
    %v4326 = vadd.f32 %v4295, %v4325
    %4327 = vdwg.mxu0
    %4328 = vmatpush.msra.mxu0 0.0
    %4329 = vmatpush.msra.mxu0 0.0
    %4330 = vmatpush.msra.mxu0 0.0
    %4331 = vmatpush.msra.mxu0 0.0
    %4332 = vmatpush.msra.mxu0 0.0
    %4333 = vmatpush.msra.mxu0 0.0
    %4334 = vmatpush.msra.mxu0 0.0
    %4335 = vmatpush.msra.mxu0 0.0
    %4336 = vmatpush.msra.mxu0 0.0
    %4337 = vmatpush.msra.mxu0 0.0
    %4338 = vmatpush.msra.mxu0 0.0
    %4339 = vmatpush.msra.mxu0 0.0
    %4340 = vmatpush.msra.mxu0 0.0
    %4341 = vmatpush.msra.mxu0 0.0
    %v4342 = vand.u32 %v4263, 4294901760
    %v4343 = vsub.f32 %v4263, %v4342
    %4344 = vmatpush.msra.mxu0 %v4343
    %v4345 = vand.u32 %v4259, 4294901760
    %v4346 = vsub.f32 %v4259, %v4345
    %4347 = vmatpush.msra.mxu0 %v4346
    %v4348 = vand.u32 %v4268, 4294901760
    %v4349 = vsub.f32 %v4268, %v4348
    %4350 = vmatmul.f32.gmra.mxu0 %v4349
    %v4351 = vpop.f32.mrf.mxu0
    %v4352 = vadd.f32 %v4326, %v4351
    %4353 = vdwg.mxu0
    %4354 = vmatpush.msra.mxu0 0.0
    %4355 = vmatpush.msra.mxu0 0.0
    %4356 = vmatpush.msra.mxu0 0.0
    %4357 = vmatpush.msra.mxu0 0.0
    %4358 = vmatpush.msra.mxu0 0.0
    %4359 = vmatpush.msra.mxu0 0.0
    %4360 = vmatpush.msra.mxu0 0.0
    %4361 = vmatpush.msra.mxu0 0.0
    %4362 = vmatpush.msra.mxu0 0.0
    %4363 = vmatpush.msra.mxu0 0.0
    %4364 = vmatpush.msra.mxu0 0.0
    %4365 = vmatpush.msra.mxu0 0.0
    %4366 = vmatpush.msra.mxu0 0.0
    %4367 = vmatpush.msra.mxu0 0.0
    %v4368 = vand.u32 %v4263, 4294901760
    %4369 = vmatpush.msra.mxu0 %v4368
    %v4370 = vand.u32 %v4259, 4294901760
    %4371 = vmatpush.msra.mxu0 %v4370
    %v4372 = vand.u32 %v4268, 4294901760
    %v4373 = vsub.f32 %v4268, %v4372
    %v4374 = vand.u32 %v4373, 4294901760
    %4375 = vmatmul.f32.gmra.mxu0 %v4374
    %v4376 = vpop.f32.mrf.mxu0
    %v4377 = vadd.f32 %v4352, %v4376
    %4378 = vdwg.mxu0
    %4379 = vmatpush.msra.mxu0 0.0
    %4380 = vmatpush.msra.mxu0 0.0
    %4381 = vmatpush.msra.mxu0 0.0
    %4382 = vmatpush.msra.mxu0 0.0
    %4383 = vmatpush.msra.mxu0 0.0
    %4384 = vmatpush.msra.mxu0 0.0
    %4385 = vmatpush.msra.mxu0 0.0
    %4386 = vmatpush.msra.mxu0 0.0
    %4387 = vmatpush.msra.mxu0 0.0
    %4388 = vmatpush.msra.mxu0 0.0
    %4389 = vmatpush.msra.mxu0 0.0
    %4390 = vmatpush.msra.mxu0 0.0
    %4391 = vmatpush.msra.mxu0 0.0
    %4392 = vmatpush.msra.mxu0 0.0
    %v4393 = vand.u32 %v4263, 4294901760
    %v4394 = vsub.f32 %v4263, %v4393
    %v4395 = vand.u32 %v4394, 4294901760
    %4396 = vmatpush.msra.mxu0 %v4395
    %v4397 = vand.u32 %v4259, 4294901760
    %v4398 = vsub.f32 %v4259, %v4397
    %v4399 = vand.u32 %v4398, 4294901760
    %4400 = vmatpush.msra.mxu0 %v4399
    %v4401 = vand.u32 %v4268, 4294901760
    %4402 = vmatmul.f32.gmra.mxu0 %v4401
    %v4403 = vpop.f32.mrf.mxu0
    %v4404 = vadd.f32 %v4377, %v4403
    %4405 = vdwg.mxu0
    %4406 = vmatpush.msra.mxu0 0.0
    %4407 = vmatpush.msra.mxu0 0.0
    %4408 = vmatpush.msra.mxu0 0.0
    %4409 = vmatpush.msra.mxu0 0.0
    %4410 = vmatpush.msra.mxu0 0.0
    %4411 = vmatpush.msra.mxu0 0.0
    %4412 = vmatpush.msra.mxu0 0.0
    %4413 = vmatpush.msra.mxu0 0.0
    %4414 = vmatpush.msra.mxu0 0.0
    %4415 = vmatpush.msra.mxu0 0.0
    %4416 = vmatpush.msra.mxu0 0.0
    %4417 = vmatpush.msra.mxu0 0.0
    %4418 = vmatpush.msra.mxu0 0.0
    %4419 = vmatpush.msra.mxu0 0.0
    %v4420 = vand.u32 %v4263, 4294901760
    %4421 = vmatpush.msra.mxu0 %v4420
    %v4422 = vand.u32 %v4259, 4294901760
    %4423 = vmatpush.msra.mxu0 %v4422
    %v4424 = vand.u32 %v4268, 4294901760
    %4425 = vmatmul.f32.gmra.mxu0 %v4424
    %v4426 = vpop.f32.mrf.mxu0
    %v4427 = vadd.f32 %v4404, %v4426
    %4428 = vdwg.mxu0
    %v4429 = vmul.f32 %v4427, 2.0
    %4430 = vmatpush.msra.mxu0 0.0
    %4431 = vmatpush.msra.mxu0 0.0
    %4432 = vmatpush.msra.mxu0 0.0
    %4433 = vmatpush.msra.mxu0 0.0
    %4434 = vmatpush.msra.mxu0 0.0
    %4435 = vmatpush.msra.mxu0 0.0
    %4436 = vmatpush.msra.mxu0 0.0
    %4437 = vmatpush.msra.mxu0 0.0
    %4438 = vmatpush.msra.mxu0 0.0
    %4439 = vmatpush.msra.mxu0 0.0
    %4440 = vmatpush.msra.mxu0 0.0
    %4441 = vmatpush.msra.mxu0 0.0
    %4442 = vmatpush.msra.mxu0 0.0
    %4443 = vmatpush.msra.mxu0 0.0
    %v4444 = vand.u32 %v3578, 4294901760
    %4445 = vmatpush.msra.mxu0 %v4444
    %v4446 = vand.u32 %v3577, 4294901760
    %4447 = vmatpush.msra.mxu0 %v4446
    %v4448 = vand.u32 %v4268, 4294901760
    %v4449 = vsub.f32 %v4268, %v4448
    %v4450 = vand.u32 %v4449, 4294901760
    %v4451 = vsub.f32 %v4449, %v4450
    %v4452 = vand.u32 %v4451, 4294901760
    %4453 = vmatmul.f32.gmra.mxu0 %v4452
    %v4454 = vpop.f32.mrf.mxu0
    %v4455 = vadd.f32 %v4429, %v4454
    %4456 = vdwg.mxu0
    %4457 = vmatpush.msra.mxu0 0.0
    %4458 = vmatpush.msra.mxu0 0.0
    %4459 = vmatpush.msra.mxu0 0.0
    %4460 = vmatpush.msra.mxu0 0.0
    %4461 = vmatpush.msra.mxu0 0.0
    %4462 = vmatpush.msra.mxu0 0.0
    %4463 = vmatpush.msra.mxu0 0.0
    %4464 = vmatpush.msra.mxu0 0.0
    %4465 = vmatpush.msra.mxu0 0.0
    %4466 = vmatpush.msra.mxu0 0.0
    %4467 = vmatpush.msra.mxu0 0.0
    %4468 = vmatpush.msra.mxu0 0.0
    %4469 = vmatpush.msra.mxu0 0.0
    %4470 = vmatpush.msra.mxu0 0.0
    %v4471 = vand.u32 %v3578, 4294901760
    %v4472 = vsub.f32 %v3578, %v4471
    %v4473 = vand.u32 %v4472, 4294901760
    %v4474 = vsub.f32 %v4472, %v4473
    %v4475 = vand.u32 %v4474, 4294901760
    %4476 = vmatpush.msra.mxu0 %v4475
    %v4477 = vand.u32 %v3577, 4294901760
    %v4478 = vsub.f32 %v3577, %v4477
    %v4479 = vand.u32 %v4478, 4294901760
    %v4480 = vsub.f32 %v4478, %v4479
    %v4481 = vand.u32 %v4480, 4294901760
    %4482 = vmatpush.msra.mxu0 %v4481
    %v4483 = vand.u32 %v4268, 4294901760
    %4484 = vmatmul.f32.gmra.mxu0 %v4483
    %v4485 = vpop.f32.mrf.mxu0
    %v4486 = vadd.f32 %v4455, %v4485
    %4487 = vdwg.mxu0
    %4488 = vmatpush.msra.mxu0 0.0
    %4489 = vmatpush.msra.mxu0 0.0
    %4490 = vmatpush.msra.mxu0 0.0
    %4491 = vmatpush.msra.mxu0 0.0
    %4492 = vmatpush.msra.mxu0 0.0
    %4493 = vmatpush.msra.mxu0 0.0
    %4494 = vmatpush.msra.mxu0 0.0
    %4495 = vmatpush.msra.mxu0 0.0
    %4496 = vmatpush.msra.mxu0 0.0
    %4497 = vmatpush.msra.mxu0 0.0
    %4498 = vmatpush.msra.mxu0 0.0
    %4499 = vmatpush.msra.mxu0 0.0
    %4500 = vmatpush.msra.mxu0 0.0
    %4501 = vmatpush.msra.mxu0 0.0
    %v4502 = vand.u32 %v3578, 4294901760
    %v4503 = vsub.f32 %v3578, %v4502
    %4504 = vmatpush.msra.mxu0 %v4503
    %v4505 = vand.u32 %v3577, 4294901760
    %v4506 = vsub.f32 %v3577, %v4505
    %4507 = vmatpush.msra.mxu0 %v4506
    %v4508 = vand.u32 %v4268, 4294901760
    %v4509 = vsub.f32 %v4268, %v4508
    %4510 = vmatmul.f32.gmra.mxu0 %v4509
    %v4511 = vpop.f32.mrf.mxu0
    %v4512 = vadd.f32 %v4486, %v4511
    %4513 = vdwg.mxu0
    %4514 = vmatpush.msra.mxu0 0.0
    %4515 = vmatpush.msra.mxu0 0.0
    %4516 = vmatpush.msra.mxu0 0.0
    %4517 = vmatpush.msra.mxu0 0.0
    %4518 = vmatpush.msra.mxu0 0.0
    %4519 = vmatpush.msra.mxu0 0.0
    %4520 = vmatpush.msra.mxu0 0.0
    %4521 = vmatpush.msra.mxu0 0.0
    %4522 = vmatpush.msra.mxu0 0.0
    %4523 = vmatpush.msra.mxu0 0.0
    %4524 = vmatpush.msra.mxu0 0.0
    %4525 = vmatpush.msra.mxu0 0.0
    %4526 = vmatpush.msra.mxu0 0.0
    %4527 = vmatpush.msra.mxu0 0.0
    %v4528 = vand.u32 %v3578, 4294901760
    %4529 = vmatpush.msra.mxu0 %v4528
    %v4530 = vand.u32 %v3577, 4294901760
    %4531 = vmatpush.msra.mxu0 %v4530
    %v4532 = vand.u32 %v4268, 4294901760
    %v4533 = vsub.f32 %v4268, %v4532
    %v4534 = vand.u32 %v4533, 4294901760
    %4535 = vmatmul.f32.gmra.mxu0 %v4534
    %v4536 = vpop.f32.mrf.mxu0
    %v4537 = vadd.f32 %v4512, %v4536
    %4538 = vdwg.mxu0
    %4539 = vmatpush.msra.mxu0 0.0
    %4540 = vmatpush.msra.mxu0 0.0
    %4541 = vmatpush.msra.mxu0 0.0
    %4542 = vmatpush.msra.mxu0 0.0
    %4543 = vmatpush.msra.mxu0 0.0
    %4544 = vmatpush.msra.mxu0 0.0
    %4545 = vmatpush.msra.mxu0 0.0
    %4546 = vmatpush.msra.mxu0 0.0
    %4547 = vmatpush.msra.mxu0 0.0
    %4548 = vmatpush.msra.mxu0 0.0
    %4549 = vmatpush.msra.mxu0 0.0
    %4550 = vmatpush.msra.mxu0 0.0
    %4551 = vmatpush.msra.mxu0 0.0
    %4552 = vmatpush.msra.mxu0 0.0
    %v4553 = vand.u32 %v3578, 4294901760
    %v4554 = vsub.f32 %v3578, %v4553
    %v4555 = vand.u32 %v4554, 4294901760
    %4556 = vmatpush.msra.mxu0 %v4555
    %v4557 = vand.u32 %v3577, 4294901760
    %v4558 = vsub.f32 %v3577, %v4557
    %v4559 = vand.u32 %v4558, 4294901760
    %4560 = vmatpush.msra.mxu0 %v4559
    %v4561 = vand.u32 %v4268, 4294901760
    %4562 = vmatmul.f32.gmra.mxu0 %v4561
    %v4563 = vpop.f32.mrf.mxu0
    %v4564 = vadd.f32 %v4537, %v4563
    %4565 = vdwg.mxu0
    %4566 = vmatpush.msra.mxu0 0.0
    %4567 = vmatpush.msra.mxu0 0.0
    %4568 = vmatpush.msra.mxu0 0.0
    %4569 = vmatpush.msra.mxu0 0.0
    %4570 = vmatpush.msra.mxu0 0.0
    %4571 = vmatpush.msra.mxu0 0.0
    %4572 = vmatpush.msra.mxu0 0.0
    %4573 = vmatpush.msra.mxu0 0.0
    %4574 = vmatpush.msra.mxu0 0.0
    %4575 = vmatpush.msra.mxu0 0.0
    %4576 = vmatpush.msra.mxu0 0.0
    %4577 = vmatpush.msra.mxu0 0.0
    %4578 = vmatpush.msra.mxu0 0.0
    %4579 = vmatpush.msra.mxu0 0.0
    %v4580 = vand.u32 %v3578, 4294901760
    %4581 = vmatpush.msra.mxu0 %v4580
    %v4582 = vand.u32 %v3577, 4294901760
    %4583 = vmatpush.msra.mxu0 %v4582
    %v4584 = vand.u32 %v4268, 4294901760
    %4585 = vmatmul.f32.gmra.mxu0 %v4584
    %v4586 = vpop.f32.mrf.mxu0
    %v4587 = vadd.f32 %v4564, %v4586
    %4588 = vdwg.mxu0
    %v4589 = vld [vmem:[#allocation17] sm:$0xff]
    %v4590 = vld [vmem:[#allocation17 + $0x8] sm:$0xff]
    %v4591 = vld [vmem:[#allocation17 + $0x10] sm:$0xff]
    %v4592 = vld [vmem:[#allocation17 + $0x18] sm:$0xff]
    %v4593 = vld [vmem:[#allocation18] sm:$0x1]
    %v4595 = vperm.slane %v4593, 0
    %v4598 = vsel %vm219, %v4587, 0
    %4600 = vmatpush.msra.mxu0 0.0
    %4601 = vmatpush.msra.mxu0 0.0
    %4602 = vmatpush.msra.mxu0 0.0
    %4603 = vmatpush.msra.mxu0 0.0
    %4604 = vmatpush.msra.mxu0 0.0
    %4605 = vmatpush.msra.mxu0 0.0
    %4606 = vmatpush.msra.mxu0 0.0
    %4607 = vmatpush.msra.mxu0 0.0
    %4608 = vmatpush.msra.mxu0 0.0
    %4609 = vmatpush.msra.mxu0 0.0
    %4610 = vmatpush.msra.mxu0 0.0
    %4611 = vmatpush.msra.mxu0 0.0
    %v4612 = vand.u32 %v4592, 4294901760
    %4613 = vmatpush.msra.mxu0 %v4612
    %v4614 = vand.u32 %v4591, 4294901760
    %4615 = vmatpush.msra.mxu0 %v4614
    %v4616 = vand.u32 %v4590, 4294901760
    %4617 = vmatpush.msra.mxu0 %v4616
    %v4618 = vand.u32 %v4589, 4294901760
    %4619 = vmatpush.msra.mxu0 %v4618
    %v4620 = vand.u32 %v4598, 4294901760
    %v4621 = vsub.f32 %v4598, %v4620
    %v4622 = vand.u32 %v4621, 4294901760
    %v4623 = vsub.f32 %v4621, %v4622
    %v4624 = vand.u32 %v4623, 4294901760
    %4625 = vmatmul.f32.gmra.mxu0 %v4624
    %v4626 = vpop.f32.mrf.mxu0
    %v4627 = vadd.f32 %v4595, %v4626
    %4628 = vdwg.mxu0
    %4629 = vmatpush.msra.mxu0 0.0
    %4630 = vmatpush.msra.mxu0 0.0
    %4631 = vmatpush.msra.mxu0 0.0
    %4632 = vmatpush.msra.mxu0 0.0
    %4633 = vmatpush.msra.mxu0 0.0
    %4634 = vmatpush.msra.mxu0 0.0
    %4635 = vmatpush.msra.mxu0 0.0
    %4636 = vmatpush.msra.mxu0 0.0
    %4637 = vmatpush.msra.mxu0 0.0
    %4638 = vmatpush.msra.mxu0 0.0
    %4639 = vmatpush.msra.mxu0 0.0
    %4640 = vmatpush.msra.mxu0 0.0
    %v4641 = vand.u32 %v4592, 4294901760
    %v4642 = vsub.f32 %v4592, %v4641
    %v4643 = vand.u32 %v4642, 4294901760
    %v4644 = vsub.f32 %v4642, %v4643
    %v4645 = vand.u32 %v4644, 4294901760
    %4646 = vmatpush.msra.mxu0 %v4645
    %v4647 = vand.u32 %v4591, 4294901760
    %v4648 = vsub.f32 %v4591, %v4647
    %v4649 = vand.u32 %v4648, 4294901760
    %v4650 = vsub.f32 %v4648, %v4649
    %v4651 = vand.u32 %v4650, 4294901760
    %4652 = vmatpush.msra.mxu0 %v4651
    %v4653 = vand.u32 %v4590, 4294901760
    %v4654 = vsub.f32 %v4590, %v4653
    %v4655 = vand.u32 %v4654, 4294901760
    %v4656 = vsub.f32 %v4654, %v4655
    %v4657 = vand.u32 %v4656, 4294901760
    %4658 = vmatpush.msra.mxu0 %v4657
    %v4659 = vand.u32 %v4589, 4294901760
    %v4660 = vsub.f32 %v4589, %v4659
    %v4661 = vand.u32 %v4660, 4294901760
    %v4662 = vsub.f32 %v4660, %v4661
    %v4663 = vand.u32 %v4662, 4294901760
    %4664 = vmatpush.msra.mxu0 %v4663
    %v4665 = vand.u32 %v4598, 4294901760
    %4666 = vmatmul.f32.gmra.mxu0 %v4665
    %v4667 = vpop.f32.mrf.mxu0
    %v4668 = vadd.f32 %v4627, %v4667
    %4669 = vdwg.mxu0
    %4670 = vmatpush.msra.mxu0 0.0
    %4671 = vmatpush.msra.mxu0 0.0
    %4672 = vmatpush.msra.mxu0 0.0
    %4673 = vmatpush.msra.mxu0 0.0
    %4674 = vmatpush.msra.mxu0 0.0
    %4675 = vmatpush.msra.mxu0 0.0
    %4676 = vmatpush.msra.mxu0 0.0
    %4677 = vmatpush.msra.mxu0 0.0
    %4678 = vmatpush.msra.mxu0 0.0
    %4679 = vmatpush.msra.mxu0 0.0
    %4680 = vmatpush.msra.mxu0 0.0
    %4681 = vmatpush.msra.mxu0 0.0
    %v4682 = vand.u32 %v4592, 4294901760
    %v4683 = vsub.f32 %v4592, %v4682
    %4684 = vmatpush.msra.mxu0 %v4683
    %v4685 = vand.u32 %v4591, 4294901760
    %v4686 = vsub.f32 %v4591, %v4685
    %4687 = vmatpush.msra.mxu0 %v4686
    %v4688 = vand.u32 %v4590, 4294901760
    %v4689 = vsub.f32 %v4590, %v4688
    %4690 = vmatpush.msra.mxu0 %v4689
    %v4691 = vand.u32 %v4589, 4294901760
    %v4692 = vsub.f32 %v4589, %v4691
    %4693 = vmatpush.msra.mxu0 %v4692
    %v4694 = vand.u32 %v4598, 4294901760
    %v4695 = vsub.f32 %v4598, %v4694
    %4696 = vmatmul.f32.gmra.mxu0 %v4695
    %v4697 = vpop.f32.mrf.mxu0
    %v4698 = vadd.f32 %v4668, %v4697
    %4699 = vdwg.mxu0
    %4700 = vmatpush.msra.mxu0 0.0
    %4701 = vmatpush.msra.mxu0 0.0
    %4702 = vmatpush.msra.mxu0 0.0
    %4703 = vmatpush.msra.mxu0 0.0
    %4704 = vmatpush.msra.mxu0 0.0
    %4705 = vmatpush.msra.mxu0 0.0
    %4706 = vmatpush.msra.mxu0 0.0
    %4707 = vmatpush.msra.mxu0 0.0
    %4708 = vmatpush.msra.mxu0 0.0
    %4709 = vmatpush.msra.mxu0 0.0
    %4710 = vmatpush.msra.mxu0 0.0
    %4711 = vmatpush.msra.mxu0 0.0
    %v4712 = vand.u32 %v4592, 4294901760
    %4713 = vmatpush.msra.mxu0 %v4712
    %v4714 = vand.u32 %v4591, 4294901760
    %4715 = vmatpush.msra.mxu0 %v4714
    %v4716 = vand.u32 %v4590, 4294901760
    %4717 = vmatpush.msra.mxu0 %v4716
    %v4718 = vand.u32 %v4589, 4294901760
    %4719 = vmatpush.msra.mxu0 %v4718
    %v4720 = vand.u32 %v4598, 4294901760
    %v4721 = vsub.f32 %v4598, %v4720
    %v4722 = vand.u32 %v4721, 4294901760
    %4723 = vmatmul.f32.gmra.mxu0 %v4722
    %v4724 = vpop.f32.mrf.mxu0
    %v4725 = vadd.f32 %v4698, %v4724
    %4726 = vdwg.mxu0
    %4727 = vmatpush.msra.mxu0 0.0
    %4728 = vmatpush.msra.mxu0 0.0
    %4729 = vmatpush.msra.mxu0 0.0
    %4730 = vmatpush.msra.mxu0 0.0
    %4731 = vmatpush.msra.mxu0 0.0
    %4732 = vmatpush.msra.mxu0 0.0
    %4733 = vmatpush.msra.mxu0 0.0
    %4734 = vmatpush.msra.mxu0 0.0
    %4735 = vmatpush.msra.mxu0 0.0
    %4736 = vmatpush.msra.mxu0 0.0
    %4737 = vmatpush.msra.mxu0 0.0
    %4738 = vmatpush.msra.mxu0 0.0
    %v4739 = vand.u32 %v4592, 4294901760
    %v4740 = vsub.f32 %v4592, %v4739
    %v4741 = vand.u32 %v4740, 4294901760
    %4742 = vmatpush.msra.mxu0 %v4741
    %v4743 = vand.u32 %v4591, 4294901760
    %v4744 = vsub.f32 %v4591, %v4743
    %v4745 = vand.u32 %v4744, 4294901760
    %4746 = vmatpush.msra.mxu0 %v4745
    %v4747 = vand.u32 %v4590, 4294901760
    %v4748 = vsub.f32 %v4590, %v4747
    %v4749 = vand.u32 %v4748, 4294901760
    %4750 = vmatpush.msra.mxu0 %v4749
    %v4751 = vand.u32 %v4589, 4294901760
    %v4752 = vsub.f32 %v4589, %v4751
    %v4753 = vand.u32 %v4752, 4294901760
    %4754 = vmatpush.msra.mxu0 %v4753
    %v4755 = vand.u32 %v4598, 4294901760
    %4756 = vmatmul.f32.gmra.mxu0 %v4755
    %v4757 = vpop.f32.mrf.mxu0
    %v4758 = vadd.f32 %v4725, %v4757
    %4759 = vdwg.mxu0
    %4760 = vmatpush.msra.mxu0 0.0
    %4761 = vmatpush.msra.mxu0 0.0
    %4762 = vmatpush.msra.mxu0 0.0
    %4763 = vmatpush.msra.mxu0 0.0
    %4764 = vmatpush.msra.mxu0 0.0
    %4765 = vmatpush.msra.mxu0 0.0
    %4766 = vmatpush.msra.mxu0 0.0
    %4767 = vmatpush.msra.mxu0 0.0
    %4768 = vmatpush.msra.mxu0 0.0
    %4769 = vmatpush.msra.mxu0 0.0
    %4770 = vmatpush.msra.mxu0 0.0
    %4771 = vmatpush.msra.mxu0 0.0
    %v4772 = vand.u32 %v4592, 4294901760
    %4773 = vmatpush.msra.mxu0 %v4772
    %v4774 = vand.u32 %v4591, 4294901760
    %4775 = vmatpush.msra.mxu0 %v4774
    %v4776 = vand.u32 %v4590, 4294901760
    %4777 = vmatpush.msra.mxu0 %v4776
    %v4778 = vand.u32 %v4589, 4294901760
    %4779 = vmatpush.msra.mxu0 %v4778
    %v4780 = vand.u32 %v4598, 4294901760
    %4781 = vmatmul.f32.gmra.mxu0 %v4780
    %v4782 = vpop.f32.mrf.mxu0
    %v4783 = vadd.f32 %v4758, %v4782
    %4784 = vdwg.mxu0
    %vm4785 = vcmask 41984
    %v4786 = vsel %vm4785, %v4783, -inf
    %4787 = vmax.xlane.f32.xlu0 %v4786
    %v4788 = vpop.xlane.xlu0 %4787
    %v4789 = vsub.f32 %v4783, %v4788
    %v4790 = vmul.f32 %v4789, 1.442695
    %v4791 = vpow.pop %v4790
    %v4792 = vsel %vm4785, %v4791, 0.0
    %4793 = vadd.xlane.f32.xlu0 %v4792
    %v4794 = vpop.xlane.xlu0 %4793
    %v4795 = vlog2.pop %v4794
    %v4796 = vmul.f32 %v4795, 0.6931472
    %v4797 = vsub.f32 %v4789, %v4796
    %4798 = vst.msk [vmem:[#allocation20] sm:$0x3] %vm4785, %v4797
    // Predicated region
    $region114: #{_lambda_.1} parent=1 // pred_check
      _
    $region115: #{_lambda_.1} parent=1 // pred_check_branch
      %4800 = sbr.rel (0) target = $region117
    $region116: #{_lambda_.1} parent=1 // pred_region
      %4802 = vsyncadd [#allocation5], 0
      %s4804 = sshll.u32 [#allocation20], 4
      %s4805 = int_to_ptr.vmem [resolvable:$true] %s4804
      %s4806 = sshll.u32 %s18, 4
      %s4807 = int_to_ptr.hbm [resolvable:$true] %s4806
      %4809 = dma.vmem_to_hbm [thread:$0]  %s4805, 32, %s4807, [#allocation5]
    $region117: #{_lambda_.1} parent=1 // pred_fallthru
      _
    // Predicated region
    $region118: #{_lambda_.1} parent=1 // pred_check
      _
    $region119: #{_lambda_.1} parent=1 // pred_check_branch
      %4811 = sbr.rel (0) target = $region121
    $region120: #{_lambda_.1} parent=1 // pred_region
      %4813 = vsyncadd [#allocation22], 0
      %s4814 = sshll.u32 [#allocation21], 4
      %s4815 = int_to_ptr.vmem [resolvable:$true] %s4814
      %s4816 = sshll.u32 %s19, 4
      %s4817 = int_to_ptr.hbm [resolvable:$true] %s4816
      %4822 = dma.vmem_to_hbm [thread:$0]  %s4815, 256, %s4817, [#allocation22], 128, 128, 8
    $region121: #{_lambda_.1} parent=1 // pred_fallthru
      _
    // Predicated region
    $region122: #{_lambda_.1} parent=1 // pred_check
      _
    $region123: #{_lambda_.1} parent=1 // pred_check_branch
      %4824 = sbr.rel (0) target = $region125
    $region124: #{_lambda_.1} parent=1 // pred_region
      %4826 = dma.done [#allocation5], 32
    $region125: #{_lambda_.1} parent=1 // pred_fallthru
      _
    // Predicated region
    $region126: #{_lambda_.1} parent=1 // pred_check
      _
    $region127: #{_lambda_.1} parent=1 // pred_check_branch
      %4828 = sbr.rel (0) target = $region129
    $region128: #{_lambda_.1} parent=1 // pred_region
      %4830 = dma.done [#allocation22], 256
    $region129: #{_lambda_.1} parent=1 // pred_fallthru
      _
    %4831 = vsyncpa [#allocation4], 1
    %4832 = vsyncpa [#allocation7], 1
    %4833 = vsyncpa [#allocation10], 1
    %4834 = vsyncpa [#allocation13], 1
    %4835 = vsyncpa [#allocation16], 1
    %4836 = vsyncpa [#allocation19], 1
    %4837 = vsyncpa [#allocation5], 1
    %4838 = vsyncpa [#allocation22], 1

</llo_original>
